<compile_context>
chip_gen: v7x
topology: tpu7x:2x2x1
jax: 0.10.0
libtpu: 0.0.40
codegen_flags: <defaults>
</compile_context>

<pallas_src>
import math
import functools

import jax
import jax.numpy as jnp
from jax.experimental import pallas as pl
from jax.experimental.pallas import tpu as pltpu

EPS_T = 1e-06
_MIB = 1024 * 1024


def _layer_norm(x, gamma, beta):
    # PyTorch LayerNorm: biased variance over the last dim, f32 math.
    mu = jnp.mean(x, axis=-1, keepdims=True)
    var = jnp.mean((x - mu) ** 2, axis=-1, keepdims=True)
    return (x - mu) * jax.lax.rsqrt(var + EPS_T) * gamma + beta


def transformer_layer_kernel(
    x_ref,                     # (1, L, D)  full sequence for batch b (input dtype)
    g1_ref, b1_ref,            # (1, D) each               norm1
    wq_ref, bq_ref,            # (D, D), (1, D)  Q proj (1/sqrt(hd) folded in)
    wk_ref, bk_ref,            # (D, D), (1, D)  K proj
    wv_ref, bv_ref,            # (D, D), (1, D)  V proj
    wo_ref, bo_ref,            # (D, D), (1, D)  attention out-projection
    g2_ref, b2_ref,            # (1, D) each               norm2
    w1_ref, bb1_ref,           # (D, F), (1, F)  FFN linear 1
    w2_ref, bb2_ref,           # (F, D), (1, D)  FFN linear 2
    out_ref,                   # (1, tq, D)
    k_ref,                     # VMEM scratch (L, D), compute dtype
    v_ref,                     # VMEM scratch (L, D), compute dtype
    *, n_heads,
):
    L = x_ref.shape[1]
    D = x_ref.shape[2]
    tq = out_ref.shape[1]
    hd = D // n_heads
    cdt = k_ref.dtype          # matmul-operand (compute) dtype

    t = pl.program_id(1)

    # ---- K / V for the whole sequence: built once per batch element ----
    # (t axis must stay sequential / "arbitrary" for this scratch reuse.)
    @pl.when(t == 0)
    def _():
        xf = x_ref[0]                                           # (L, D) f32
        xn = _layer_norm(xf, g1_ref[0], b1_ref[0]).astype(cdt)
        k = jnp.dot(xn, wk_ref[...], preferred_element_type=jnp.float32) + bk_ref[0]
        v = jnp.dot(xn, wv_ref[...], preferred_element_type=jnp.float32) + bv_ref[0]
        k_ref[...] = k.astype(cdt)
        v_ref[...] = v.astype(cdt)

    # ---- per query-tile path: slice the tile from the resident x block ----
    row0 = pl.multiple_of(t * tq, tq)
    xt = x_ref[0, pl.ds(row0, tq), :]                           # (tq, D) f32
    xn1 = _layer_norm(xt, g1_ref[0], b1_ref[0])
    # 1/sqrt(hd) already folded into wq / bq in the wrapper.
    q = jnp.dot(xn1.astype(cdt), wq_ref[...],
                preferred_element_type=jnp.float32) + bq_ref[0]  # (tq, D) f32

    # Batched attention over all heads in one shot (no per-head loop/concat).
    qh = q.astype(cdt).reshape(tq, n_heads, hd)
    kh = k_ref[...].reshape(L, n_heads, hd)
    vh = v_ref[...].reshape(L, n_heads, hd)

    s = jnp.einsum("qhd,khd->hqk", qh, kh,
                   preferred_element_type=jnp.float32)           # (H, tq, L) f32
    s = s - jnp.max(s, axis=-1, keepdims=True)
    p = jnp.exp(s)
    # Approximate EUP reciprocal: deviates slightly from exact softmax (fine for
    # inference; not bit-exact with PyTorch).
    p = p * pl.reciprocal(jnp.sum(p, axis=-1, keepdims=True), approx=True)

    ctx = jnp.einsum("hqk,khd->qhd", p.astype(cdt), vh,
                     preferred_element_type=jnp.float32).reshape(tq, D)

    mha = jnp.dot(ctx.astype(cdt), wo_ref[...],
                  preferred_element_type=jnp.float32) + bo_ref[0]

    # ---- residual 1 ----
    x1 = xt + mha

    # ---- norm2 + FFN ----
    xn2 = _layer_norm(x1, g2_ref[0], b2_ref[0])
    h1 = jnp.dot(xn2.astype(cdt), w1_ref[...],
                 preferred_element_type=jnp.float32) + bb1_ref[0]
    h1 = jnp.maximum(h1, 0.0)                                   # ReLU
    ffn = jnp.dot(h1.astype(cdt), w2_ref[...],
                  preferred_element_type=jnp.float32) + bb2_ref[0]

    # ---- residual 2 ----
    out_ref[0] = (x1 + ffn).astype(out_ref.dtype)


def transformer_layer(x, params, *, n_heads, tq=None,
                      compute_dtype=jnp.bfloat16, single_buffer_weights=True):
    B, L, D = x.shape
    F = params["w1"].shape[0]
    hd = D // n_heads
    scale = 1.0 / math.sqrt(hd)

    if tq is None:
        tq = min(L, 128)
    assert L % tq == 0, "sequence length must be divisible by the query tile"
    T = L // tq

    cdt = jnp.dtype(compute_dtype)
    xdt = x.dtype

    # --- one-time wrapper-side weight prep: split, fold scale, transpose, cast ---
    wqkv, bqkv = params["wqkv"], params["bqkv"]
    wq_t = (wqkv[0 * D:1 * D] * scale).T.astype(cdt)   # (D, D), scale folded in
    wk_t = wqkv[1 * D:2 * D].T.astype(cdt)             # (D, D)
    wv_t = wqkv[2 * D:3 * D].T.astype(cdt)             # (D, D)
    bq = bqkv[:, 0 * D:1 * D] * scale                  # (1, D), scale folded in
    bk = bqkv[:, 1 * D:2 * D]
    bv = bqkv[:, 2 * D:3 * D]
    wo_t = params["wo"].T.astype(cdt)                  # (D, D)
    w1_t = params["w1"].T.astype(cdt)                  # (D, F)
    w2_t = params["w2"].T.astype(cdt)                  # (F, D)

    # --- cost estimate (includes the output write) ---
    flops = 2 * B * L * (4 * D * D + 2 * L * D + 2 * D * F)
    bytes_accessed = (
        B * L * D * xdt.itemsize                        # x read (once per b)
        + B * L * D * xdt.itemsize                      # output write
        + (4 * D * D + 2 * D * F) * cdt.itemsize        # weights
        + (8 * D + F) * 4                               # biases / LN params (f32)
    )
    cost = pl.CostEstimate(flops=int(flops),
                           transcendentals=int(B * n_heads * L * L),
                           bytes_accessed=int(bytes_accessed))

    # --- VMEM budget: pipelined blocks + scratch + in-kernel intermediates ---
    resident = (
        2 * (L * D + tq * D) * xdt.itemsize             # x block + out block (2-buf)
        + 2 * (4 * D * D + 2 * D * F) * cdt.itemsize    # weights (worst case 2-buf)
        + 2 * (8 * D + F) * 4                           # biases / LN params (f32)
        + 2 * L * D * cdt.itemsize                      # K/V scratch
        + 2 * n_heads * tq * L * 4                      # scores + probs (f32)
        + tq * F * 4                                    # h1 (f32)
        + L * D * (4 + cdt.itemsize)                    # xn at t==0 (f32 + cast)
        + (tq + 2 * L) * D * cdt.itemsize               # qh / kh / vh views
        + 5 * tq * D * 4                                # q, ctx, mha, x1, xn2 (f32)
        + 2 * _MIB                                      # headroom
    )
    # Per-generation cap (≈112 MiB on v5e/v6e, ≈48 MiB on v7x).
    try:
        vmem_cap = int(getattr(pltpu.get_tpu_info(), "vmem_capacity_bytes",
                               64 * _MIB))
    except Exception:
        vmem_cap = 64 * _MIB
    cap = max(32 * _MIB, vmem_cap - 16 * _MIB)
    vmem_limit = int(min(max(int(1.5 * resident), 32 * _MIB), cap))

    kernel = functools.partial(transformer_layer_kernel, n_heads=n_heads)

    def build(weight_buffers):
        def wspec(shape):
            idx = lambda b, t, _n=len(shape): (0,) * _n
            if weight_buffers is None:
                return pl.BlockSpec(shape, idx)
            return pl.BlockSpec(shape, idx,
                                pipeline_mode=pl.Buffered(weight_buffers))

        in_specs = [
            # x: full sequence for batch b; block index constant across t, so it
            # is only DMA'd once per batch element.
            pl.BlockSpec((1, L, D), lambda b, t: (b, 0, 0)),
            wspec((1, D)), wspec((1, D)),                        # norm1
            wspec((D, D)), wspec((1, D)),                        # Wq, bq (scaled)
            wspec((D, D)), wspec((1, D)),                        # Wk, bk
            wspec((D, D)), wspec((1, D)),                        # Wv, bv
            wspec((D, D)), wspec((1, D)),                        # Wo, bo
            wspec((1, D)), wspec((1, D)),                        # norm2
            wspec((D, F)), wspec((1, F)),                        # FFN lin1
            wspec((F, D)), wspec((1, D)),                        # FFN lin2
        ]
        return pl.pallas_call(
            kernel,
            out_shape=jax.ShapeDtypeStruct((B, L, D), xdt),
            grid_spec=pltpu.PrefetchScalarGridSpec(
                num_scalar_prefetch=0,
                grid=(B, T),
                in_specs=in_specs,
                out_specs=pl.BlockSpec((1, tq, D), lambda b, t: (b, t, 0)),
                scratch_shapes=[pltpu.VMEM((L, D), cdt),         # K
                                pltpu.VMEM((L, D), cdt)],        # V
            ),
            compiler_params=pltpu.CompilerParams(
                # t axis must be "arbitrary": K/V scratch is built at t==0 and
                # reused by later tiles of the same batch element.
                dimension_semantics=("parallel", "arbitrary"),
                vmem_limit_bytes=vmem_limit),
            cost_estimate=cost,
        )

    args = (
        x,
        params["g1"], params["b1"],
        wq_t, bq, wk_t, bk, wv_t, bv,
        wo_t, params["bo"],
        params["g2"], params["b2"],
        w1_t, params["bb1"],
        w2_t, params["bb2"],
    )

    if single_buffer_weights:
        try:
            # Single-buffer the grid-invariant operands (largest static VMEM save).
            return build(1)(*args)
        except Exception:
            # pl.Buffered(1) not accepted by this jaxlib -> default 2-buffering.
            pass
    return build(None)(*args)


def reference_jax(x, params, *, n_heads):
    B, L, D = x.shape
    hd = D // n_heads
    scale = 1.0 / math.sqrt(hd)

    def ln(v, g, b):
        mu = jnp.mean(v, axis=-1, keepdims=True)
        var = jnp.mean((v - mu) ** 2, axis=-1, keepdims=True)
        return (v - mu) / jnp.sqrt(var + EPS_T) * g[0] + b[0]

    xn1 = ln(x, params["g1"], params["b1"])
    qkv = xn1 @ params["wqkv"].T + params["bqkv"][0]
    q, k, v = jnp.split(qkv, 3, axis=-1)
    q = q.reshape(B, L, n_heads, hd).transpose(0, 2, 1, 3) * scale
    k = k.reshape(B, L, n_heads, hd).transpose(0, 2, 1, 3)
    v = v.reshape(B, L, n_heads, hd).transpose(0, 2, 1, 3)
    s = jnp.einsum("bhqd,bhkd->bhqk", q, k)
    p = jax.nn.softmax(s, axis=-1)
    ctx = jnp.einsum("bhqk,bhkd->bhqd", p, v).transpose(0, 2, 1, 3).reshape(B, L, D)
    mha = ctx @ params["wo"].T + params["bo"][0]
    x1 = x + mha
    xn2 = ln(x1, params["g2"], params["b2"])
    h1 = jnp.maximum(xn2 @ params["w1"].T + params["bb1"][0], 0.0)
    ffn = h1 @ params["w2"].T + params["bb2"][0]
    return x1 + ffn


if __name__ == "__main__":
    # Small shapes consistent with the module (toy D; for production D/F should
    # be padded to multiples of 128 lanes for MXU/vreg efficiency).
    B, L, D, F, H = 2, 8, 32, 64, 4

    key = jax.random.PRNGKey(0)
    ks = jax.random.split(key, 10)

    def init(k, shape, scale=0.1):
        return jax.random.normal(k, shape, dtype=jnp.float32) * scale

    params = {
        "g1":   jnp.ones((1, D), jnp.float32),
        "b1":   jnp.zeros((1, D), jnp.float32),
        "wqkv": init(ks[0], (3 * D, D)),
        "bqkv": init(ks[1], (1, 3 * D)),
        "wo":   init(ks[2], (D, D)),
        "bo":   init(ks[3], (1, D)),
        "g2":   jnp.ones((1, D), jnp.float32),
        "b2":   jnp.zeros((1, D), jnp.float32),
        "w1":   init(ks[4], (F, D)),
        "bb1":  init(ks[5], (1, F)),
        "w2":   init(ks[6], (D, F)),
        "bb2":  init(ks[7], (1, D)),
    }

    x = jax.random.normal(ks[8], (B, L, D), dtype=jnp.float32)
    ref = reference_jax(x, params, n_heads=H)

    # f32 matmul-operand path (tolerance loosened only for approx softmax recip).
    out_f32 = transformer_layer(x, params, n_heads=H, compute_dtype=jnp.float32)
    out_f32 = jax.block_until_ready(out_f32)
    assert out_f32.shape == (B, L, D)
    err_f32 = float(jnp.max(jnp.abs(out_f32 - ref)))
    assert jnp.allclose(out_f32, ref, atol=2e-3, rtol=2e-3), err_f32

    # Default bf16 MXU-operand path (f32 accumulation / LN / softmax).
    out = transformer_layer(x, params, n_heads=H)
    out = jax.block_until_ready(out)
    err_bf16 = float(jnp.max(jnp.abs(out - ref)))
    assert jnp.allclose(out, ref, atol=5e-2, rtol=5e-2), err_bf16

    print("KERNEL_OK")
</pallas_src>

<mosaic_0001>
module attributes {stable_mosaic.version = 11 : i64} {
  func.func @transformer_layer_kernel(%arg0: i32, %arg1: i32, %arg2: memref<1x8x32xf32, #tpu.memory_space<vmem>>, %arg3: memref<1x32xf32, #tpu.memory_space<vmem>>, %arg4: memref<1x32xf32, #tpu.memory_space<vmem>>, %arg5: memref<32x32xf32, #tpu.memory_space<vmem>>, %arg6: memref<1x32xf32, #tpu.memory_space<vmem>>, %arg7: memref<32x32xf32, #tpu.memory_space<vmem>>, %arg8: memref<1x32xf32, #tpu.memory_space<vmem>>, %arg9: memref<32x32xf32, #tpu.memory_space<vmem>>, %arg10: memref<1x32xf32, #tpu.memory_space<vmem>>, %arg11: memref<32x32xf32, #tpu.memory_space<vmem>>, %arg12: memref<1x32xf32, #tpu.memory_space<vmem>>, %arg13: memref<1x32xf32, #tpu.memory_space<vmem>>, %arg14: memref<1x32xf32, #tpu.memory_space<vmem>>, %arg15: memref<32x64xf32, #tpu.memory_space<vmem>>, %arg16: memref<1x64xf32, #tpu.memory_space<vmem>>, %arg17: memref<64x32xf32, #tpu.memory_space<vmem>>, %arg18: memref<1x32xf32, #tpu.memory_space<vmem>>, %arg19: memref<1x8x32xf32, #tpu.memory_space<vmem>>, %arg20: memref<8x32xf32, #tpu.memory_space<vmem>>, %arg21: memref<8x32xf32, #tpu.memory_space<vmem>>) attributes {dimension_semantics = [#tpu.dimension_semantics<parallel>, #tpu.dimension_semantics<arbitrary>], iteration_bounds = array<i64: 2, 1>, scalar_prefetch = 0 : i64, scratch_operands = 2 : i64, tpu.core_type = #tpu.core_type<tc>, window_params = [{transform_indices = @transform_0, window_bounds = array<i64: 1, 8, 32>}, {pipeline_mode = #tpu.pipeline_mode<synchronous>, transform_indices = @transform_1, window_bounds = array<i64: 1, 32>}, {pipeline_mode = #tpu.pipeline_mode<synchronous>, transform_indices = @transform_2, window_bounds = array<i64: 1, 32>}, {pipeline_mode = #tpu.pipeline_mode<synchronous>, transform_indices = @transform_3, window_bounds = array<i64: 32, 32>}, {pipeline_mode = #tpu.pipeline_mode<synchronous>, transform_indices = @transform_4, window_bounds = array<i64: 1, 32>}, {pipeline_mode = #tpu.pipeline_mode<synchronous>, transform_indices = @transform_5, window_bounds = array<i64: 32, 32>}, {pipeline_mode = #tpu.pipeline_mode<synchronous>, transform_indices = @transform_6, window_bounds = array<i64: 1, 32>}, {pipeline_mode = #tpu.pipeline_mode<synchronous>, transform_indices = @transform_7, window_bounds = array<i64: 32, 32>}, {pipeline_mode = #tpu.pipeline_mode<synchronous>, transform_indices = @transform_8, window_bounds = array<i64: 1, 32>}, {pipeline_mode = #tpu.pipeline_mode<synchronous>, transform_indices = @transform_9, window_bounds = array<i64: 32, 32>}, {pipeline_mode = #tpu.pipeline_mode<synchronous>, transform_indices = @transform_10, window_bounds = array<i64: 1, 32>}, {pipeline_mode = #tpu.pipeline_mode<synchronous>, transform_indices = @transform_11, window_bounds = array<i64: 1, 32>}, {pipeline_mode = #tpu.pipeline_mode<synchronous>, transform_indices = @transform_12, window_bounds = array<i64: 1, 32>}, {pipeline_mode = #tpu.pipeline_mode<synchronous>, transform_indices = @transform_13, window_bounds = array<i64: 32, 64>}, {pipeline_mode = #tpu.pipeline_mode<synchronous>, transform_indices = @transform_14, window_bounds = array<i64: 1, 64>}, {pipeline_mode = #tpu.pipeline_mode<synchronous>, transform_indices = @transform_15, window_bounds = array<i64: 64, 32>}, {pipeline_mode = #tpu.pipeline_mode<synchronous>, transform_indices = @transform_16, window_bounds = array<i64: 1, 32>}, {transform_indices = @transform_17, window_bounds = array<i64: 1, 8, 32>}]} {
    %c0_i32 = arith.constant 0 : i32
    %0 = arith.cmpi eq, %arg1, %c0_i32 : i32
    %1 = arith.extui %0 : i1 to i32
    %c0_i32_0 = arith.constant 0 : i32
    %2 = arith.cmpi ne, %1, %c0_i32_0 : i32
    scf.if %2 {
      %c0_51 = arith.constant 0 : index
      %c0_52 = arith.constant 0 : index
      %c0_53 = arith.constant 0 : index
      %118 = vector.load %arg2[%c0_51, %c0_52, %c0_53] : memref<1x8x32xf32, #tpu.memory_space<vmem>>, vector<1x8x32xf32>
      %119 = vector.shape_cast %118 : vector<1x8x32xf32> to vector<8x32xf32>
      %c0_54 = arith.constant 0 : index
      %c0_55 = arith.constant 0 : index
      %120 = vector.load %arg3[%c0_54, %c0_55] : memref<1x32xf32, #tpu.memory_space<vmem>>, vector<1x32xf32>
      %121 = vector.shape_cast %120 : vector<1x32xf32> to vector<32xf32>
      %c0_56 = arith.constant 0 : index
      %c0_57 = arith.constant 0 : index
      %122 = vector.load %arg4[%c0_56, %c0_57] : memref<1x32xf32, #tpu.memory_space<vmem>>, vector<1x32xf32>
      %123 = vector.shape_cast %122 : vector<1x32xf32> to vector<32xf32>
      %cst_58 = arith.constant dense<0.000000e+00> : vector<8xf32>
      %124 = vector.multi_reduction <add>, %119, %cst_58 [1] : vector<8x32xf32> to vector<8xf32>
      %125 = vector.shape_cast %124 : vector<8xf32> to vector<8x1xf32>
      %cst_59 = arith.constant 3.200000e+01 : f32
      %126 = vector.broadcast %cst_59 : f32 to vector<8x1xf32>
      %127 = arith.divf %125, %126 : vector<8x1xf32>
      %128 = vector.broadcast %127 : vector<8x1xf32> to vector<8x32xf32>
      %129 = arith.subf %119, %128 : vector<8x32xf32>
      %130 = arith.mulf %129, %129 : vector<8x32xf32>
      %cst_60 = arith.constant dense<0.000000e+00> : vector<8xf32>
      %131 = vector.multi_reduction <add>, %130, %cst_60 [1] : vector<8x32xf32> to vector<8xf32>
      %132 = vector.shape_cast %131 : vector<8xf32> to vector<8x1xf32>
      %cst_61 = arith.constant 3.200000e+01 : f32
      %133 = vector.broadcast %cst_61 : f32 to vector<8x1xf32>
      %134 = arith.divf %132, %133 : vector<8x1xf32>
      %135 = vector.broadcast %127 : vector<8x1xf32> to vector<8x32xf32>
      %136 = arith.subf %119, %135 : vector<8x32xf32>
      %cst_62 = arith.constant 9.99999997E-7 : f32
      %137 = vector.broadcast %cst_62 : f32 to vector<8x1xf32>
      %138 = arith.addf %134, %137 : vector<8x1xf32>
      %139 = math.rsqrt %138 : vector<8x1xf32>
      %140 = vector.broadcast %139 : vector<8x1xf32> to vector<8x32xf32>
      %141 = arith.mulf %136, %140 : vector<8x32xf32>
      %142 = vector.shape_cast %121 : vector<32xf32> to vector<1x32xf32>
      %143 = vector.broadcast %142 : vector<1x32xf32> to vector<8x32xf32>
      %144 = arith.mulf %141, %143 : vector<8x32xf32>
      %145 = vector.shape_cast %123 : vector<32xf32> to vector<1x32xf32>
      %146 = vector.broadcast %145 : vector<1x32xf32> to vector<8x32xf32>
      %147 = arith.addf %144, %146 : vector<8x32xf32>
      %c0_63 = arith.constant 0 : index
      %c0_64 = arith.constant 0 : index
      %148 = vector.load %arg7[%c0_63, %c0_64] : memref<32x32xf32, #tpu.memory_space<vmem>>, vector<32x32xf32>
      %cst_65 = arith.constant dense<0.000000e+00> : vector<8x32xf32>
      %149 = tpu.matmul %147, %148, %cst_65 {dimension_numbers = #tpu.dot_dimension_numbers<[1], [0], [0], [1], [0, 0, 1, 1], [], []>} : vector<8x32xf32>, vector<32x32xf32>, vector<8x32xf32> -> vector<8x32xf32>
      %c0_66 = arith.constant 0 : index
      %c0_67 = arith.constant 0 : index
      %150 = vector.load %arg8[%c0_66, %c0_67] : memref<1x32xf32, #tpu.memory_space<vmem>>, vector<1x32xf32>
      %151 = vector.shape_cast %150 : vector<1x32xf32> to vector<32xf32>
      %152 = vector.shape_cast %151 : vector<32xf32> to vector<1x32xf32>
      %153 = vector.broadcast %152 : vector<1x32xf32> to vector<8x32xf32>
      %154 = arith.addf %149, %153 : vector<8x32xf32>
      %c0_68 = arith.constant 0 : index
      %c0_69 = arith.constant 0 : index
      %155 = vector.load %arg9[%c0_68, %c0_69] : memref<32x32xf32, #tpu.memory_space<vmem>>, vector<32x32xf32>
      %cst_70 = arith.constant dense<0.000000e+00> : vector<8x32xf32>
      %156 = tpu.matmul %147, %155, %cst_70 {dimension_numbers = #tpu.dot_dimension_numbers<[1], [0], [0], [1], [0, 0, 1, 1], [], []>} : vector<8x32xf32>, vector<32x32xf32>, vector<8x32xf32> -> vector<8x32xf32>
      %c0_71 = arith.constant 0 : index
      %c0_72 = arith.constant 0 : index
      %157 = vector.load %arg10[%c0_71, %c0_72] : memref<1x32xf32, #tpu.memory_space<vmem>>, vector<1x32xf32>
      %158 = vector.shape_cast %157 : vector<1x32xf32> to vector<32xf32>
      %159 = vector.shape_cast %158 : vector<32xf32> to vector<1x32xf32>
      %160 = vector.broadcast %159 : vector<1x32xf32> to vector<8x32xf32>
      %161 = arith.addf %156, %160 : vector<8x32xf32>
      %c0_73 = arith.constant 0 : index
      %c0_74 = arith.constant 0 : index
      %162 = vector.load %arg20[%c0_73, %c0_74] : memref<8x32xf32, #tpu.memory_space<vmem>>, vector<8x32xf32>
      tpu.vector_store %arg20[%c0_73, %c0_74], %154 {strides = array<i32>} : memref<8x32xf32, #tpu.memory_space<vmem>>, vector<8x32xf32>,
      %c0_75 = arith.constant 0 : index
      %c0_76 = arith.constant 0 : index
      %163 = vector.load %arg21[%c0_75, %c0_76] : memref<8x32xf32, #tpu.memory_space<vmem>>, vector<8x32xf32>
      tpu.vector_store %arg21[%c0_75, %c0_76], %161 {strides = array<i32>} : memref<8x32xf32, #tpu.memory_space<vmem>>, vector<8x32xf32>,
    } else {
    }
    %c8_i32 = arith.constant 8 : i32
    %3 = arith.muli %arg1, %c8_i32 : i32
    %4 = tpu.assume_multiple %3, 8 : i32
    %c0 = arith.constant 0 : index
    %5 = arith.index_cast %4 : i32 to index
    %c0_1 = arith.constant 0 : index
    %6 = vector.load %arg2[%c0, %5, %c0_1] : memref<1x8x32xf32, #tpu.memory_space<vmem>>, vector<1x8x32xf32>
    %7 = vector.shape_cast %6 : vector<1x8x32xf32> to vector<8x32xf32>
    %c0_2 = arith.constant 0 : index
    %c0_3 = arith.constant 0 : index
    %8 = vector.load %arg3[%c0_2, %c0_3] : memref<1x32xf32, #tpu.memory_space<vmem>>, vector<1x32xf32>
    %9 = vector.shape_cast %8 : vector<1x32xf32> to vector<32xf32>
    %c0_4 = arith.constant 0 : index
    %c0_5 = arith.constant 0 : index
    %10 = vector.load %arg4[%c0_4, %c0_5] : memref<1x32xf32, #tpu.memory_space<vmem>>, vector<1x32xf32>
    %11 = vector.shape_cast %10 : vector<1x32xf32> to vector<32xf32>
    %cst = arith.constant dense<0.000000e+00> : vector<8xf32>
    %12 = vector.multi_reduction <add>, %7, %cst [1] : vector<8x32xf32> to vector<8xf32>
    %13 = vector.shape_cast %12 : vector<8xf32> to vector<8x1xf32>
    %cst_6 = arith.constant 3.200000e+01 : f32
    %14 = vector.broadcast %cst_6 : f32 to vector<8x1xf32>
    %15 = arith.divf %13, %14 : vector<8x1xf32>
    %16 = vector.broadcast %15 : vector<8x1xf32> to vector<8x32xf32>
    %17 = arith.subf %7, %16 : vector<8x32xf32>
    %18 = arith.mulf %17, %17 : vector<8x32xf32>
    %cst_7 = arith.constant dense<0.000000e+00> : vector<8xf32>
    %19 = vector.multi_reduction <add>, %18, %cst_7 [1] : vector<8x32xf32> to vector<8xf32>
    %20 = vector.shape_cast %19 : vector<8xf32> to vector<8x1xf32>
    %cst_8 = arith.constant 3.200000e+01 : f32
    %21 = vector.broadcast %cst_8 : f32 to vector<8x1xf32>
    %22 = arith.divf %20, %21 : vector<8x1xf32>
    %23 = vector.broadcast %15 : vector<8x1xf32> to vector<8x32xf32>
    %24 = arith.subf %7, %23 : vector<8x32xf32>
    %cst_9 = arith.constant 9.99999997E-7 : f32
    %25 = vector.broadcast %cst_9 : f32 to vector<8x1xf32>
    %26 = arith.addf %22, %25 : vector<8x1xf32>
    %27 = math.rsqrt %26 : vector<8x1xf32>
    %28 = vector.broadcast %27 : vector<8x1xf32> to vector<8x32xf32>
    %29 = arith.mulf %24, %28 : vector<8x32xf32>
    %30 = vector.shape_cast %9 : vector<32xf32> to vector<1x32xf32>
    %31 = vector.broadcast %30 : vector<1x32xf32> to vector<8x32xf32>
    %32 = arith.mulf %29, %31 : vector<8x32xf32>
    %33 = vector.shape_cast %11 : vector<32xf32> to vector<1x32xf32>
    %34 = vector.broadcast %33 : vector<1x32xf32> to vector<8x32xf32>
    %35 = arith.addf %32, %34 : vector<8x32xf32>
    %c0_10 = arith.constant 0 : index
    %c0_11 = arith.constant 0 : index
    %36 = vector.load %arg5[%c0_10, %c0_11] : memref<32x32xf32, #tpu.memory_space<vmem>>, vector<32x32xf32>
    %cst_12 = arith.constant dense<0.000000e+00> : vector<8x32xf32>
    %37 = tpu.matmul %35, %36, %cst_12 {dimension_numbers = #tpu.dot_dimension_numbers<[1], [0], [0], [1], [0, 0, 1, 1], [], []>} : vector<8x32xf32>, vector<32x32xf32>, vector<8x32xf32> -> vector<8x32xf32>
    %c0_13 = arith.constant 0 : index
    %c0_14 = arith.constant 0 : index
    %38 = vector.load %arg6[%c0_13, %c0_14] : memref<1x32xf32, #tpu.memory_space<vmem>>, vector<1x32xf32>
    %39 = vector.shape_cast %38 : vector<1x32xf32> to vector<32xf32>
    %40 = vector.shape_cast %39 : vector<32xf32> to vector<1x32xf32>
    %41 = vector.broadcast %40 : vector<1x32xf32> to vector<8x32xf32>
    %42 = arith.addf %37, %41 : vector<8x32xf32>
    %43 = vector.shape_cast %42 : vector<8x32xf32> to vector<8x4x8xf32>
    %c0_15 = arith.constant 0 : index
    %c0_16 = arith.constant 0 : index
    %44 = vector.load %arg20[%c0_15, %c0_16] : memref<8x32xf32, #tpu.memory_space<vmem>>, vector<8x32xf32>
    %45 = vector.shape_cast %44 : vector<8x32xf32> to vector<8x4x8xf32>
    %c0_17 = arith.constant 0 : index
    %c0_18 = arith.constant 0 : index
    %46 = vector.load %arg21[%c0_17, %c0_18] : memref<8x32xf32, #tpu.memory_space<vmem>>, vector<8x32xf32>
    %47 = vector.shape_cast %46 : vector<8x32xf32> to vector<8x4x8xf32>
    "tpu.trace_start"() <{level = 10 : i32, message = "qhd,khd->hqk"}> : () -> ()
    %cst_19 = arith.constant dense<0.000000e+00> : vector<4x8x8xf32>
    %48 = tpu.matmul %43, %45, %cst_19 {dimension_numbers = #tpu.dot_dimension_numbers<[2], [2], [0], [0], [0, 1, 0, 0, 1, 0], [1], [1]>} : vector<8x4x8xf32>, vector<8x4x8xf32>, vector<4x8x8xf32> -> vector<4x8x8xf32>
    "tpu.trace_stop"() : () -> ()
    %cst_20 = arith.constant dense<0xFF800000> : vector<4x8xf32>
    %49 = vector.multi_reduction <maximumf>, %48, %cst_20 [2] : vector<4x8x8xf32> to vector<4x8xf32>
    %50 = vector.shape_cast %49 : vector<4x8xf32> to vector<4x8x1xf32>
    %51 = vector.broadcast %50 : vector<4x8x1xf32> to vector<4x8x8xf32>
    %52 = arith.subf %48, %51 : vector<4x8x8xf32>
    %53 = math.exp %52 : vector<4x8x8xf32>
    %cst_21 = arith.constant dense<0.000000e+00> : vector<4x8xf32>
    %54 = vector.multi_reduction <add>, %53, %cst_21 [2] : vector<4x8x8xf32> to vector<4x8xf32>
    %55 = vector.shape_cast %54 : vector<4x8xf32> to vector<4x8x1xf32>
    %56 = tpu.reciprocal %55 {approx = true} : vector<4x8x1xf32> -> vector<4x8x1xf32>
    %57 = vector.broadcast %56 : vector<4x8x1xf32> to vector<4x8x8xf32>
    %58 = arith.mulf %53, %57 : vector<4x8x8xf32>
    "tpu.trace_start"() <{level = 10 : i32, message = "hqk,khd->qhd"}> : () -> ()
    %cst_22 = arith.constant dense<0.000000e+00> : vector<4x8x8xf32>
    %59 = tpu.matmul %47, %58, %cst_22 {dimension_numbers = #tpu.dot_dimension_numbers<[0], [2], [2], [1], [0, 1, 0, 2, 1, 1], [1], [0]>} : vector<8x4x8xf32>, vector<4x8x8xf32>, vector<4x8x8xf32> -> vector<4x8x8xf32>
    %60 = tpu.transpose %59, [2, 0, 1] : vector<4x8x8xf32> -> vector<8x4x8xf32>
    "tpu.trace_stop"() : () -> ()
    %61 = vector.shape_cast %60 : vector<8x4x8xf32> to vector<8x32xf32>
    %c0_23 = arith.constant 0 : index
    %c0_24 = arith.constant 0 : index
    %62 = vector.load %arg11[%c0_23, %c0_24] : memref<32x32xf32, #tpu.memory_space<vmem>>, vector<32x32xf32>
    %cst_25 = arith.constant dense<0.000000e+00> : vector<8x32xf32>
    %63 = tpu.matmul %61, %62, %cst_25 {dimension_numbers = #tpu.dot_dimension_numbers<[1], [0], [0], [1], [0, 0, 1, 1], [], []>} : vector<8x32xf32>, vector<32x32xf32>, vector<8x32xf32> -> vector<8x32xf32>
    %c0_26 = arith.constant 0 : index
    %c0_27 = arith.constant 0 : index
    %64 = vector.load %arg12[%c0_26, %c0_27] : memref<1x32xf32, #tpu.memory_space<vmem>>, vector<1x32xf32>
    %65 = vector.shape_cast %64 : vector<1x32xf32> to vector<32xf32>
    %66 = vector.shape_cast %65 : vector<32xf32> to vector<1x32xf32>
    %67 = vector.broadcast %66 : vector<1x32xf32> to vector<8x32xf32>
    %68 = arith.addf %63, %67 : vector<8x32xf32>
    %69 = arith.addf %7, %68 : vector<8x32xf32>
    %c0_28 = arith.constant 0 : index
    %c0_29 = arith.constant 0 : index
    %70 = vector.load %arg13[%c0_28, %c0_29] : memref<1x32xf32, #tpu.memory_space<vmem>>, vector<1x32xf32>
    %71 = vector.shape_cast %70 : vector<1x32xf32> to vector<32xf32>
    %c0_30 = arith.constant 0 : index
    %c0_31 = arith.constant 0 : index
    %72 = vector.load %arg14[%c0_30, %c0_31] : memref<1x32xf32, #tpu.memory_space<vmem>>, vector<1x32xf32>
    %73 = vector.shape_cast %72 : vector<1x32xf32> to vector<32xf32>
    %cst_32 = arith.constant dense<0.000000e+00> : vector<8xf32>
    %74 = vector.multi_reduction <add>, %69, %cst_32 [1] : vector<8x32xf32> to vector<8xf32>
    %75 = vector.shape_cast %74 : vector<8xf32> to vector<8x1xf32>
    %cst_33 = arith.constant 3.200000e+01 : f32
    %76 = vector.broadcast %cst_33 : f32 to vector<8x1xf32>
    %77 = arith.divf %75, %76 : vector<8x1xf32>
    %78 = vector.broadcast %77 : vector<8x1xf32> to vector<8x32xf32>
    %79 = arith.subf %69, %78 : vector<8x32xf32>
    %80 = arith.mulf %79, %79 : vector<8x32xf32>
    %cst_34 = arith.constant dense<0.000000e+00> : vector<8xf32>
    %81 = vector.multi_reduction <add>, %80, %cst_34 [1] : vector<8x32xf32> to vector<8xf32>
    %82 = vector.shape_cast %81 : vector<8xf32> to vector<8x1xf32>
    %cst_35 = arith.constant 3.200000e+01 : f32
    %83 = vector.broadcast %cst_35 : f32 to vector<8x1xf32>
    %84 = arith.divf %82, %83 : vector<8x1xf32>
    %85 = vector.broadcast %77 : vector<8x1xf32> to vector<8x32xf32>
    %86 = arith.subf %69, %85 : vector<8x32xf32>
    %cst_36 = arith.constant 9.99999997E-7 : f32
    %87 = vector.broadcast %cst_36 : f32 to vector<8x1xf32>
    %88 = arith.addf %84, %87 : vector<8x1xf32>
    %89 = math.rsqrt %88 : vector<8x1xf32>
    %90 = vector.broadcast %89 : vector<8x1xf32> to vector<8x32xf32>
    %91 = arith.mulf %86, %90 : vector<8x32xf32>
    %92 = vector.shape_cast %71 : vector<32xf32> to vector<1x32xf32>
    %93 = vector.broadcast %92 : vector<1x32xf32> to vector<8x32xf32>
    %94 = arith.mulf %91, %93 : vector<8x32xf32>
    %95 = vector.shape_cast %73 : vector<32xf32> to vector<1x32xf32>
    %96 = vector.broadcast %95 : vector<1x32xf32> to vector<8x32xf32>
    %97 = arith.addf %94, %96 : vector<8x32xf32>
    %c0_37 = arith.constant 0 : index
    %c0_38 = arith.constant 0 : index
    %98 = vector.load %arg15[%c0_37, %c0_38] : memref<32x64xf32, #tpu.memory_space<vmem>>, vector<32x64xf32>
    %cst_39 = arith.constant dense<0.000000e+00> : vector<8x64xf32>
    %99 = tpu.matmul %97, %98, %cst_39 {dimension_numbers = #tpu.dot_dimension_numbers<[1], [0], [0], [1], [0, 0, 1, 1], [], []>} : vector<8x32xf32>, vector<32x64xf32>, vector<8x64xf32> -> vector<8x64xf32>
    %c0_40 = arith.constant 0 : index
    %c0_41 = arith.constant 0 : index
    %100 = vector.load %arg16[%c0_40, %c0_41] : memref<1x64xf32, #tpu.memory_space<vmem>>, vector<1x64xf32>
    %101 = vector.shape_cast %100 : vector<1x64xf32> to vector<64xf32>
    %102 = vector.shape_cast %101 : vector<64xf32> to vector<1x64xf32>
    %103 = vector.broadcast %102 : vector<1x64xf32> to vector<8x64xf32>
    %104 = arith.addf %99, %103 : vector<8x64xf32>
    %cst_42 = arith.constant 0.000000e+00 : f32
    %105 = vector.broadcast %cst_42 : f32 to vector<8x64xf32>
    %106 = arith.maximumf %104, %105 : vector<8x64xf32>
    %c0_43 = arith.constant 0 : index
    %c0_44 = arith.constant 0 : index
    %107 = vector.load %arg17[%c0_43, %c0_44] : memref<64x32xf32, #tpu.memory_space<vmem>>, vector<64x32xf32>
    %cst_45 = arith.constant dense<0.000000e+00> : vector<8x32xf32>
    %108 = tpu.matmul %106, %107, %cst_45 {dimension_numbers = #tpu.dot_dimension_numbers<[1], [0], [0], [1], [0, 0, 1, 1], [], []>} : vector<8x64xf32>, vector<64x32xf32>, vector<8x32xf32> -> vector<8x32xf32>
    %c0_46 = arith.constant 0 : index
    %c0_47 = arith.constant 0 : index
    %109 = vector.load %arg18[%c0_46, %c0_47] : memref<1x32xf32, #tpu.memory_space<vmem>>, vector<1x32xf32>
    %110 = vector.shape_cast %109 : vector<1x32xf32> to vector<32xf32>
    %111 = vector.shape_cast %110 : vector<32xf32> to vector<1x32xf32>
    %112 = vector.broadcast %111 : vector<1x32xf32> to vector<8x32xf32>
    %113 = arith.addf %108, %112 : vector<8x32xf32>
    %114 = arith.addf %69, %113 : vector<8x32xf32>
    %c0_48 = arith.constant 0 : index
    %c0_49 = arith.constant 0 : index
    %c0_50 = arith.constant 0 : index
    %115 = vector.load %arg19[%c0_48, %c0_49, %c0_50] : memref<1x8x32xf32, #tpu.memory_space<vmem>>, vector<1x8x32xf32>
    %116 = vector.shape_cast %115 : vector<1x8x32xf32> to vector<8x32xf32>
    %117 = vector.shape_cast %114 : vector<8x32xf32> to vector<1x8x32xf32>
    tpu.vector_store %arg19[%c0_48, %c0_49, %c0_50], %117 {strides = array<i32>} : memref<1x8x32xf32, #tpu.memory_space<vmem>>, vector<1x8x32xf32>,
    return
  }
  func.func @transform_0(%arg0: i32, %arg1: i32) -> (i32, i32, i32) {
    %c0_i32 = arith.constant 0 : i32
    %c0_i32_0 = arith.constant 0 : i32
    %c0_i32_1 = arith.constant 0 : i32
    return %arg0, %c0_i32, %c0_i32_0 : i32, i32, i32
  }
  func.func @transform_1(%arg0: i32, %arg1: i32) -> (i32, i32) {
    %c0_i32 = arith.constant 0 : i32
    %c0_i32_0 = arith.constant 0 : i32
    %c0_i32_1 = arith.constant 0 : i32
    return %c0_i32, %c0_i32_0 : i32, i32
  }
  func.func @transform_2(%arg0: i32, %arg1: i32) -> (i32, i32) {
    %c0_i32 = arith.constant 0 : i32
    %c0_i32_0 = arith.constant 0 : i32
    %c0_i32_1 = arith.constant 0 : i32
    return %c0_i32, %c0_i32_0 : i32, i32
  }
  func.func @transform_3(%arg0: i32, %arg1: i32) -> (i32, i32) {
    %c0_i32 = arith.constant 0 : i32
    %c0_i32_0 = arith.constant 0 : i32
    %c0_i32_1 = arith.constant 0 : i32
    return %c0_i32, %c0_i32_0 : i32, i32
  }
  func.func @transform_4(%arg0: i32, %arg1: i32) -> (i32, i32) {
    %c0_i32 = arith.constant 0 : i32
    %c0_i32_0 = arith.constant 0 : i32
    %c0_i32_1 = arith.constant 0 : i32
    return %c0_i32, %c0_i32_0 : i32, i32
  }
  func.func @transform_5(%arg0: i32, %arg1: i32) -> (i32, i32) {
    %c0_i32 = arith.constant 0 : i32
    %c0_i32_0 = arith.constant 0 : i32
    %c0_i32_1 = arith.constant 0 : i32
    return %c0_i32, %c0_i32_0 : i32, i32
  }
  func.func @transform_6(%arg0: i32, %arg1: i32) -> (i32, i32) {
    %c0_i32 = arith.constant 0 : i32
    %c0_i32_0 = arith.constant 0 : i32
    %c0_i32_1 = arith.constant 0 : i32
    return %c0_i32, %c0_i32_0 : i32, i32
  }
  func.func @transform_7(%arg0: i32, %arg1: i32) -> (i32, i32) {
    %c0_i32 = arith.constant 0 : i32
    %c0_i32_0 = arith.constant 0 : i32
    %c0_i32_1 = arith.constant 0 : i32
    return %c0_i32, %c0_i32_0 : i32, i32
  }
  func.func @transform_8(%arg0: i32, %arg1: i32) -> (i32, i32) {
    %c0_i32 = arith.constant 0 : i32
    %c0_i32_0 = arith.constant 0 : i32
    %c0_i32_1 = arith.constant 0 : i32
    return %c0_i32, %c0_i32_0 : i32, i32
  }
  func.func @transform_9(%arg0: i32, %arg1: i32) -> (i32, i32) {
    %c0_i32 = arith.constant 0 : i32
    %c0_i32_0 = arith.constant 0 : i32
    %c0_i32_1 = arith.constant 0 : i32
    return %c0_i32, %c0_i32_0 : i32, i32
  }
  func.func @transform_10(%arg0: i32, %arg1: i32) -> (i32, i32) {
    %c0_i32 = arith.constant 0 : i32
    %c0_i32_0 = arith.constant 0 : i32
    %c0_i32_1 = arith.constant 0 : i32
    return %c0_i32, %c0_i32_0 : i32, i32
  }
  func.func @transform_11(%arg0: i32, %arg1: i32) -> (i32, i32) {
    %c0_i32 = arith.constant 0 : i32
    %c0_i32_0 = arith.constant 0 : i32
    %c0_i32_1 = arith.constant 0 : i32
    return %c0_i32, %c0_i32_0 : i32, i32
  }
  func.func @transform_12(%arg0: i32, %arg1: i32) -> (i32, i32) {
    %c0_i32 = arith.constant 0 : i32
    %c0_i32_0 = arith.constant 0 : i32
    %c0_i32_1 = arith.constant 0 : i32
    return %c0_i32, %c0_i32_0 : i32, i32
  }
  func.func @transform_13(%arg0: i32, %arg1: i32) -> (i32, i32) {
    %c0_i32 = arith.constant 0 : i32
    %c0_i32_0 = arith.constant 0 : i32
    %c0_i32_1 = arith.constant 0 : i32
    return %c0_i32, %c0_i32_0 : i32, i32
  }
  func.func @transform_14(%arg0: i32, %arg1: i32) -> (i32, i32) {
    %c0_i32 = arith.constant 0 : i32
    %c0_i32_0 = arith.constant 0 : i32
    %c0_i32_1 = arith.constant 0 : i32
    return %c0_i32, %c0_i32_0 : i32, i32
  }
  func.func @transform_15(%arg0: i32, %arg1: i32) -> (i32, i32) {
    %c0_i32 = arith.constant 0 : i32
    %c0_i32_0 = arith.constant 0 : i32
    %c0_i32_1 = arith.constant 0 : i32
    return %c0_i32, %c0_i32_0 : i32, i32
  }
  func.func @transform_16(%arg0: i32, %arg1: i32) -> (i32, i32) {
    %c0_i32 = arith.constant 0 : i32
    %c0_i32_0 = arith.constant 0 : i32
    %c0_i32_1 = arith.constant 0 : i32
    return %c0_i32, %c0_i32_0 : i32, i32
  }
  func.func @transform_17(%arg0: i32, %arg1: i32) -> (i32, i32, i32) {
    %c0_i32 = arith.constant 0 : i32
    %c0_i32_0 = arith.constant 0 : i32
    return %arg0, %arg1, %c0_i32 : i32, i32, i32
  }
}

module attributes {stable_mosaic.version = 11 : i64} {
  func.func @transformer_layer_kernel(%arg0: i32, %arg1: i32, %arg2: memref<1x8x32xf32, #tpu.memory_space<vmem>>, %arg3: memref<1x32xf32, #tpu.memory_space<vmem>>, %arg4: memref<1x32xf32, #tpu.memory_space<vmem>>, %arg5: memref<32x32xf32, #tpu.memory_space<vmem>>, %arg6: memref<1x32xf32, #tpu.memory_space<vmem>>, %arg7: memref<32x32xf32, #tpu.memory_space<vmem>>, %arg8: memref<1x32xf32, #tpu.memory_space<vmem>>, %arg9: memref<32x32xf32, #tpu.memory_space<vmem>>, %arg10: memref<1x32xf32, #tpu.memory_space<vmem>>, %arg11: memref<32x32xf32, #tpu.memory_space<vmem>>, %arg12: memref<1x32xf32, #tpu.memory_space<vmem>>, %arg13: memref<1x32xf32, #tpu.memory_space<vmem>>, %arg14: memref<1x32xf32, #tpu.memory_space<vmem>>, %arg15: memref<32x64xf32, #tpu.memory_space<vmem>>, %arg16: memref<1x64xf32, #tpu.memory_space<vmem>>, %arg17: memref<64x32xf32, #tpu.memory_space<vmem>>, %arg18: memref<1x32xf32, #tpu.memory_space<vmem>>, %arg19: memref<1x8x32xf32, #tpu.memory_space<vmem>>, %arg20: memref<8x32xf32, #tpu.memory_space<vmem>>, %arg21: memref<8x32xf32, #tpu.memory_space<vmem>>) attributes {dimension_semantics = [#tpu.dimension_semantics<parallel>, #tpu.dimension_semantics<arbitrary>], iteration_bounds = array<i64: 2, 1>, scalar_prefetch = 0 : i64, scratch_operands = 2 : i64, tpu.core_type = #tpu.core_type<tc>, window_params = [{transform_indices = @transform_0, window_bounds = array<i64: 1, 8, 32>}, {pipeline_mode = #tpu.pipeline_mode<synchronous>, transform_indices = @transform_1, window_bounds = array<i64: 1, 32>}, {pipeline_mode = #tpu.pipeline_mode<synchronous>, transform_indices = @transform_2, window_bounds = array<i64: 1, 32>}, {pipeline_mode = #tpu.pipeline_mode<synchronous>, transform_indices = @transform_3, window_bounds = array<i64: 32, 32>}, {pipeline_mode = #tpu.pipeline_mode<synchronous>, transform_indices = @transform_4, window_bounds = array<i64: 1, 32>}, {pipeline_mode = #tpu.pipeline_mode<synchronous>, transform_indices = @transform_5, window_bounds = array<i64: 32, 32>}, {pipeline_mode = #tpu.pipeline_mode<synchronous>, transform_indices = @transform_6, window_bounds = array<i64: 1, 32>}, {pipeline_mode = #tpu.pipeline_mode<synchronous>, transform_indices = @transform_7, window_bounds = array<i64: 32, 32>}, {pipeline_mode = #tpu.pipeline_mode<synchronous>, transform_indices = @transform_8, window_bounds = array<i64: 1, 32>}, {pipeline_mode = #tpu.pipeline_mode<synchronous>, transform_indices = @transform_9, window_bounds = array<i64: 32, 32>}, {pipeline_mode = #tpu.pipeline_mode<synchronous>, transform_indices = @transform_10, window_bounds = array<i64: 1, 32>}, {pipeline_mode = #tpu.pipeline_mode<synchronous>, transform_indices = @transform_11, window_bounds = array<i64: 1, 32>}, {pipeline_mode = #tpu.pipeline_mode<synchronous>, transform_indices = @transform_12, window_bounds = array<i64: 1, 32>}, {pipeline_mode = #tpu.pipeline_mode<synchronous>, transform_indices = @transform_13, window_bounds = array<i64: 32, 64>}, {pipeline_mode = #tpu.pipeline_mode<synchronous>, transform_indices = @transform_14, window_bounds = array<i64: 1, 64>}, {pipeline_mode = #tpu.pipeline_mode<synchronous>, transform_indices = @transform_15, window_bounds = array<i64: 64, 32>}, {pipeline_mode = #tpu.pipeline_mode<synchronous>, transform_indices = @transform_16, window_bounds = array<i64: 1, 32>}, {transform_indices = @transform_17, window_bounds = array<i64: 1, 8, 32>}]} {
    %c0_i32 = arith.constant 0 : i32
    %0 = arith.cmpi eq, %arg1, %c0_i32 : i32
    %1 = arith.extui %0 : i1 to i32
    %c0_i32_0 = arith.constant 0 : i32
    %2 = arith.cmpi ne, %1, %c0_i32_0 : i32
    scf.if %2 {
      %c0_51 = arith.constant 0 : index
      %c0_52 = arith.constant 0 : index
      %c0_53 = arith.constant 0 : index
      %118 = vector.load %arg2[%c0_51, %c0_52, %c0_53] : memref<1x8x32xf32, #tpu.memory_space<vmem>>, vector<1x8x32xf32>
      %119 = vector.shape_cast %118 : vector<1x8x32xf32> to vector<8x32xf32>
      %c0_54 = arith.constant 0 : index
      %c0_55 = arith.constant 0 : index
      %120 = vector.load %arg3[%c0_54, %c0_55] : memref<1x32xf32, #tpu.memory_space<vmem>>, vector<1x32xf32>
      %121 = vector.shape_cast %120 : vector<1x32xf32> to vector<32xf32>
      %c0_56 = arith.constant 0 : index
      %c0_57 = arith.constant 0 : index
      %122 = vector.load %arg4[%c0_56, %c0_57] : memref<1x32xf32, #tpu.memory_space<vmem>>, vector<1x32xf32>
      %123 = vector.shape_cast %122 : vector<1x32xf32> to vector<32xf32>
      %cst_58 = arith.constant dense<0.000000e+00> : vector<8xf32>
      %124 = vector.multi_reduction <add>, %119, %cst_58 [1] : vector<8x32xf32> to vector<8xf32>
      %125 = vector.shape_cast %124 : vector<8xf32> to vector<8x1xf32>
      %cst_59 = arith.constant 3.200000e+01 : f32
      %126 = vector.broadcast %cst_59 : f32 to vector<8x1xf32>
      %127 = arith.divf %125, %126 : vector<8x1xf32>
      %128 = vector.broadcast %127 : vector<8x1xf32> to vector<8x32xf32>
      %129 = arith.subf %119, %128 : vector<8x32xf32>
      %130 = arith.mulf %129, %129 : vector<8x32xf32>
      %cst_60 = arith.constant dense<0.000000e+00> : vector<8xf32>
      %131 = vector.multi_reduction <add>, %130, %cst_60 [1] : vector<8x32xf32> to vector<8xf32>
      %132 = vector.shape_cast %131 : vector<8xf32> to vector<8x1xf32>
      %cst_61 = arith.constant 3.200000e+01 : f32
      %133 = vector.broadcast %cst_61 : f32 to vector<8x1xf32>
      %134 = arith.divf %132, %133 : vector<8x1xf32>
      %135 = vector.broadcast %127 : vector<8x1xf32> to vector<8x32xf32>
      %136 = arith.subf %119, %135 : vector<8x32xf32>
      %cst_62 = arith.constant 9.99999997E-7 : f32
      %137 = vector.broadcast %cst_62 : f32 to vector<8x1xf32>
      %138 = arith.addf %134, %137 : vector<8x1xf32>
      %139 = math.rsqrt %138 : vector<8x1xf32>
      %140 = vector.broadcast %139 : vector<8x1xf32> to vector<8x32xf32>
      %141 = arith.mulf %136, %140 : vector<8x32xf32>
      %142 = vector.shape_cast %121 : vector<32xf32> to vector<1x32xf32>
      %143 = vector.broadcast %142 : vector<1x32xf32> to vector<8x32xf32>
      %144 = arith.mulf %141, %143 : vector<8x32xf32>
      %145 = vector.shape_cast %123 : vector<32xf32> to vector<1x32xf32>
      %146 = vector.broadcast %145 : vector<1x32xf32> to vector<8x32xf32>
      %147 = arith.addf %144, %146 : vector<8x32xf32>
      %c0_63 = arith.constant 0 : index
      %c0_64 = arith.constant 0 : index
      %148 = vector.load %arg7[%c0_63, %c0_64] : memref<32x32xf32, #tpu.memory_space<vmem>>, vector<32x32xf32>
      %cst_65 = arith.constant dense<0.000000e+00> : vector<8x32xf32>
      %149 = tpu.matmul %147, %148, %cst_65 {dimension_numbers = #tpu.dot_dimension_numbers<[1], [0], [0], [1], [0, 0, 1, 1], [], []>} : vector<8x32xf32>, vector<32x32xf32>, vector<8x32xf32> -> vector<8x32xf32>
      %c0_66 = arith.constant 0 : index
      %c0_67 = arith.constant 0 : index
      %150 = vector.load %arg8[%c0_66, %c0_67] : memref<1x32xf32, #tpu.memory_space<vmem>>, vector<1x32xf32>
      %151 = vector.shape_cast %150 : vector<1x32xf32> to vector<32xf32>
      %152 = vector.shape_cast %151 : vector<32xf32> to vector<1x32xf32>
      %153 = vector.broadcast %152 : vector<1x32xf32> to vector<8x32xf32>
      %154 = arith.addf %149, %153 : vector<8x32xf32>
      %c0_68 = arith.constant 0 : index
      %c0_69 = arith.constant 0 : index
      %155 = vector.load %arg9[%c0_68, %c0_69] : memref<32x32xf32, #tpu.memory_space<vmem>>, vector<32x32xf32>
      %cst_70 = arith.constant dense<0.000000e+00> : vector<8x32xf32>
      %156 = tpu.matmul %147, %155, %cst_70 {dimension_numbers = #tpu.dot_dimension_numbers<[1], [0], [0], [1], [0, 0, 1, 1], [], []>} : vector<8x32xf32>, vector<32x32xf32>, vector<8x32xf32> -> vector<8x32xf32>
      %c0_71 = arith.constant 0 : index
      %c0_72 = arith.constant 0 : index
      %157 = vector.load %arg10[%c0_71, %c0_72] : memref<1x32xf32, #tpu.memory_space<vmem>>, vector<1x32xf32>
      %158 = vector.shape_cast %157 : vector<1x32xf32> to vector<32xf32>
      %159 = vector.shape_cast %158 : vector<32xf32> to vector<1x32xf32>
      %160 = vector.broadcast %159 : vector<1x32xf32> to vector<8x32xf32>
      %161 = arith.addf %156, %160 : vector<8x32xf32>
      %c0_73 = arith.constant 0 : index
      %c0_74 = arith.constant 0 : index
      %162 = vector.load %arg20[%c0_73, %c0_74] : memref<8x32xf32, #tpu.memory_space<vmem>>, vector<8x32xf32>
      tpu.vector_store %arg20[%c0_73, %c0_74], %154 {strides = array<i32>} : memref<8x32xf32, #tpu.memory_space<vmem>>, vector<8x32xf32>,
      %c0_75 = arith.constant 0 : index
      %c0_76 = arith.constant 0 : index
      %163 = vector.load %arg21[%c0_75, %c0_76] : memref<8x32xf32, #tpu.memory_space<vmem>>, vector<8x32xf32>
      tpu.vector_store %arg21[%c0_75, %c0_76], %161 {strides = array<i32>} : memref<8x32xf32, #tpu.memory_space<vmem>>, vector<8x32xf32>,
    } else {
    }
    %c8_i32 = arith.constant 8 : i32
    %3 = arith.muli %arg1, %c8_i32 : i32
    %4 = tpu.assume_multiple %3, 8 : i32
    %c0 = arith.constant 0 : index
    %5 = arith.index_cast %4 : i32 to index
    %c0_1 = arith.constant 0 : index
    %6 = vector.load %arg2[%c0, %5, %c0_1] : memref<1x8x32xf32, #tpu.memory_space<vmem>>, vector<1x8x32xf32>
    %7 = vector.shape_cast %6 : vector<1x8x32xf32> to vector<8x32xf32>
    %c0_2 = arith.constant 0 : index
    %c0_3 = arith.constant 0 : index
    %8 = vector.load %arg3[%c0_2, %c0_3] : memref<1x32xf32, #tpu.memory_space<vmem>>, vector<1x32xf32>
    %9 = vector.shape_cast %8 : vector<1x32xf32> to vector<32xf32>
    %c0_4 = arith.constant 0 : index
    %c0_5 = arith.constant 0 : index
    %10 = vector.load %arg4[%c0_4, %c0_5] : memref<1x32xf32, #tpu.memory_space<vmem>>, vector<1x32xf32>
    %11 = vector.shape_cast %10 : vector<1x32xf32> to vector<32xf32>
    %cst = arith.constant dense<0.000000e+00> : vector<8xf32>
    %12 = vector.multi_reduction <add>, %7, %cst [1] : vector<8x32xf32> to vector<8xf32>
    %13 = vector.shape_cast %12 : vector<8xf32> to vector<8x1xf32>
    %cst_6 = arith.constant 3.200000e+01 : f32
    %14 = vector.broadcast %cst_6 : f32 to vector<8x1xf32>
    %15 = arith.divf %13, %14 : vector<8x1xf32>
    %16 = vector.broadcast %15 : vector<8x1xf32> to vector<8x32xf32>
    %17 = arith.subf %7, %16 : vector<8x32xf32>
    %18 = arith.mulf %17, %17 : vector<8x32xf32>
    %cst_7 = arith.constant dense<0.000000e+00> : vector<8xf32>
    %19 = vector.multi_reduction <add>, %18, %cst_7 [1] : vector<8x32xf32> to vector<8xf32>
    %20 = vector.shape_cast %19 : vector<8xf32> to vector<8x1xf32>
    %cst_8 = arith.constant 3.200000e+01 : f32
    %21 = vector.broadcast %cst_8 : f32 to vector<8x1xf32>
    %22 = arith.divf %20, %21 : vector<8x1xf32>
    %23 = vector.broadcast %15 : vector<8x1xf32> to vector<8x32xf32>
    %24 = arith.subf %7, %23 : vector<8x32xf32>
    %cst_9 = arith.constant 9.99999997E-7 : f32
    %25 = vector.broadcast %cst_9 : f32 to vector<8x1xf32>
    %26 = arith.addf %22, %25 : vector<8x1xf32>
    %27 = math.rsqrt %26 : vector<8x1xf32>
    %28 = vector.broadcast %27 : vector<8x1xf32> to vector<8x32xf32>
    %29 = arith.mulf %24, %28 : vector<8x32xf32>
    %30 = vector.shape_cast %9 : vector<32xf32> to vector<1x32xf32>
    %31 = vector.broadcast %30 : vector<1x32xf32> to vector<8x32xf32>
    %32 = arith.mulf %29, %31 : vector<8x32xf32>
    %33 = vector.shape_cast %11 : vector<32xf32> to vector<1x32xf32>
    %34 = vector.broadcast %33 : vector<1x32xf32> to vector<8x32xf32>
    %35 = arith.addf %32, %34 : vector<8x32xf32>
    %c0_10 = arith.constant 0 : index
    %c0_11 = arith.constant 0 : index
    %36 = vector.load %arg5[%c0_10, %c0_11] : memref<32x32xf32, #tpu.memory_space<vmem>>, vector<32x32xf32>
    %cst_12 = arith.constant dense<0.000000e+00> : vector<8x32xf32>
    %37 = tpu.matmul %35, %36, %cst_12 {dimension_numbers = #tpu.dot_dimension_numbers<[1], [0], [0], [1], [0, 0, 1, 1], [], []>} : vector<8x32xf32>, vector<32x32xf32>, vector<8x32xf32> -> vector<8x32xf32>
    %c0_13 = arith.constant 0 : index
    %c0_14 = arith.constant 0 : index
    %38 = vector.load %arg6[%c0_13, %c0_14] : memref<1x32xf32, #tpu.memory_space<vmem>>, vector<1x32xf32>
    %39 = vector.shape_cast %38 : vector<1x32xf32> to vector<32xf32>
    %40 = vector.shape_cast %39 : vector<32xf32> to vector<1x32xf32>
    %41 = vector.broadcast %40 : vector<1x32xf32> to vector<8x32xf32>
    %42 = arith.addf %37, %41 : vector<8x32xf32>
    %43 = vector.shape_cast %42 : vector<8x32xf32> to vector<8x4x8xf32>
    %c0_15 = arith.constant 0 : index
    %c0_16 = arith.constant 0 : index
    %44 = vector.load %arg20[%c0_15, %c0_16] : memref<8x32xf32, #tpu.memory_space<vmem>>, vector<8x32xf32>
    %45 = vector.shape_cast %44 : vector<8x32xf32> to vector<8x4x8xf32>
    %c0_17 = arith.constant 0 : index
    %c0_18 = arith.constant 0 : index
    %46 = vector.load %arg21[%c0_17, %c0_18] : memref<8x32xf32, #tpu.memory_space<vmem>>, vector<8x32xf32>
    %47 = vector.shape_cast %46 : vector<8x32xf32> to vector<8x4x8xf32>
    "tpu.trace_start"() <{level = 10 : i32, message = "qhd,khd->hqk"}> : () -> ()
    %cst_19 = arith.constant dense<0.000000e+00> : vector<4x8x8xf32>
    %48 = tpu.matmul %43, %45, %cst_19 {dimension_numbers = #tpu.dot_dimension_numbers<[2], [2], [0], [0], [0, 1, 0, 0, 1, 0], [1], [1]>} : vector<8x4x8xf32>, vector<8x4x8xf32>, vector<4x8x8xf32> -> vector<4x8x8xf32>
    "tpu.trace_stop"() : () -> ()
    %cst_20 = arith.constant dense<0xFF800000> : vector<4x8xf32>
    %49 = vector.multi_reduction <maximumf>, %48, %cst_20 [2] : vector<4x8x8xf32> to vector<4x8xf32>
    %50 = vector.shape_cast %49 : vector<4x8xf32> to vector<4x8x1xf32>
    %51 = vector.broadcast %50 : vector<4x8x1xf32> to vector<4x8x8xf32>
    %52 = arith.subf %48, %51 : vector<4x8x8xf32>
    %53 = math.exp %52 : vector<4x8x8xf32>
    %cst_21 = arith.constant dense<0.000000e+00> : vector<4x8xf32>
    %54 = vector.multi_reduction <add>, %53, %cst_21 [2] : vector<4x8x8xf32> to vector<4x8xf32>
    %55 = vector.shape_cast %54 : vector<4x8xf32> to vector<4x8x1xf32>
    %56 = tpu.reciprocal %55 {approx = true} : vector<4x8x1xf32> -> vector<4x8x1xf32>
    %57 = vector.broadcast %56 : vector<4x8x1xf32> to vector<4x8x8xf32>
    %58 = arith.mulf %53, %57 : vector<4x8x8xf32>
    "tpu.trace_start"() <{level = 10 : i32, message = "hqk,khd->qhd"}> : () -> ()
    %cst_22 = arith.constant dense<0.000000e+00> : vector<4x8x8xf32>
    %59 = tpu.matmul %47, %58, %cst_22 {dimension_numbers = #tpu.dot_dimension_numbers<[0], [2], [2], [1], [0, 1, 0, 2, 1, 1], [1], [0]>} : vector<8x4x8xf32>, vector<4x8x8xf32>, vector<4x8x8xf32> -> vector<4x8x8xf32>
    %60 = tpu.transpose %59, [2, 0, 1] : vector<4x8x8xf32> -> vector<8x4x8xf32>
    "tpu.trace_stop"() : () -> ()
    %61 = vector.shape_cast %60 : vector<8x4x8xf32> to vector<8x32xf32>
    %c0_23 = arith.constant 0 : index
    %c0_24 = arith.constant 0 : index
    %62 = vector.load %arg11[%c0_23, %c0_24] : memref<32x32xf32, #tpu.memory_space<vmem>>, vector<32x32xf32>
    %cst_25 = arith.constant dense<0.000000e+00> : vector<8x32xf32>
    %63 = tpu.matmul %61, %62, %cst_25 {dimension_numbers = #tpu.dot_dimension_numbers<[1], [0], [0], [1], [0, 0, 1, 1], [], []>} : vector<8x32xf32>, vector<32x32xf32>, vector<8x32xf32> -> vector<8x32xf32>
    %c0_26 = arith.constant 0 : index
    %c0_27 = arith.constant 0 : index
    %64 = vector.load %arg12[%c0_26, %c0_27] : memref<1x32xf32, #tpu.memory_space<vmem>>, vector<1x32xf32>
    %65 = vector.shape_cast %64 : vector<1x32xf32> to vector<32xf32>
    %66 = vector.shape_cast %65 : vector<32xf32> to vector<1x32xf32>
    %67 = vector.broadcast %66 : vector<1x32xf32> to vector<8x32xf32>
    %68 = arith.addf %63, %67 : vector<8x32xf32>
    %69 = arith.addf %7, %68 : vector<8x32xf32>
    %c0_28 = arith.constant 0 : index
    %c0_29 = arith.constant 0 : index
    %70 = vector.load %arg13[%c0_28, %c0_29] : memref<1x32xf32, #tpu.memory_space<vmem>>, vector<1x32xf32>
    %71 = vector.shape_cast %70 : vector<1x32xf32> to vector<32xf32>
    %c0_30 = arith.constant 0 : index
    %c0_31 = arith.constant 0 : index
    %72 = vector.load %arg14[%c0_30, %c0_31] : memref<1x32xf32, #tpu.memory_space<vmem>>, vector<1x32xf32>
    %73 = vector.shape_cast %72 : vector<1x32xf32> to vector<32xf32>
    %cst_32 = arith.constant dense<0.000000e+00> : vector<8xf32>
    %74 = vector.multi_reduction <add>, %69, %cst_32 [1] : vector<8x32xf32> to vector<8xf32>
    %75 = vector.shape_cast %74 : vector<8xf32> to vector<8x1xf32>
    %cst_33 = arith.constant 3.200000e+01 : f32
    %76 = vector.broadcast %cst_33 : f32 to vector<8x1xf32>
    %77 = arith.divf %75, %76 : vector<8x1xf32>
    %78 = vector.broadcast %77 : vector<8x1xf32> to vector<8x32xf32>
    %79 = arith.subf %69, %78 : vector<8x32xf32>
    %80 = arith.mulf %79, %79 : vector<8x32xf32>
    %cst_34 = arith.constant dense<0.000000e+00> : vector<8xf32>
    %81 = vector.multi_reduction <add>, %80, %cst_34 [1] : vector<8x32xf32> to vector<8xf32>
    %82 = vector.shape_cast %81 : vector<8xf32> to vector<8x1xf32>
    %cst_35 = arith.constant 3.200000e+01 : f32
    %83 = vector.broadcast %cst_35 : f32 to vector<8x1xf32>
    %84 = arith.divf %82, %83 : vector<8x1xf32>
    %85 = vector.broadcast %77 : vector<8x1xf32> to vector<8x32xf32>
    %86 = arith.subf %69, %85 : vector<8x32xf32>
    %cst_36 = arith.constant 9.99999997E-7 : f32
    %87 = vector.broadcast %cst_36 : f32 to vector<8x1xf32>
    %88 = arith.addf %84, %87 : vector<8x1xf32>
    %89 = math.rsqrt %88 : vector<8x1xf32>
    %90 = vector.broadcast %89 : vector<8x1xf32> to vector<8x32xf32>
    %91 = arith.mulf %86, %90 : vector<8x32xf32>
    %92 = vector.shape_cast %71 : vector<32xf32> to vector<1x32xf32>
    %93 = vector.broadcast %92 : vector<1x32xf32> to vector<8x32xf32>
    %94 = arith.mulf %91, %93 : vector<8x32xf32>
    %95 = vector.shape_cast %73 : vector<32xf32> to vector<1x32xf32>
    %96 = vector.broadcast %95 : vector<1x32xf32> to vector<8x32xf32>
    %97 = arith.addf %94, %96 : vector<8x32xf32>
    %c0_37 = arith.constant 0 : index
    %c0_38 = arith.constant 0 : index
    %98 = vector.load %arg15[%c0_37, %c0_38] : memref<32x64xf32, #tpu.memory_space<vmem>>, vector<32x64xf32>
    %cst_39 = arith.constant dense<0.000000e+00> : vector<8x64xf32>
    %99 = tpu.matmul %97, %98, %cst_39 {dimension_numbers = #tpu.dot_dimension_numbers<[1], [0], [0], [1], [0, 0, 1, 1], [], []>} : vector<8x32xf32>, vector<32x64xf32>, vector<8x64xf32> -> vector<8x64xf32>
    %c0_40 = arith.constant 0 : index
    %c0_41 = arith.constant 0 : index
    %100 = vector.load %arg16[%c0_40, %c0_41] : memref<1x64xf32, #tpu.memory_space<vmem>>, vector<1x64xf32>
    %101 = vector.shape_cast %100 : vector<1x64xf32> to vector<64xf32>
    %102 = vector.shape_cast %101 : vector<64xf32> to vector<1x64xf32>
    %103 = vector.broadcast %102 : vector<1x64xf32> to vector<8x64xf32>
    %104 = arith.addf %99, %103 : vector<8x64xf32>
    %cst_42 = arith.constant 0.000000e+00 : f32
    %105 = vector.broadcast %cst_42 : f32 to vector<8x64xf32>
    %106 = arith.maximumf %104, %105 : vector<8x64xf32>
    %c0_43 = arith.constant 0 : index
    %c0_44 = arith.constant 0 : index
    %107 = vector.load %arg17[%c0_43, %c0_44] : memref<64x32xf32, #tpu.memory_space<vmem>>, vector<64x32xf32>
    %cst_45 = arith.constant dense<0.000000e+00> : vector<8x32xf32>
    %108 = tpu.matmul %106, %107, %cst_45 {dimension_numbers = #tpu.dot_dimension_numbers<[1], [0], [0], [1], [0, 0, 1, 1], [], []>} : vector<8x64xf32>, vector<64x32xf32>, vector<8x32xf32> -> vector<8x32xf32>
    %c0_46 = arith.constant 0 : index
    %c0_47 = arith.constant 0 : index
    %109 = vector.load %arg18[%c0_46, %c0_47] : memref<1x32xf32, #tpu.memory_space<vmem>>, vector<1x32xf32>
    %110 = vector.shape_cast %109 : vector<1x32xf32> to vector<32xf32>
    %111 = vector.shape_cast %110 : vector<32xf32> to vector<1x32xf32>
    %112 = vector.broadcast %111 : vector<1x32xf32> to vector<8x32xf32>
    %113 = arith.addf %108, %112 : vector<8x32xf32>
    %114 = arith.addf %69, %113 : vector<8x32xf32>
    %c0_48 = arith.constant 0 : index
    %c0_49 = arith.constant 0 : index
    %c0_50 = arith.constant 0 : index
    %115 = vector.load %arg19[%c0_48, %c0_49, %c0_50] : memref<1x8x32xf32, #tpu.memory_space<vmem>>, vector<1x8x32xf32>
    %116 = vector.shape_cast %115 : vector<1x8x32xf32> to vector<8x32xf32>
    %117 = vector.shape_cast %114 : vector<8x32xf32> to vector<1x8x32xf32>
    tpu.vector_store %arg19[%c0_48, %c0_49, %c0_50], %117 {strides = array<i32>} : memref<1x8x32xf32, #tpu.memory_space<vmem>>, vector<1x8x32xf32>,
    return
  }
  func.func @transform_0(%arg0: i32, %arg1: i32) -> (i32, i32, i32) {
    %c0_i32 = arith.constant 0 : i32
    %c0_i32_0 = arith.constant 0 : i32
    %c0_i32_1 = arith.constant 0 : i32
    return %arg0, %c0_i32, %c0_i32_0 : i32, i32, i32
  }
  func.func @transform_1(%arg0: i32, %arg1: i32) -> (i32, i32) {
    %c0_i32 = arith.constant 0 : i32
    %c0_i32_0 = arith.constant 0 : i32
    %c0_i32_1 = arith.constant 0 : i32
    return %c0_i32, %c0_i32_0 : i32, i32
  }
  func.func @transform_2(%arg0: i32, %arg1: i32) -> (i32, i32) {
    %c0_i32 = arith.constant 0 : i32
    %c0_i32_0 = arith.constant 0 : i32
    %c0_i32_1 = arith.constant 0 : i32
    return %c0_i32, %c0_i32_0 : i32, i32
  }
  func.func @transform_3(%arg0: i32, %arg1: i32) -> (i32, i32) {
    %c0_i32 = arith.constant 0 : i32
    %c0_i32_0 = arith.constant 0 : i32
    %c0_i32_1 = arith.constant 0 : i32
    return %c0_i32, %c0_i32_0 : i32, i32
  }
  func.func @transform_4(%arg0: i32, %arg1: i32) -> (i32, i32) {
    %c0_i32 = arith.constant 0 : i32
    %c0_i32_0 = arith.constant 0 : i32
    %c0_i32_1 = arith.constant 0 : i32
    return %c0_i32, %c0_i32_0 : i32, i32
  }
  func.func @transform_5(%arg0: i32, %arg1: i32) -> (i32, i32) {
    %c0_i32 = arith.constant 0 : i32
    %c0_i32_0 = arith.constant 0 : i32
    %c0_i32_1 = arith.constant 0 : i32
    return %c0_i32, %c0_i32_0 : i32, i32
  }
  func.func @transform_6(%arg0: i32, %arg1: i32) -> (i32, i32) {
    %c0_i32 = arith.constant 0 : i32
    %c0_i32_0 = arith.constant 0 : i32
    %c0_i32_1 = arith.constant 0 : i32
    return %c0_i32, %c0_i32_0 : i32, i32
  }
  func.func @transform_7(%arg0: i32, %arg1: i32) -> (i32, i32) {
    %c0_i32 = arith.constant 0 : i32
    %c0_i32_0 = arith.constant 0 : i32
    %c0_i32_1 = arith.constant 0 : i32
    return %c0_i32, %c0_i32_0 : i32, i32
  }
  func.func @transform_8(%arg0: i32, %arg1: i32) -> (i32, i32) {
    %c0_i32 = arith.constant 0 : i32
    %c0_i32_0 = arith.constant 0 : i32
    %c0_i32_1 = arith.constant 0 : i32
    return %c0_i32, %c0_i32_0 : i32, i32
  }
  func.func @transform_9(%arg0: i32, %arg1: i32) -> (i32, i32) {
    %c0_i32 = arith.constant 0 : i32
    %c0_i32_0 = arith.constant 0 : i32
    %c0_i32_1 = arith.constant 0 : i32
    return %c0_i32, %c0_i32_0 : i32, i32
  }
  func.func @transform_10(%arg0: i32, %arg1: i32) -> (i32, i32) {
    %c0_i32 = arith.constant 0 : i32
    %c0_i32_0 = arith.constant 0 : i32
    %c0_i32_1 = arith.constant 0 : i32
    return %c0_i32, %c0_i32_0 : i32, i32
  }
  func.func @transform_11(%arg0: i32, %arg1: i32) -> (i32, i32) {
    %c0_i32 = arith.constant 0 : i32
    %c0_i32_0 = arith.constant 0 : i32
    %c0_i32_1 = arith.constant 0 : i32
    return %c0_i32, %c0_i32_0 : i32, i32
  }
  func.func @transform_12(%arg0: i32, %arg1: i32) -> (i32, i32) {
    %c0_i32 = arith.constant 0 : i32
    %c0_i32_0 = arith.constant 0 : i32
    %c0_i32_1 = arith.constant 0 : i32
    return %c0_i32, %c0_i32_0 : i32, i32
  }
  func.func @transform_13(%arg0: i32, %arg1: i32) -> (i32, i32) {
    %c0_i32 = arith.constant 0 : i32
    %c0_i32_0 = arith.constant 0 : i32
    %c0_i32_1 = arith.constant 0 : i32
    return %c0_i32, %c0_i32_0 : i32, i32
  }
  func.func @transform_14(%arg0: i32, %arg1: i32) -> (i32, i32) {
    %c0_i32 = arith.constant 0 : i32
    %c0_i32_0 = arith.constant 0 : i32
    %c0_i32_1 = arith.constant 0 : i32
    return %c0_i32, %c0_i32_0 : i32, i32
  }
  func.func @transform_15(%arg0: i32, %arg1: i32) -> (i32, i32) {
    %c0_i32 = arith.constant 0 : i32
    %c0_i32_0 = arith.constant 0 : i32
    %c0_i32_1 = arith.constant 0 : i32
    return %c0_i32, %c0_i32_0 : i32, i32
  }
  func.func @transform_16(%arg0: i32, %arg1: i32) -> (i32, i32) {
    %c0_i32 = arith.constant 0 : i32
    %c0_i32_0 = arith.constant 0 : i32
    %c0_i32_1 = arith.constant 0 : i32
    return %c0_i32, %c0_i32_0 : i32, i32
  }
  func.func @transform_17(%arg0: i32, %arg1: i32) -> (i32, i32, i32) {
    %c0_i32 = arith.constant 0 : i32
    %c0_i32_0 = arith.constant 0 : i32
    return %arg0, %arg1, %c0_i32 : i32, i32, i32
  }
}

</mosaic_0001>

<llo_original>
// kernel: tpu_custom_call.1
$region0: #{tpu_custom_call.1}
  #allocation0 [shape = 'u32[]', space=smem, size = 0x4, offset = 0x4, fixed_abs, tag = 'smem constant byte address 0x4 - core index']
  #allocation1 [shape = 'u32[144,128]{1,0:T(1,128)}', space=vmem, size = 0x12000, scoped, tag = 'internal scratch']
  #allocation2 [shape = 'f32[8,32]{1,0:T(8,128)}', space=vmem, size = 0x1000, scoped, tag = 'scratch operand']
  #allocation3 [shape = 'f32[8,32]{1,0:T(8,128)}', space=vmem, size = 0x1000, scoped, tag = 'scratch operand']
  %s0 = inlined_call_operand.hbm [shape: f32[2,8,32], index: 0, kind: input, shape index: {}]
  %s1 = inlined_call_operand.vmem [shape: f32[1,32], index: 1, kind: input, shape index: {}]
  %s2 = inlined_call_operand.vmem [shape: f32[1,32], index: 2, kind: input, shape index: {}]
  %s3 = inlined_call_operand.vmem [shape: f32[32,32], index: 3, kind: input, shape index: {}]
  %s4 = inlined_call_operand.vmem [shape: f32[1,32], index: 4, kind: input, shape index: {}]
  %s5 = inlined_call_operand.vmem [shape: f32[32,32], index: 5, kind: input, shape index: {}]
  %s6 = inlined_call_operand.vmem [shape: f32[1,32], index: 6, kind: input, shape index: {}]
  %s7 = inlined_call_operand.vmem [shape: f32[32,32], index: 7, kind: input, shape index: {}]
  %s8 = inlined_call_operand.vmem [shape: f32[1,32], index: 8, kind: input, shape index: {}]
  %s9 = inlined_call_operand.hbm [shape: f32[32,32], index: 9, kind: input, shape index: {}]
  %s10 = inlined_call_operand.vmem [shape: f32[1,32], index: 10, kind: input, shape index: {}]
  %s11 = inlined_call_operand.vmem [shape: f32[1,32], index: 11, kind: input, shape index: {}]
  %s12 = inlined_call_operand.vmem [shape: f32[1,32], index: 12, kind: input, shape index: {}]
  %s13 = inlined_call_operand.hbm [shape: f32[32,64], index: 13, kind: input, shape index: {}]
  %s14 = inlined_call_operand.vmem [shape: f32[1,64], index: 14, kind: input, shape index: {}]
  %s15 = inlined_call_operand.vmem [shape: f32[64,32], index: 15, kind: input, shape index: {}]
  %s16 = inlined_call_operand.vmem [shape: f32[1,32], index: 16, kind: input, shape index: {}]
  %s17 = inlined_call_operand.hbm [shape: f32[2,8,32], index: 17, kind: output, shape index: {}]
  %s18 = sld [smem:[#allocation0]]
  $region117: #{tpu_custom_call.1} parent=0
    _
  %s20 = ssub.s32 1, %s18
  %s21 = scalar_select 0, %s20, %s18
  $region1: #{tpu_custom_call.1} parent=0
    #allocation4 [shape = 'u8[8192]{0}', space=vmem, size = 0x2000, scoped, tag = 'input window, operand 0']
    #allocation5 [shape = 's32[2]{0}', space=sflag, size = 0x8, scoped, tag = 'scoped memory for tpu_custom_call.1']
    #allocation6 [shape = 's32[2]{0}', space=sflag, size = 0x8, scoped, tag = 'scoped memory for tpu_custom_call.1']
    #allocation7 [shape = 'u8[16384]{0}', space=vmem, size = 0x4000, scoped, tag = 'input window, operand 9, single buffered']
    #allocation8 [shape = 's32[1]{0}', space=sflag, size = 0x4, scoped, tag = 'scoped memory for tpu_custom_call.1']
    #allocation9 [shape = 'u8[16384]{0}', space=vmem, size = 0x4000, scoped, tag = 'input window, operand 13, single buffered']
    #allocation10 [shape = 'u8[8192]{0}', space=vmem, size = 0x2000, scoped, tag = 'output window, operand 0']
    %22 = vsyncpa [#allocation5], 0
    %s23 = scalar_lea.sflag [#allocation5], 1
    %24 = vsyncpa %s23, 0
    %25 = vsyncpa [#allocation8], 0
    %26 = vsyncpa [#allocation6], 0
    %s27 = scalar_lea.sflag [#allocation6], 1
    %28 = vsyncpa %s27, 0
    loop: start=0, step=1, limit=4
    $region2: #{tpu_custom_call.1} parent=1 // loop_pre_header
      _
    $region3: #{tpu_custom_call.1} parent=1 // loop_header
      %s30 = sphi 0, %s34
      %p31 = scmp.ge.s32.totalorder %s30, 4
      %s37 = sphi 0, %s49
      %s38 = sphi 0, %s45
      %s39 = sphi 0, %s37
      %s40 = sphi 0, %s38
      %s41 = sphi 0, %s39
      %s42 = sphi 0, %s40
      %s52 = sphi 0, %s54
      %s55 = sphi 0, %s52
      %s56 = sphi 0, %s55
      %s72 = sphi 0, %s56
      %s76 = sphi 0, %s76
      %s78 = sphi 0, %s76
      %s79 = sphi 0, %s78
      %s93 = sphi 0, %s79
      %s97 = sphi 0, %s97
      %s99 = sphi 0, %s97
      %s100 = sphi 0, %s99
      %s114 = sphi 0, %s100
      %s118 = sphi 0, %s118
      %s120 = sphi 0, %s118
      %s121 = sphi 0, %s120
      %s135 = sphi 0, %s121
      %s139 = sphi 0, %s139
      %s141 = sphi 0, %s139
      %s142 = sphi 0, %s141
      %s156 = sphi 0, %s142
      %s160 = sphi 0, %s160
      %s162 = sphi 0, %s160
      %s163 = sphi 0, %s162
      %s177 = sphi 0, %s163
      %s181 = sphi 0, %s181
      %s183 = sphi 0, %s181
      %s184 = sphi 0, %s183
      %s198 = sphi 0, %s184
      %s202 = sphi 0, %s202
      %s204 = sphi 0, %s202
      %s205 = sphi 0, %s204
      %s219 = sphi 0, %s205
      %s223 = sphi 0, %s223
      %s225 = sphi 0, %s223
      %s226 = sphi 0, %s225
      %s240 = sphi 0, %s226
      %s244 = sphi 0, %s244
      %s246 = sphi 0, %s244
      %s247 = sphi 0, %s246
      %s261 = sphi 0, %s247
      %s265 = sphi 0, %s265
      %s267 = sphi 0, %s265
      %s268 = sphi 0, %s267
      %s282 = sphi 0, %s268
      %s286 = sphi 0, %s286
      %s288 = sphi 0, %s286
      %s289 = sphi 0, %s288
      %s303 = sphi 0, %s289
      %s307 = sphi 0, %s307
      %s309 = sphi 0, %s307
      %s310 = sphi 0, %s309
      %s324 = sphi 0, %s310
      %s328 = sphi 0, %s328
      %s330 = sphi 0, %s328
      %s331 = sphi 0, %s330
      %s345 = sphi 0, %s331
      %s349 = sphi 0, %s349
      %s351 = sphi 0, %s349
      %s352 = sphi 0, %s351
      %s366 = sphi 0, %s352
      %s370 = sphi 0, %s370
      %s372 = sphi 0, %s370
      %s373 = sphi 0, %s372
      %s387 = sphi 0, %s373
      %s391 = sphi 0, %s391
      %s393 = sphi 0, %s391
      %s394 = sphi 0, %s393
      %s408 = sphi 0, %s394
      %s416 = sphi 0, %s418
      %s419 = sphi 0, %s416
      %s420 = sphi 0, %s419
      %s436 = sphi 0, %s420
    $region4: #{tpu_custom_call.1} parent=1 // loop_header_branch
      %33 = sbr.rel (%p31) target = $region8
    $region5: #{tpu_custom_call.1} parent=1 // loop_body
      %s35 = ssub.s32 %s30, 1
      %s36 = ssub.s32 %s30, 2
      %s43 = sadd.s32 1, %s38
      %p44 = scmp.ge.s32.totalorder %s43, 1
      %s45 = scalar_select %p44, 0, %s43
      %s46 = sadd.s32 1, %s37
      %s47 = scalar_select %p44, %s46, %s37
      %p48 = scmp.ge.s32.totalorder %s47, 2
      %s49 = scalar_select %p48, 0, %s47
      %s50 = ssub.s32 %s37, %s49
      %p51 = scmp.eq.s32.totalorder %s50, 0
      %s53 = sadd.s32 %s52, 1
      %s54 = scalar_select %p51, %s52, %s53
      %p57 = pneg %p51
      %p58 = scmp.eq.s32.totalorder %s30, 1
      %p59 = por %p57, %p58
      %p60 = scmp.ne.s32.totalorder %s52, %s55
      %p61 = scmp.eq.s32.totalorder %s30, 0
      %p62 = por %p60, %p61
      %p63 = scmp.ne.s32.totalorder %s52, %s55
      %p64 = scmp.eq.s32.totalorder %s35, 1
      %p65 = por %p63, %p64
      %p66 = scmp.ne.s32.totalorder %s55, %s56
      %p67 = scmp.eq.s32.totalorder %s35, 0
      %p68 = por %p66, %p67
      %p69 = scmp.ne.s32.totalorder %s55, %s56
      %p70 = scmp.eq.s32.totalorder %s36, 1
      %p71 = por %p69, %p70
      %p73 = scmp.ne.s32.totalorder %s56, %s72
      %p74 = scmp.eq.s32.totalorder %s36, 0
      %p75 = por %p73, %p74
      %s77 = sadd.s32 %s76, 1
      %p80 = scmp.eq.s32.totalorder %s30, 1
      %p81 = scmp.ne.s32.totalorder %s76, %s78
      %p82 = scmp.eq.s32.totalorder %s30, 0
      %p83 = por %p81, %p82
      %p84 = scmp.ne.s32.totalorder %s76, %s78
      %p85 = scmp.eq.s32.totalorder %s35, 1
      %p86 = por %p84, %p85
      %p87 = scmp.ne.s32.totalorder %s78, %s79
      %p88 = scmp.eq.s32.totalorder %s35, 0
      %p89 = por %p87, %p88
      %p90 = scmp.ne.s32.totalorder %s78, %s79
      %p91 = scmp.eq.s32.totalorder %s36, 1
      %p92 = por %p90, %p91
      %p94 = scmp.ne.s32.totalorder %s79, %s93
      %p95 = scmp.eq.s32.totalorder %s36, 0
      %p96 = por %p94, %p95
      %s98 = sadd.s32 %s97, 1
      %p101 = scmp.eq.s32.totalorder %s30, 1
      %p102 = scmp.ne.s32.totalorder %s97, %s99
      %p103 = scmp.eq.s32.totalorder %s30, 0
      %p104 = por %p102, %p103
      %p105 = scmp.ne.s32.totalorder %s97, %s99
      %p106 = scmp.eq.s32.totalorder %s35, 1
      %p107 = por %p105, %p106
      %p108 = scmp.ne.s32.totalorder %s99, %s100
      %p109 = scmp.eq.s32.totalorder %s35, 0
      %p110 = por %p108, %p109
      %p111 = scmp.ne.s32.totalorder %s99, %s100
      %p112 = scmp.eq.s32.totalorder %s36, 1
      %p113 = por %p111, %p112
      %p115 = scmp.ne.s32.totalorder %s100, %s114
      %p116 = scmp.eq.s32.totalorder %s36, 0
      %p117 = por %p115, %p116
      %s119 = sadd.s32 %s118, 1
      %p122 = scmp.eq.s32.totalorder %s30, 1
      %p123 = scmp.ne.s32.totalorder %s118, %s120
      %p124 = scmp.eq.s32.totalorder %s30, 0
      %p125 = por %p123, %p124
      %p126 = scmp.ne.s32.totalorder %s118, %s120
      %p127 = scmp.eq.s32.totalorder %s35, 1
      %p128 = por %p126, %p127
      %p129 = scmp.ne.s32.totalorder %s120, %s121
      %p130 = scmp.eq.s32.totalorder %s35, 0
      %p131 = por %p129, %p130
      %p132 = scmp.ne.s32.totalorder %s120, %s121
      %p133 = scmp.eq.s32.totalorder %s36, 1
      %p134 = por %p132, %p133
      %p136 = scmp.ne.s32.totalorder %s121, %s135
      %p137 = scmp.eq.s32.totalorder %s36, 0
      %p138 = por %p136, %p137
      %s140 = sadd.s32 %s139, 1
      %p143 = scmp.eq.s32.totalorder %s30, 1
      %p144 = scmp.ne.s32.totalorder %s139, %s141
      %p145 = scmp.eq.s32.totalorder %s30, 0
      %p146 = por %p144, %p145
      %p147 = scmp.ne.s32.totalorder %s139, %s141
      %p148 = scmp.eq.s32.totalorder %s35, 1
      %p149 = por %p147, %p148
      %p150 = scmp.ne.s32.totalorder %s141, %s142
      %p151 = scmp.eq.s32.totalorder %s35, 0
      %p152 = por %p150, %p151
      %p153 = scmp.ne.s32.totalorder %s141, %s142
      %p154 = scmp.eq.s32.totalorder %s36, 1
      %p155 = por %p153, %p154
      %p157 = scmp.ne.s32.totalorder %s142, %s156
      %p158 = scmp.eq.s32.totalorder %s36, 0
      %p159 = por %p157, %p158
      %s161 = sadd.s32 %s160, 1
      %p164 = scmp.eq.s32.totalorder %s30, 1
      %p165 = scmp.ne.s32.totalorder %s160, %s162
      %p166 = scmp.eq.s32.totalorder %s30, 0
      %p167 = por %p165, %p166
      %p168 = scmp.ne.s32.totalorder %s160, %s162
      %p169 = scmp.eq.s32.totalorder %s35, 1
      %p170 = por %p168, %p169
      %p171 = scmp.ne.s32.totalorder %s162, %s163
      %p172 = scmp.eq.s32.totalorder %s35, 0
      %p173 = por %p171, %p172
      %p174 = scmp.ne.s32.totalorder %s162, %s163
      %p175 = scmp.eq.s32.totalorder %s36, 1
      %p176 = por %p174, %p175
      %p178 = scmp.ne.s32.totalorder %s163, %s177
      %p179 = scmp.eq.s32.totalorder %s36, 0
      %p180 = por %p178, %p179
      %s182 = sadd.s32 %s181, 1
      %p185 = scmp.eq.s32.totalorder %s30, 1
      %p186 = scmp.ne.s32.totalorder %s181, %s183
      %p187 = scmp.eq.s32.totalorder %s30, 0
      %p188 = por %p186, %p187
      %p189 = scmp.ne.s32.totalorder %s181, %s183
      %p190 = scmp.eq.s32.totalorder %s35, 1
      %p191 = por %p189, %p190
      %p192 = scmp.ne.s32.totalorder %s183, %s184
      %p193 = scmp.eq.s32.totalorder %s35, 0
      %p194 = por %p192, %p193
      %p195 = scmp.ne.s32.totalorder %s183, %s184
      %p196 = scmp.eq.s32.totalorder %s36, 1
      %p197 = por %p195, %p196
      %p199 = scmp.ne.s32.totalorder %s184, %s198
      %p200 = scmp.eq.s32.totalorder %s36, 0
      %p201 = por %p199, %p200
      %s203 = sadd.s32 %s202, 1
      %p206 = scmp.eq.s32.totalorder %s30, 1
      %p207 = scmp.ne.s32.totalorder %s202, %s204
      %p208 = scmp.eq.s32.totalorder %s30, 0
      %p209 = por %p207, %p208
      %p210 = scmp.ne.s32.totalorder %s202, %s204
      %p211 = scmp.eq.s32.totalorder %s35, 1
      %p212 = por %p210, %p211
      %p213 = scmp.ne.s32.totalorder %s204, %s205
      %p214 = scmp.eq.s32.totalorder %s35, 0
      %p215 = por %p213, %p214
      %p216 = scmp.ne.s32.totalorder %s204, %s205
      %p217 = scmp.eq.s32.totalorder %s36, 1
      %p218 = por %p216, %p217
      %p220 = scmp.ne.s32.totalorder %s205, %s219
      %p221 = scmp.eq.s32.totalorder %s36, 0
      %p222 = por %p220, %p221
      %s224 = sadd.s32 %s223, 1
      %p227 = scmp.eq.s32.totalorder %s30, 1
      %p228 = scmp.ne.s32.totalorder %s223, %s225
      %p229 = scmp.eq.s32.totalorder %s30, 0
      %p230 = por %p228, %p229
      %p231 = scmp.ne.s32.totalorder %s223, %s225
      %p232 = scmp.eq.s32.totalorder %s35, 1
      %p233 = por %p231, %p232
      %p234 = scmp.ne.s32.totalorder %s225, %s226
      %p235 = scmp.eq.s32.totalorder %s35, 0
      %p236 = por %p234, %p235
      %p237 = scmp.ne.s32.totalorder %s225, %s226
      %p238 = scmp.eq.s32.totalorder %s36, 1
      %p239 = por %p237, %p238
      %p241 = scmp.ne.s32.totalorder %s226, %s240
      %p242 = scmp.eq.s32.totalorder %s36, 0
      %p243 = por %p241, %p242
      %s245 = sadd.s32 %s244, 1
      %p248 = scmp.eq.s32.totalorder %s30, 1
      %p249 = scmp.ne.s32.totalorder %s244, %s246
      %p250 = scmp.eq.s32.totalorder %s30, 0
      %p251 = por %p249, %p250
      %p252 = scmp.ne.s32.totalorder %s244, %s246
      %p253 = scmp.eq.s32.totalorder %s35, 1
      %p254 = por %p252, %p253
      %p255 = scmp.ne.s32.totalorder %s246, %s247
      %p256 = scmp.eq.s32.totalorder %s35, 0
      %p257 = por %p255, %p256
      %p258 = scmp.ne.s32.totalorder %s246, %s247
      %p259 = scmp.eq.s32.totalorder %s36, 1
      %p260 = por %p258, %p259
      %p262 = scmp.ne.s32.totalorder %s247, %s261
      %p263 = scmp.eq.s32.totalorder %s36, 0
      %p264 = por %p262, %p263
      %s266 = sadd.s32 %s265, 1
      %p269 = scmp.eq.s32.totalorder %s30, 1
      %p270 = scmp.ne.s32.totalorder %s265, %s267
      %p271 = scmp.eq.s32.totalorder %s30, 0
      %p272 = por %p270, %p271
      %p273 = scmp.ne.s32.totalorder %s265, %s267
      %p274 = scmp.eq.s32.totalorder %s35, 1
      %p275 = por %p273, %p274
      %p276 = scmp.ne.s32.totalorder %s267, %s268
      %p277 = scmp.eq.s32.totalorder %s35, 0
      %p278 = por %p276, %p277
      %p279 = scmp.ne.s32.totalorder %s267, %s268
      %p280 = scmp.eq.s32.totalorder %s36, 1
      %p281 = por %p279, %p280
      %p283 = scmp.ne.s32.totalorder %s268, %s282
      %p284 = scmp.eq.s32.totalorder %s36, 0
      %p285 = por %p283, %p284
      %s287 = sadd.s32 %s286, 1
      %p290 = scmp.eq.s32.totalorder %s30, 1
      %p291 = scmp.ne.s32.totalorder %s286, %s288
      %p292 = scmp.eq.s32.totalorder %s30, 0
      %p293 = por %p291, %p292
      %p294 = scmp.ne.s32.totalorder %s286, %s288
      %p295 = scmp.eq.s32.totalorder %s35, 1
      %p296 = por %p294, %p295
      %p297 = scmp.ne.s32.totalorder %s288, %s289
      %p298 = scmp.eq.s32.totalorder %s35, 0
      %p299 = por %p297, %p298
      %p300 = scmp.ne.s32.totalorder %s288, %s289
      %p301 = scmp.eq.s32.totalorder %s36, 1
      %p302 = por %p300, %p301
      %p304 = scmp.ne.s32.totalorder %s289, %s303
      %p305 = scmp.eq.s32.totalorder %s36, 0
      %p306 = por %p304, %p305
      %s308 = sadd.s32 %s307, 1
      %p311 = scmp.eq.s32.totalorder %s30, 1
      %p312 = scmp.ne.s32.totalorder %s307, %s309
      %p313 = scmp.eq.s32.totalorder %s30, 0
      %p314 = por %p312, %p313
      %p315 = scmp.ne.s32.totalorder %s307, %s309
      %p316 = scmp.eq.s32.totalorder %s35, 1
      %p317 = por %p315, %p316
      %p318 = scmp.ne.s32.totalorder %s309, %s310
      %p319 = scmp.eq.s32.totalorder %s35, 0
      %p320 = por %p318, %p319
      %p321 = scmp.ne.s32.totalorder %s309, %s310
      %p322 = scmp.eq.s32.totalorder %s36, 1
      %p323 = por %p321, %p322
      %p325 = scmp.ne.s32.totalorder %s310, %s324
      %p326 = scmp.eq.s32.totalorder %s36, 0
      %p327 = por %p325, %p326
      %s329 = sadd.s32 %s328, 1
      %p332 = scmp.eq.s32.totalorder %s30, 1
      %p333 = scmp.ne.s32.totalorder %s328, %s330
      %p334 = scmp.eq.s32.totalorder %s30, 0
      %p335 = por %p333, %p334
      %p336 = scmp.ne.s32.totalorder %s328, %s330
      %p337 = scmp.eq.s32.totalorder %s35, 1
      %p338 = por %p336, %p337
      %p339 = scmp.ne.s32.totalorder %s330, %s331
      %p340 = scmp.eq.s32.totalorder %s35, 0
      %p341 = por %p339, %p340
      %p342 = scmp.ne.s32.totalorder %s330, %s331
      %p343 = scmp.eq.s32.totalorder %s36, 1
      %p344 = por %p342, %p343
      %p346 = scmp.ne.s32.totalorder %s331, %s345
      %p347 = scmp.eq.s32.totalorder %s36, 0
      %p348 = por %p346, %p347
      %s350 = sadd.s32 %s349, 1
      %p353 = scmp.eq.s32.totalorder %s30, 1
      %p354 = scmp.ne.s32.totalorder %s349, %s351
      %p355 = scmp.eq.s32.totalorder %s30, 0
      %p356 = por %p354, %p355
      %p357 = scmp.ne.s32.totalorder %s349, %s351
      %p358 = scmp.eq.s32.totalorder %s35, 1
      %p359 = por %p357, %p358
      %p360 = scmp.ne.s32.totalorder %s351, %s352
      %p361 = scmp.eq.s32.totalorder %s35, 0
      %p362 = por %p360, %p361
      %p363 = scmp.ne.s32.totalorder %s351, %s352
      %p364 = scmp.eq.s32.totalorder %s36, 1
      %p365 = por %p363, %p364
      %p367 = scmp.ne.s32.totalorder %s352, %s366
      %p368 = scmp.eq.s32.totalorder %s36, 0
      %p369 = por %p367, %p368
      %s371 = sadd.s32 %s370, 1
      %p374 = scmp.eq.s32.totalorder %s30, 1
      %p375 = scmp.ne.s32.totalorder %s370, %s372
      %p376 = scmp.eq.s32.totalorder %s30, 0
      %p377 = por %p375, %p376
      %p378 = scmp.ne.s32.totalorder %s370, %s372
      %p379 = scmp.eq.s32.totalorder %s35, 1
      %p380 = por %p378, %p379
      %p381 = scmp.ne.s32.totalorder %s372, %s373
      %p382 = scmp.eq.s32.totalorder %s35, 0
      %p383 = por %p381, %p382
      %p384 = scmp.ne.s32.totalorder %s372, %s373
      %p385 = scmp.eq.s32.totalorder %s36, 1
      %p386 = por %p384, %p385
      %p388 = scmp.ne.s32.totalorder %s373, %s387
      %p389 = scmp.eq.s32.totalorder %s36, 0
      %p390 = por %p388, %p389
      %s392 = sadd.s32 %s391, 1
      %p395 = scmp.eq.s32.totalorder %s30, 1
      %p396 = scmp.ne.s32.totalorder %s391, %s393
      %p397 = scmp.eq.s32.totalorder %s30, 0
      %p398 = por %p396, %p397
      %p399 = scmp.ne.s32.totalorder %s391, %s393
      %p400 = scmp.eq.s32.totalorder %s35, 1
      %p401 = por %p399, %p400
      %p402 = scmp.ne.s32.totalorder %s393, %s394
      %p403 = scmp.eq.s32.totalorder %s35, 0
      %p404 = por %p402, %p403
      %p405 = scmp.ne.s32.totalorder %s393, %s394
      %p406 = scmp.eq.s32.totalorder %s36, 1
      %p407 = por %p405, %p406
      %p409 = scmp.ne.s32.totalorder %s394, %s408
      %p410 = scmp.eq.s32.totalorder %s36, 0
      %p411 = por %p409, %p410
      %s412 = ssub.s32 %s37, %s49
      %s413 = ssub.s32 %s38, %s45
      %s414 = sor.u32 %s412, %s413
      %p415 = scmp.eq.s32.totalorder %s414, 0
      %s417 = sadd.s32 %s416, 1
      %s418 = scalar_select %p415, %s416, %s417
      %p421 = pneg %p415
      %p422 = scmp.eq.s32.totalorder %s30, 1
      %p423 = por %p421, %p422
      %p424 = scmp.ne.s32.totalorder %s416, %s419
      %p425 = scmp.eq.s32.totalorder %s30, 0
      %p426 = por %p424, %p425
      %p427 = scmp.ne.s32.totalorder %s416, %s419
      %p428 = scmp.eq.s32.totalorder %s35, 1
      %p429 = por %p427, %p428
      %p430 = scmp.ne.s32.totalorder %s419, %s420
      %p431 = scmp.eq.s32.totalorder %s35, 0
      %p432 = por %p430, %p431
      %p433 = scmp.ne.s32.totalorder %s419, %s420
      %p434 = scmp.eq.s32.totalorder %s36, 1
      %p435 = por %p433, %p434
      %p437 = scmp.ne.s32.totalorder %s420, %s436
      %p438 = scmp.eq.s32.totalorder %s36, 0
      %p439 = por %p437, %p438
      %p440 = scmp.le.s32.totalorder 1, %s30
      %p441 = scmp.lt.s32.totalorder %s30, 3
      %p442 = pnand %p440, %p441
      %p443 = pneg %p442
      // Predicated region
      $region9: #{tpu_custom_call.1} parent=5 // pred_check
        _
      $region10: #{tpu_custom_call.1} parent=5 // pred_check_branch
        %445 = sbr.rel (%p442) target = $region12
      $region11: #{tpu_custom_call.1} parent=5 // pred_region
        %s446 = ssub.s32 %s30, 1
        // Predicated region
        $region13: #{tpu_custom_call.1} parent=11 // pred_check
          %p447 = pneg %p89
        $region14: #{tpu_custom_call.1} parent=11 // pred_check_branch
          %449 = sbr.rel (%p447) target = $region16
        $region15: #{tpu_custom_call.1} parent=11 // pred_region
          _
        $region16: #{tpu_custom_call.1} parent=11 // pred_fallthru
          _
        // Predicated region
        $region17: #{tpu_custom_call.1} parent=11 // pred_check
          %p450 = pneg %p110
        $region18: #{tpu_custom_call.1} parent=11 // pred_check_branch
          %452 = sbr.rel (%p450) target = $region20
        $region19: #{tpu_custom_call.1} parent=11 // pred_region
          _
        $region20: #{tpu_custom_call.1} parent=11 // pred_fallthru
          _
        // Predicated region
        $region21: #{tpu_custom_call.1} parent=11 // pred_check
          %p453 = pneg %p131
        $region22: #{tpu_custom_call.1} parent=11 // pred_check_branch
          %455 = sbr.rel (%p453) target = $region24
        $region23: #{tpu_custom_call.1} parent=11 // pred_region
          _
        $region24: #{tpu_custom_call.1} parent=11 // pred_fallthru
          _
        // Predicated region
        $region25: #{tpu_custom_call.1} parent=11 // pred_check
          %p456 = pneg %p152
        $region26: #{tpu_custom_call.1} parent=11 // pred_check_branch
          %458 = sbr.rel (%p456) target = $region28
        $region27: #{tpu_custom_call.1} parent=11 // pred_region
          _
        $region28: #{tpu_custom_call.1} parent=11 // pred_fallthru
          _
        // Predicated region
        $region29: #{tpu_custom_call.1} parent=11 // pred_check
          %p459 = pneg %p173
        $region30: #{tpu_custom_call.1} parent=11 // pred_check_branch
          %461 = sbr.rel (%p459) target = $region32
        $region31: #{tpu_custom_call.1} parent=11 // pred_region
          _
        $region32: #{tpu_custom_call.1} parent=11 // pred_fallthru
          _
        // Predicated region
        $region33: #{tpu_custom_call.1} parent=11 // pred_check
          %p462 = pneg %p194
        $region34: #{tpu_custom_call.1} parent=11 // pred_check_branch
          %464 = sbr.rel (%p462) target = $region36
        $region35: #{tpu_custom_call.1} parent=11 // pred_region
          _
        $region36: #{tpu_custom_call.1} parent=11 // pred_fallthru
          _
        // Predicated region
        $region37: #{tpu_custom_call.1} parent=11 // pred_check
          %p465 = pneg %p215
        $region38: #{tpu_custom_call.1} parent=11 // pred_check_branch
          %467 = sbr.rel (%p465) target = $region40
        $region39: #{tpu_custom_call.1} parent=11 // pred_region
          _
        $region40: #{tpu_custom_call.1} parent=11 // pred_fallthru
          _
        // Predicated region
        $region41: #{tpu_custom_call.1} parent=11 // pred_check
          %p468 = pneg %p236
        $region42: #{tpu_custom_call.1} parent=11 // pred_check_branch
          %470 = sbr.rel (%p468) target = $region44
        $region43: #{tpu_custom_call.1} parent=11 // pred_region
          _
        $region44: #{tpu_custom_call.1} parent=11 // pred_fallthru
          _
        // Predicated region
        $region45: #{tpu_custom_call.1} parent=11 // pred_check
          %p471 = pneg %p257
        $region46: #{tpu_custom_call.1} parent=11 // pred_check_branch
          %473 = sbr.rel (%p471) target = $region48
        $region47: #{tpu_custom_call.1} parent=11 // pred_region
          %s475 = ssub.s32 512, 512
          %476 = vsyncadd [#allocation8], %s475
          %s477 = sshll.u32 [#allocation7], 4
          %s478 = int_to_ptr.vmem [resolvable:$true] %s477
          %483 = dma.hbm_to_vmem [thread:$0]  %s9, 512, %s478, [#allocation8], 128, 128, 8
        $region48: #{tpu_custom_call.1} parent=11 // pred_fallthru
          _
        // Predicated region
        $region49: #{tpu_custom_call.1} parent=11 // pred_check
          %p484 = pneg %p278
        $region50: #{tpu_custom_call.1} parent=11 // pred_check_branch
          %486 = sbr.rel (%p484) target = $region52
        $region51: #{tpu_custom_call.1} parent=11 // pred_region
          _
        $region52: #{tpu_custom_call.1} parent=11 // pred_fallthru
          _
        // Predicated region
        $region53: #{tpu_custom_call.1} parent=11 // pred_check
          %p487 = pneg %p299
        $region54: #{tpu_custom_call.1} parent=11 // pred_check_branch
          %489 = sbr.rel (%p487) target = $region56
        $region55: #{tpu_custom_call.1} parent=11 // pred_region
          _
        $region56: #{tpu_custom_call.1} parent=11 // pred_fallthru
          _
        // Predicated region
        $region57: #{tpu_custom_call.1} parent=11 // pred_check
          %p490 = pneg %p320
        $region58: #{tpu_custom_call.1} parent=11 // pred_check_branch
          %492 = sbr.rel (%p490) target = $region60
        $region59: #{tpu_custom_call.1} parent=11 // pred_region
          _
        $region60: #{tpu_custom_call.1} parent=11 // pred_fallthru
          _
        // Predicated region
        $region61: #{tpu_custom_call.1} parent=11 // pred_check
          %p493 = pneg %p341
        $region62: #{tpu_custom_call.1} parent=11 // pred_check_branch
          %495 = sbr.rel (%p493) target = $region64
        $region63: #{tpu_custom_call.1} parent=11 // pred_region
          %s497 = ssub.s32 512, 512
          %498 = vsyncadd [#allocation8], %s497
          %s499 = sshll.u32 [#allocation9], 4
          %s500 = int_to_ptr.vmem [resolvable:$true] %s499
          %505 = dma.hbm_to_vmem [thread:$0]  %s13, 512, %s500, [#allocation8], 128, 128, 8
        $region64: #{tpu_custom_call.1} parent=11 // pred_fallthru
          _
        // Predicated region
        $region65: #{tpu_custom_call.1} parent=11 // pred_check
          %p506 = pneg %p362
        $region66: #{tpu_custom_call.1} parent=11 // pred_check_branch
          %508 = sbr.rel (%p506) target = $region68
        $region67: #{tpu_custom_call.1} parent=11 // pred_region
          _
        $region68: #{tpu_custom_call.1} parent=11 // pred_fallthru
          _
        // Predicated region
        $region69: #{tpu_custom_call.1} parent=11 // pred_check
          %p509 = pneg %p383
        $region70: #{tpu_custom_call.1} parent=11 // pred_check_branch
          %511 = sbr.rel (%p509) target = $region72
        $region71: #{tpu_custom_call.1} parent=11 // pred_region
          _
        $region72: #{tpu_custom_call.1} parent=11 // pred_fallthru
          _
        // Predicated region
        $region73: #{tpu_custom_call.1} parent=11 // pred_check
          %p512 = pneg %p404
        $region74: #{tpu_custom_call.1} parent=11 // pred_check_branch
          %514 = sbr.rel (%p512) target = $region76
        $region75: #{tpu_custom_call.1} parent=11 // pred_region
          _
        $region76: #{tpu_custom_call.1} parent=11 // pred_fallthru
          _
      $region12: #{tpu_custom_call.1} parent=5 // pred_fallthru
        _
      %p515 = scmp.lt.s32.totalorder %s30, 2
      // Predicated region
      $region77: #{tpu_custom_call.1} parent=5 // pred_check
        %p516 = pneg %p515
      $region78: #{tpu_custom_call.1} parent=5 // pred_check_branch
        %518 = sbr.rel (%p516) target = $region80
      $region79: #{tpu_custom_call.1} parent=5 // pred_region
        // Predicated region
        $region81: #{tpu_custom_call.1} parent=79 // pred_check
          %p519 = pneg %p62
        $region82: #{tpu_custom_call.1} parent=79 // pred_check_branch
          %521 = sbr.rel (%p519) target = $region84
        $region83: #{tpu_custom_call.1} parent=79 // pred_region
          %s522 = sand.u32 %s52, 1
          %s523 = scalar_lea.sflag [#allocation5], %s522
          %s524 = sand.u32 %s52, 1
          %s525 = smul.addr %s524, 8
          %s526 = scalar_lea.vmem [#allocation4], %s525
          %s528 = ssub.s32 128, 128
          %529 = vsyncadd %s523, %s528
          %s530 = smul.addr %s37, 128
          %s531 = scalar_lea.hbm %s0, %s530
          %s533 = sshll.u32 %s526, 4
          %s534 = int_to_ptr.vmem [resolvable:$true] %s533
          %536 = dma.hbm_to_vmem [thread:$0]  %s531, 128, %s534, %s523
        $region84: #{tpu_custom_call.1} parent=79 // pred_fallthru
          _
      $region80: #{tpu_custom_call.1} parent=5 // pred_fallthru
        _
      %p537 = scmp.le.s32.totalorder 1, %s30
      %p538 = scmp.lt.s32.totalorder %s30, 3
      %p539 = pnand %p537, %p538
      %p540 = pneg %p539
      // Predicated region
      $region85: #{tpu_custom_call.1} parent=5 // pred_check
        _
      $region86: #{tpu_custom_call.1} parent=5 // pred_check_branch
        %542 = sbr.rel (%p539) target = $region88
      $region87: #{tpu_custom_call.1} parent=5 // pred_region
        %s543 = ssub.s32 %s30, 1
        %s544 = sand.u32 %s55, 1
        %s545 = scalar_lea.sflag [#allocation5], %s544
        %s546 = sand.u32 %s55, 1
        %s547 = smul.addr %s546, 8
        %s548 = scalar_lea.vmem [#allocation4], %s547
        // Predicated region
        $region89: #{tpu_custom_call.1} parent=87 // pred_check
          %p549 = pneg %p68
        $region90: #{tpu_custom_call.1} parent=87 // pred_check_branch
          %551 = sbr.rel (%p549) target = $region92
        $region91: #{tpu_custom_call.1} parent=87 // pred_region
          %552 = dma.done %s545, 128
        $region92: #{tpu_custom_call.1} parent=87 // pred_fallthru
          _
        // Predicated region
        $region93: #{tpu_custom_call.1} parent=87 // pred_check
          %p553 = pneg %p257
        $region94: #{tpu_custom_call.1} parent=87 // pred_check_branch
          %555 = sbr.rel (%p553) target = $region96
        $region95: #{tpu_custom_call.1} parent=87 // pred_region
          %556 = dma.done [#allocation8], 512
        $region96: #{tpu_custom_call.1} parent=87 // pred_fallthru
          _
        // Predicated region
        $region97: #{tpu_custom_call.1} parent=87 // pred_check
          %p557 = pneg %p341
        $region98: #{tpu_custom_call.1} parent=87 // pred_check_branch
          %559 = sbr.rel (%p557) target = $region100
        $region99: #{tpu_custom_call.1} parent=87 // pred_region
          %560 = dma.done [#allocation8], 512
        $region100: #{tpu_custom_call.1} parent=87 // pred_fallthru
          _
        %s561 = sand.u32 %s55, 1
        %s562 = scalar_lea.sflag [#allocation5], %s561
        %s563 = sand.u32 %s55, 1
        %s564 = smul.addr %s563, 8
        %s565 = scalar_lea.vmem [#allocation4], %s564
        %p566 = pneg %p68
        %p567 = pneg %p65
        %p568 = pneg %p89
        %p569 = pneg %p86
        %p570 = pneg %p110
        %p571 = pneg %p107
        %p572 = pneg %p131
        %p573 = pneg %p128
        %p574 = pneg %p152
        %p575 = pneg %p149
        %p576 = pneg %p173
        %p577 = pneg %p170
        %p578 = pneg %p194
        %p579 = pneg %p191
        %p580 = pneg %p215
        %p581 = pneg %p212
        %p582 = pneg %p236
        %p583 = pneg %p233
        %p584 = pneg %p257
        %p585 = pneg %p254
        %p586 = pneg %p278
        %p587 = pneg %p275
        %p588 = pneg %p299
        %p589 = pneg %p296
        %p590 = pneg %p320
        %p591 = pneg %p317
        %p592 = pneg %p341
        %p593 = pneg %p338
        %p594 = pneg %p362
        %p595 = pneg %p359
        %p596 = pneg %p383
        %p597 = pneg %p380
        %p598 = pneg %p404
        %p599 = pneg %p401
        %p600 = pneg %p432
        %p601 = pneg %p429
        %s602 = sand.u32 %s419, 1
        %s603 = scalar_lea.sflag [#allocation6], %s602
        %s604 = sand.u32 %s419, 1
        %s605 = smul.addr %s604, 8
        %s606 = scalar_lea.vmem [#allocation10], %s605
        %p607 = scmp.eq.s32.totalorder %s40, 0
        // Predicated region
        $region101: #{tpu_custom_call.1} parent=87 // pred_check
          %p608 = pneg %p607
        $region102: #{tpu_custom_call.1} parent=87 // pred_check_branch
          %610 = sbr.rel (%p608) target = $region104
        $region103: #{tpu_custom_call.1} parent=87 // pred_region
          %v611 = vld [vmem:[%s548] sm:$0xff]
          %v612 = vld [vmem:[%s1] sm:$0x1]
          %v613 = vld [vmem:[%s2] sm:$0x1]
          %vm614 = vcmask 261120
          %v615 = vsel %vm614, %v611, 0.0
          %616 = vadd.xlane.f32.xlu0 %v615
          %v617 = vpop.xlane.xlu0 %616
          %v618 = vrcp.pop 32.0
          %v619 = vmul.f32 %v617, %v618
          %v620 = vsub.f32 %v611, %v619
          %v621 = vmul.f32 %v620, %v620
          %v622 = vsel %vm614, %v621, 0.0
          %623 = vadd.xlane.f32.xlu0 %v622
          %v624 = vpop.xlane.xlu0 %623
          %v625 = vmul.f32 %v624, %v618
          %v626 = vadd.f32 %v625, 1e-06
          %v627 = vrsqrt.pop %v626
          %v628 = vmul.f32 %v620, %v627
          %v630 = vlaneseq
          %v631 = vshrl.u32 %v630, 7
          %v632 = vsub.s32 0, %v631
          %v633 = vrot.slane %v612, %v632
          %v635 = vmul.f32 %v628, %v633
          %v637 = vlaneseq
          %v638 = vshrl.u32 %v637, 7
          %v639 = vsub.s32 0, %v638
          %v640 = vrot.slane %v613, %v639
          %v642 = vadd.f32 %v635, %v640
          %v643 = vld [vmem:[%s5] sm:$0xff]
          %v644 = vld [vmem:[%s5 + $0x8] sm:$0xff]
          %v645 = vld [vmem:[%s5 + $0x10] sm:$0xff]
          %v646 = vld [vmem:[%s5 + $0x18] sm:$0xff]
          %v647 = vld [vmem:[%s6] sm:$0x1]
          %v649 = vlaneseq
          %v650 = vshrl.u32 %v649, 7
          %v651 = vsub.s32 0, %v650
          %v652 = vrot.slane %v647, %v651
          %v655 = vsel %vm614, %v642, 0
          %657 = vmatprep.subr.mxu0 0.0
          %658 = vmatpush1.msra.mxu0 %v643
          %659 = vmatprep.subr.mxu0 0.0
          %660 = vmatpush1.msra.mxu0 %v644
          %661 = vmatprep.subr.mxu0 0.0
          %662 = vmatpush1.msra.mxu0 %v645
          %663 = vmatprep.subr.mxu0 0.0
          %664 = vmatpush1.msra.mxu0 %v646
          %665 = vmatprep.subr.mxu0 0.0
          %666 = vmatpush1.msra.mxu0 0.0
          %667 = vmatprep.subr.mxu0 0.0
          %668 = vmatpush1.msra.mxu0 0.0
          %669 = vmatprep.subr.mxu0 0.0
          %670 = vmatpush1.msra.mxu0 0.0
          %671 = vmatprep.subr.mxu0 0.0
          %672 = vmatpush1.msra.mxu0 0.0
          %673 = vmatprep.subr.mxu0 0.0
          %674 = vmatpush1.msra.mxu0 0.0
          %675 = vmatprep.subr.mxu0 0.0
          %676 = vmatpush1.msra.mxu0 0.0
          %677 = vmatprep.subr.mxu0 0.0
          %678 = vmatpush1.msra.mxu0 0.0
          %679 = vmatprep.subr.mxu0 0.0
          %680 = vmatpush1.msra.mxu0 0.0
          %681 = vmatprep.subr.mxu0 0.0
          %682 = vmatpush1.msra.mxu0 0.0
          %683 = vmatprep.subr.mxu0 0.0
          %684 = vmatpush1.msra.mxu0 0.0
          %685 = vmatprep.subr.mxu0 0.0
          %686 = vmatpush1.msra.mxu0 0.0
          %687 = vmatprep.subr.mxu0 0.0
          %688 = vmatpush1.msra.mxu0 0.0
          %689 = vmatprep.subr.mxu0 0.0
          %690 = vmatpush1.msra.mxu0 0.0
          %691 = vmatprep.subr.mxu0 0.0
          %692 = vmatpush1.msra.mxu0 0.0
          %693 = vmatprep.subr.mxu0 0.0
          %694 = vmatpush1.msra.mxu0 0.0
          %695 = vmatprep.subr.mxu0 0.0
          %696 = vmatpush1.msra.mxu0 0.0
          %697 = vmatprep.subr.mxu0 0.0
          %698 = vmatpush1.msra.mxu0 0.0
          %699 = vmatprep.subr.mxu0 0.0
          %700 = vmatpush1.msra.mxu0 0.0
          %701 = vmatprep.subr.mxu0 0.0
          %702 = vmatpush1.msra.mxu0 0.0
          %703 = vmatprep.subr.mxu0 0.0
          %704 = vmatpush1.msra.mxu0 0.0
          %705 = vmatprep.subr.mxu0 0.0
          %706 = vmatpush1.msra.mxu0 0.0
          %707 = vmatprep.subr.mxu0 0.0
          %708 = vmatpush1.msra.mxu0 0.0
          %709 = vmatprep.subr.mxu0 0.0
          %710 = vmatpush1.msra.mxu0 0.0
          %711 = vmatprep.subr.mxu0 0.0
          %712 = vmatpush1.msra.mxu0 0.0
          %713 = vmatprep.subr.mxu0 0.0
          %714 = vmatpush1.msra.mxu0 0.0
          %715 = vmatprep.subr.mxu0 0.0
          %716 = vmatpush1.msra.mxu0 0.0
          %717 = vmatprep.subr.mxu0 0.0
          %718 = vmatpush1.msra.mxu0 0.0
          %719 = vmatprep.subr.mxu0 0.0
          %720 = vmatpush1.msra.mxu0 0.0
          %721 = vmatprep.mubr.f32.mxu0 0.0
          %722 = vmatmul.mubr.f32.gmra.mrb[0].mxu0 %v655
          %v723 = vpop.f32.mrb[0].mxu0
          %v724 = vadd.f32 %v652, %v723
          %v725 = vpop.f32.mrb[0].mxu0
          %726 = vdwg.mxu0
          %v727 = vld [vmem:[%s7] sm:$0xff]
          %v728 = vld [vmem:[%s7 + $0x8] sm:$0xff]
          %v729 = vld [vmem:[%s7 + $0x10] sm:$0xff]
          %v730 = vld [vmem:[%s7 + $0x18] sm:$0xff]
          %v731 = vld [vmem:[%s8] sm:$0x1]
          %v733 = vlaneseq
          %v734 = vshrl.u32 %v733, 7
          %v735 = vsub.s32 0, %v734
          %v736 = vrot.slane %v731, %v735
          %738 = vmatprep.subr.mxu0 0.0
          %739 = vmatpush1.msra.mxu0 %v727
          %740 = vmatprep.subr.mxu0 0.0
          %741 = vmatpush1.msra.mxu0 %v728
          %742 = vmatprep.subr.mxu0 0.0
          %743 = vmatpush1.msra.mxu0 %v729
          %744 = vmatprep.subr.mxu0 0.0
          %745 = vmatpush1.msra.mxu0 %v730
          %746 = vmatprep.subr.mxu0 0.0
          %747 = vmatpush1.msra.mxu0 0.0
          %748 = vmatprep.subr.mxu0 0.0
          %749 = vmatpush1.msra.mxu0 0.0
          %750 = vmatprep.subr.mxu0 0.0
          %751 = vmatpush1.msra.mxu0 0.0
          %752 = vmatprep.subr.mxu0 0.0
          %753 = vmatpush1.msra.mxu0 0.0
          %754 = vmatprep.subr.mxu0 0.0
          %755 = vmatpush1.msra.mxu0 0.0
          %756 = vmatprep.subr.mxu0 0.0
          %757 = vmatpush1.msra.mxu0 0.0
          %758 = vmatprep.subr.mxu0 0.0
          %759 = vmatpush1.msra.mxu0 0.0
          %760 = vmatprep.subr.mxu0 0.0
          %761 = vmatpush1.msra.mxu0 0.0
          %762 = vmatprep.subr.mxu0 0.0
          %763 = vmatpush1.msra.mxu0 0.0
          %764 = vmatprep.subr.mxu0 0.0
          %765 = vmatpush1.msra.mxu0 0.0
          %766 = vmatprep.subr.mxu0 0.0
          %767 = vmatpush1.msra.mxu0 0.0
          %768 = vmatprep.subr.mxu0 0.0
          %769 = vmatpush1.msra.mxu0 0.0
          %770 = vmatprep.subr.mxu0 0.0
          %771 = vmatpush1.msra.mxu0 0.0
          %772 = vmatprep.subr.mxu0 0.0
          %773 = vmatpush1.msra.mxu0 0.0
          %774 = vmatprep.subr.mxu0 0.0
          %775 = vmatpush1.msra.mxu0 0.0
          %776 = vmatprep.subr.mxu0 0.0
          %777 = vmatpush1.msra.mxu0 0.0
          %778 = vmatprep.subr.mxu0 0.0
          %779 = vmatpush1.msra.mxu0 0.0
          %780 = vmatprep.subr.mxu0 0.0
          %781 = vmatpush1.msra.mxu0 0.0
          %782 = vmatprep.subr.mxu0 0.0
          %783 = vmatpush1.msra.mxu0 0.0
          %784 = vmatprep.subr.mxu0 0.0
          %785 = vmatpush1.msra.mxu0 0.0
          %786 = vmatprep.subr.mxu0 0.0
          %787 = vmatpush1.msra.mxu0 0.0
          %788 = vmatprep.subr.mxu0 0.0
          %789 = vmatpush1.msra.mxu0 0.0
          %790 = vmatprep.subr.mxu0 0.0
          %791 = vmatpush1.msra.mxu0 0.0
          %792 = vmatprep.subr.mxu0 0.0
          %793 = vmatpush1.msra.mxu0 0.0
          %794 = vmatprep.subr.mxu0 0.0
          %795 = vmatpush1.msra.mxu0 0.0
          %796 = vmatprep.subr.mxu0 0.0
          %797 = vmatpush1.msra.mxu0 0.0
          %798 = vmatprep.subr.mxu0 0.0
          %799 = vmatpush1.msra.mxu0 0.0
          %800 = vmatprep.subr.mxu0 0.0
          %801 = vmatpush1.msra.mxu0 0.0
          %802 = vmatprep.mubr.f32.mxu0 0.0
          %803 = vmatmul.mubr.f32.gmra.mrb[0].mxu0 %v655
          %v804 = vpop.f32.mrb[0].mxu0
          %v805 = vadd.f32 %v736, %v804
          %v806 = vpop.f32.mrb[0].mxu0
          %807 = vdwg.mxu0
          %808 = vst.msk [vmem:[#allocation2] sm:$0xff] %vm614, %v724
          %809 = vst.msk [vmem:[#allocation3] sm:$0xff] %vm614, %v805
        $region104: #{tpu_custom_call.1} parent=87 // pred_fallthru
          _
        %s810 = smul.u32 %s40, 8
        %s811 = scalar_lea.vmem %s548, %s810 [#allocation4]
        %v812 = vld [vmem:[%s811] sm:$0xff]
        %v813 = vld [vmem:[%s1] sm:$0x1]
        %v814 = vld [vmem:[%s2] sm:$0x1]
        %vm815 = vcmask 261120
        %v816 = vsel %vm815, %v812, 0.0
        %817 = vadd.xlane.f32.xlu0 %v816
        %v818 = vpop.xlane.xlu0 %817
        %v819 = vrcp.pop 32.0
        %v820 = vmul.f32 %v818, %v819
        %v821 = vsub.f32 %v812, %v820
        %v822 = vmul.f32 %v821, %v821
        %v823 = vsel %vm815, %v822, 0.0
        %824 = vadd.xlane.f32.xlu0 %v823
        %v825 = vpop.xlane.xlu0 %824
        %v826 = vmul.f32 %v825, %v819
        %v827 = vadd.f32 %v826, 1e-06
        %v828 = vrsqrt.pop %v827
        %v829 = vmul.f32 %v821, %v828
        %v831 = vlaneseq
        %v832 = vshrl.u32 %v831, 7
        %v833 = vsub.s32 0, %v832
        %v834 = vrot.slane %v813, %v833
        %v836 = vmul.f32 %v829, %v834
        %v838 = vlaneseq
        %v839 = vshrl.u32 %v838, 7
        %v840 = vsub.s32 0, %v839
        %v841 = vrot.slane %v814, %v840
        %v843 = vadd.f32 %v836, %v841
        %v844 = vld [vmem:[%s3] sm:$0xff]
        %v845 = vld [vmem:[%s3 + $0x8] sm:$0xff]
        %v846 = vld [vmem:[%s3 + $0x10] sm:$0xff]
        %v847 = vld [vmem:[%s3 + $0x18] sm:$0xff]
        %v848 = vld [vmem:[%s4] sm:$0x1]
        %v850 = vlaneseq
        %v851 = vshrl.u32 %v850, 7
        %v852 = vsub.s32 0, %v851
        %v853 = vrot.slane %v848, %v852
        %v856 = vsel %vm815, %v843, 0
        %858 = vmatprep.subr.mxu0 0.0
        %859 = vmatpush1.msra.mxu0 %v844
        %860 = vmatprep.subr.mxu0 0.0
        %861 = vmatpush1.msra.mxu0 %v845
        %862 = vmatprep.subr.mxu0 0.0
        %863 = vmatpush1.msra.mxu0 %v846
        %864 = vmatprep.subr.mxu0 0.0
        %865 = vmatpush1.msra.mxu0 %v847
        %866 = vmatprep.subr.mxu0 0.0
        %867 = vmatpush1.msra.mxu0 0.0
        %868 = vmatprep.subr.mxu0 0.0
        %869 = vmatpush1.msra.mxu0 0.0
        %870 = vmatprep.subr.mxu0 0.0
        %871 = vmatpush1.msra.mxu0 0.0
        %872 = vmatprep.subr.mxu0 0.0
        %873 = vmatpush1.msra.mxu0 0.0
        %874 = vmatprep.subr.mxu0 0.0
        %875 = vmatpush1.msra.mxu0 0.0
        %876 = vmatprep.subr.mxu0 0.0
        %877 = vmatpush1.msra.mxu0 0.0
        %878 = vmatprep.subr.mxu0 0.0
        %879 = vmatpush1.msra.mxu0 0.0
        %880 = vmatprep.subr.mxu0 0.0
        %881 = vmatpush1.msra.mxu0 0.0
        %882 = vmatprep.subr.mxu0 0.0
        %883 = vmatpush1.msra.mxu0 0.0
        %884 = vmatprep.subr.mxu0 0.0
        %885 = vmatpush1.msra.mxu0 0.0
        %886 = vmatprep.subr.mxu0 0.0
        %887 = vmatpush1.msra.mxu0 0.0
        %888 = vmatprep.subr.mxu0 0.0
        %889 = vmatpush1.msra.mxu0 0.0
        %890 = vmatprep.subr.mxu0 0.0
        %891 = vmatpush1.msra.mxu0 0.0
        %892 = vmatprep.subr.mxu0 0.0
        %893 = vmatpush1.msra.mxu0 0.0
        %894 = vmatprep.subr.mxu0 0.0
        %895 = vmatpush1.msra.mxu0 0.0
        %896 = vmatprep.subr.mxu0 0.0
        %897 = vmatpush1.msra.mxu0 0.0
        %898 = vmatprep.subr.mxu0 0.0
        %899 = vmatpush1.msra.mxu0 0.0
        %900 = vmatprep.subr.mxu0 0.0
        %901 = vmatpush1.msra.mxu0 0.0
        %902 = vmatprep.subr.mxu0 0.0
        %903 = vmatpush1.msra.mxu0 0.0
        %904 = vmatprep.subr.mxu0 0.0
        %905 = vmatpush1.msra.mxu0 0.0
        %906 = vmatprep.subr.mxu0 0.0
        %907 = vmatpush1.msra.mxu0 0.0
        %908 = vmatprep.subr.mxu0 0.0
        %909 = vmatpush1.msra.mxu0 0.0
        %910 = vmatprep.subr.mxu0 0.0
        %911 = vmatpush1.msra.mxu0 0.0
        %912 = vmatprep.subr.mxu0 0.0
        %913 = vmatpush1.msra.mxu0 0.0
        %914 = vmatprep.subr.mxu0 0.0
        %915 = vmatpush1.msra.mxu0 0.0
        %916 = vmatprep.subr.mxu0 0.0
        %917 = vmatpush1.msra.mxu0 0.0
        %918 = vmatprep.subr.mxu0 0.0
        %919 = vmatpush1.msra.mxu0 0.0
        %920 = vmatprep.subr.mxu0 0.0
        %921 = vmatpush1.msra.mxu0 0.0
        %922 = vmatprep.mubr.f32.mxu0 0.0
        %923 = vmatmul.mubr.f32.gmra.mrb[0].mxu0 %v856
        %v924 = vpop.f32.mrb[0].mxu0
        %v925 = vadd.f32 %v853, %v924
        %v926 = vpop.f32.mrb[0].mxu0
        %927 = vdwg.mxu0
        %929 = vrot.lane.b32.xlu0 %v925, 120
        %v930 = vpop.permute.xlu0 %929
        %931 = vrot.lane.b32.xlu0 %v925, 112
        %v932 = vpop.permute.xlu0 %931
        %933 = vrot.lane.b32.xlu0 %v925, 104
        %v934 = vpop.permute.xlu0 %933
        %v935 = vld [vmem:[#allocation2] sm:$0xff]
        %937 = vrot.lane.b32.xlu0 %v935, 120
        %v938 = vpop.permute.xlu0 %937
        %940 = vrot.lane.b32.xlu0 %v935, 112
        %v941 = vpop.permute.xlu0 %940
        %943 = vrot.lane.b32.xlu0 %v935, 104
        %v944 = vpop.permute.xlu0 %943
        %v946 = vld [vmem:[#allocation3] sm:$0xff]
        %948 = vrot.lane.b32.xlu0 %v946, 120
        %v949 = vpop.permute.xlu0 %948
        %951 = vrot.lane.b32.xlu0 %v946, 112
        %v952 = vpop.permute.xlu0 %951
        %954 = vrot.lane.b32.xlu0 %v946, 104
        %v955 = vpop.permute.xlu0 %954
        %957 = vxpose.xlu0.b32.start [1/16] %v935, 128
        %958 = vxpose.xlu0.b32.cont [2/16] 0.0, 128
        %959 = vxpose.xlu0.b32.cont [3/16] 0.0, 128
        %960 = vxpose.xlu0.b32.cont [4/16] 0.0, 128
        %961 = vxpose.xlu0.b32.cont [5/16] 0.0, 128
        %962 = vxpose.xlu0.b32.cont [6/16] 0.0, 128
        %963 = vxpose.xlu0.b32.cont [7/16] 0.0, 128
        %964 = vxpose.xlu0.b32.cont [8/16] 0.0, 128
        %965 = vxpose.xlu0.b32.cont [9/16] 0.0, 128
        %966 = vxpose.xlu0.b32.cont [10/16] 0.0, 128
        %967 = vxpose.xlu0.b32.cont [11/16] 0.0, 128
        %968 = vxpose.xlu0.b32.cont [12/16] 0.0, 128
        %969 = vxpose.xlu0.b32.cont [13/16] 0.0, 128
        %970 = vxpose.xlu0.b32.cont [14/16] 0.0, 128
        %971 = vxpose.xlu0.b32.cont [15/16] 0.0, 128
        %972 = vxpose.xlu0.b32.end [16/16] 0.0, 128
        %v973 = vpop.trf.xlu0
        %v974 = vpop.trf.xlu0
        %v975 = vpop.trf.xlu0
        %v976 = vpop.trf.xlu0
        %v977 = vpop.trf.xlu0
        %v978 = vpop.trf.xlu0
        %v979 = vpop.trf.xlu0
        %v980 = vpop.trf.xlu0
        %v981 = vpop.trf.xlu0
        %v982 = vpop.trf.xlu0
        %v983 = vpop.trf.xlu0
        %v984 = vpop.trf.xlu0
        %v985 = vpop.trf.xlu0
        %v986 = vpop.trf.xlu0
        %v987 = vpop.trf.xlu0
        %v988 = vpop.trf.xlu0
        %989 = vxpose.xlu0.b32.start [1/16] %v938, 128
        %990 = vxpose.xlu0.b32.cont [2/16] 0.0, 128
        %991 = vxpose.xlu0.b32.cont [3/16] 0.0, 128
        %992 = vxpose.xlu0.b32.cont [4/16] 0.0, 128
        %993 = vxpose.xlu0.b32.cont [5/16] 0.0, 128
        %994 = vxpose.xlu0.b32.cont [6/16] 0.0, 128
        %995 = vxpose.xlu0.b32.cont [7/16] 0.0, 128
        %996 = vxpose.xlu0.b32.cont [8/16] 0.0, 128
        %997 = vxpose.xlu0.b32.cont [9/16] 0.0, 128
        %998 = vxpose.xlu0.b32.cont [10/16] 0.0, 128
        %999 = vxpose.xlu0.b32.cont [11/16] 0.0, 128
        %1000 = vxpose.xlu0.b32.cont [12/16] 0.0, 128
        %1001 = vxpose.xlu0.b32.cont [13/16] 0.0, 128
        %1002 = vxpose.xlu0.b32.cont [14/16] 0.0, 128
        %1003 = vxpose.xlu0.b32.cont [15/16] 0.0, 128
        %1004 = vxpose.xlu0.b32.end [16/16] 0.0, 128
        %v1005 = vpop.trf.xlu0
        %v1006 = vpop.trf.xlu0
        %v1007 = vpop.trf.xlu0
        %v1008 = vpop.trf.xlu0
        %v1009 = vpop.trf.xlu0
        %v1010 = vpop.trf.xlu0
        %v1011 = vpop.trf.xlu0
        %v1012 = vpop.trf.xlu0
        %v1013 = vpop.trf.xlu0
        %v1014 = vpop.trf.xlu0
        %v1015 = vpop.trf.xlu0
        %v1016 = vpop.trf.xlu0
        %v1017 = vpop.trf.xlu0
        %v1018 = vpop.trf.xlu0
        %v1019 = vpop.trf.xlu0
        %v1020 = vpop.trf.xlu0
        %1021 = vxpose.xlu0.b32.start [1/16] %v941, 128
        %1022 = vxpose.xlu0.b32.cont [2/16] 0.0, 128
        %1023 = vxpose.xlu0.b32.cont [3/16] 0.0, 128
        %1024 = vxpose.xlu0.b32.cont [4/16] 0.0, 128
        %1025 = vxpose.xlu0.b32.cont [5/16] 0.0, 128
        %1026 = vxpose.xlu0.b32.cont [6/16] 0.0, 128
        %1027 = vxpose.xlu0.b32.cont [7/16] 0.0, 128
        %1028 = vxpose.xlu0.b32.cont [8/16] 0.0, 128
        %1029 = vxpose.xlu0.b32.cont [9/16] 0.0, 128
        %1030 = vxpose.xlu0.b32.cont [10/16] 0.0, 128
        %1031 = vxpose.xlu0.b32.cont [11/16] 0.0, 128
        %1032 = vxpose.xlu0.b32.cont [12/16] 0.0, 128
        %1033 = vxpose.xlu0.b32.cont [13/16] 0.0, 128
        %1034 = vxpose.xlu0.b32.cont [14/16] 0.0, 128
        %1035 = vxpose.xlu0.b32.cont [15/16] 0.0, 128
        %1036 = vxpose.xlu0.b32.end [16/16] 0.0, 128
        %v1037 = vpop.trf.xlu0
        %v1038 = vpop.trf.xlu0
        %v1039 = vpop.trf.xlu0
        %v1040 = vpop.trf.xlu0
        %v1041 = vpop.trf.xlu0
        %v1042 = vpop.trf.xlu0
        %v1043 = vpop.trf.xlu0
        %v1044 = vpop.trf.xlu0
        %v1045 = vpop.trf.xlu0
        %v1046 = vpop.trf.xlu0
        %v1047 = vpop.trf.xlu0
        %v1048 = vpop.trf.xlu0
        %v1049 = vpop.trf.xlu0
        %v1050 = vpop.trf.xlu0
        %v1051 = vpop.trf.xlu0
        %v1052 = vpop.trf.xlu0
        %1053 = vxpose.xlu0.b32.start [1/16] %v944, 128
        %1054 = vxpose.xlu0.b32.cont [2/16] 0.0, 128
        %1055 = vxpose.xlu0.b32.cont [3/16] 0.0, 128
        %1056 = vxpose.xlu0.b32.cont [4/16] 0.0, 128
        %1057 = vxpose.xlu0.b32.cont [5/16] 0.0, 128
        %1058 = vxpose.xlu0.b32.cont [6/16] 0.0, 128
        %1059 = vxpose.xlu0.b32.cont [7/16] 0.0, 128
        %1060 = vxpose.xlu0.b32.cont [8/16] 0.0, 128
        %1061 = vxpose.xlu0.b32.cont [9/16] 0.0, 128
        %1062 = vxpose.xlu0.b32.cont [10/16] 0.0, 128
        %1063 = vxpose.xlu0.b32.cont [11/16] 0.0, 128
        %1064 = vxpose.xlu0.b32.cont [12/16] 0.0, 128
        %1065 = vxpose.xlu0.b32.cont [13/16] 0.0, 128
        %1066 = vxpose.xlu0.b32.cont [14/16] 0.0, 128
        %1067 = vxpose.xlu0.b32.cont [15/16] 0.0, 128
        %1068 = vxpose.xlu0.b32.end [16/16] 0.0, 128
        %v1069 = vpop.trf.xlu0
        %v1070 = vpop.trf.xlu0
        %v1071 = vpop.trf.xlu0
        %v1072 = vpop.trf.xlu0
        %v1073 = vpop.trf.xlu0
        %v1074 = vpop.trf.xlu0
        %v1075 = vpop.trf.xlu0
        %v1076 = vpop.trf.xlu0
        %v1077 = vpop.trf.xlu0
        %v1078 = vpop.trf.xlu0
        %v1079 = vpop.trf.xlu0
        %v1080 = vpop.trf.xlu0
        %v1081 = vpop.trf.xlu0
        %v1082 = vpop.trf.xlu0
        %v1083 = vpop.trf.xlu0
        %v1084 = vpop.trf.xlu0
        %vm1085 = vcmask 64512
        %v1086 = vsel %vm1085, %v925, 0
        %1088 = vmatprep.subr.mxu0 0.0
        %1089 = vmatpush1.msra.mxu0 %v973
        %1090 = vmatprep.subr.mxu0 0.0
        %1091 = vmatpush1.msra.mxu0 0.0
        %1092 = vmatprep.subr.mxu0 0.0
        %1093 = vmatpush1.msra.mxu0 0.0
        %1094 = vmatprep.subr.mxu0 0.0
        %1095 = vmatpush1.msra.mxu0 0.0
        %1096 = vmatprep.subr.mxu0 0.0
        %1097 = vmatpush1.msra.mxu0 0.0
        %1098 = vmatprep.subr.mxu0 0.0
        %1099 = vmatpush1.msra.mxu0 0.0
        %1100 = vmatprep.subr.mxu0 0.0
        %1101 = vmatpush1.msra.mxu0 0.0
        %1102 = vmatprep.subr.mxu0 0.0
        %1103 = vmatpush1.msra.mxu0 0.0
        %1104 = vmatprep.subr.mxu0 0.0
        %1105 = vmatpush1.msra.mxu0 0.0
        %1106 = vmatprep.subr.mxu0 0.0
        %1107 = vmatpush1.msra.mxu0 0.0
        %1108 = vmatprep.subr.mxu0 0.0
        %1109 = vmatpush1.msra.mxu0 0.0
        %1110 = vmatprep.subr.mxu0 0.0
        %1111 = vmatpush1.msra.mxu0 0.0
        %1112 = vmatprep.subr.mxu0 0.0
        %1113 = vmatpush1.msra.mxu0 0.0
        %1114 = vmatprep.subr.mxu0 0.0
        %1115 = vmatpush1.msra.mxu0 0.0
        %1116 = vmatprep.subr.mxu0 0.0
        %1117 = vmatpush1.msra.mxu0 0.0
        %1118 = vmatprep.subr.mxu0 0.0
        %1119 = vmatpush1.msra.mxu0 0.0
        %1120 = vmatprep.subr.mxu0 0.0
        %1121 = vmatpush1.msra.mxu0 0.0
        %1122 = vmatprep.subr.mxu0 0.0
        %1123 = vmatpush1.msra.mxu0 0.0
        %1124 = vmatprep.subr.mxu0 0.0
        %1125 = vmatpush1.msra.mxu0 0.0
        %1126 = vmatprep.subr.mxu0 0.0
        %1127 = vmatpush1.msra.mxu0 0.0
        %1128 = vmatprep.subr.mxu0 0.0
        %1129 = vmatpush1.msra.mxu0 0.0
        %1130 = vmatprep.subr.mxu0 0.0
        %1131 = vmatpush1.msra.mxu0 0.0
        %1132 = vmatprep.subr.mxu0 0.0
        %1133 = vmatpush1.msra.mxu0 0.0
        %1134 = vmatprep.subr.mxu0 0.0
        %1135 = vmatpush1.msra.mxu0 0.0
        %1136 = vmatprep.subr.mxu0 0.0
        %1137 = vmatpush1.msra.mxu0 0.0
        %1138 = vmatprep.subr.mxu0 0.0
        %1139 = vmatpush1.msra.mxu0 0.0
        %1140 = vmatprep.subr.mxu0 0.0
        %1141 = vmatpush1.msra.mxu0 0.0
        %1142 = vmatprep.subr.mxu0 0.0
        %1143 = vmatpush1.msra.mxu0 0.0
        %1144 = vmatprep.subr.mxu0 0.0
        %1145 = vmatpush1.msra.mxu0 0.0
        %1146 = vmatprep.subr.mxu0 0.0
        %1147 = vmatpush1.msra.mxu0 0.0
        %1148 = vmatprep.subr.mxu0 0.0
        %1149 = vmatpush1.msra.mxu0 0.0
        %1150 = vmatprep.subr.mxu0 0.0
        %1151 = vmatpush1.msra.mxu0 0.0
        %1152 = vmatprep.mubr.f32.mxu0 0.0
        %1153 = vmatmul.mubr.f32.gmra.mrb[0].mxu0 %v1086
        %v1154 = vpop.f32.mrb[0].mxu0
        %v1155 = vadd.f32 0.0, %v1154
        %v1156 = vpop.f32.mrb[0].mxu0
        %1157 = vdwg.mxu0
        %v1158 = vsel %vm1085, %v930, 0
        %1160 = vmatprep.subr.mxu0 0.0
        %1161 = vmatpush1.msra.mxu0 %v1005
        %1162 = vmatprep.subr.mxu0 0.0
        %1163 = vmatpush1.msra.mxu0 0.0
        %1164 = vmatprep.subr.mxu0 0.0
        %1165 = vmatpush1.msra.mxu0 0.0
        %1166 = vmatprep.subr.mxu0 0.0
        %1167 = vmatpush1.msra.mxu0 0.0
        %1168 = vmatprep.subr.mxu0 0.0
        %1169 = vmatpush1.msra.mxu0 0.0
        %1170 = vmatprep.subr.mxu0 0.0
        %1171 = vmatpush1.msra.mxu0 0.0
        %1172 = vmatprep.subr.mxu0 0.0
        %1173 = vmatpush1.msra.mxu0 0.0
        %1174 = vmatprep.subr.mxu0 0.0
        %1175 = vmatpush1.msra.mxu0 0.0
        %1176 = vmatprep.subr.mxu0 0.0
        %1177 = vmatpush1.msra.mxu0 0.0
        %1178 = vmatprep.subr.mxu0 0.0
        %1179 = vmatpush1.msra.mxu0 0.0
        %1180 = vmatprep.subr.mxu0 0.0
        %1181 = vmatpush1.msra.mxu0 0.0
        %1182 = vmatprep.subr.mxu0 0.0
        %1183 = vmatpush1.msra.mxu0 0.0
        %1184 = vmatprep.subr.mxu0 0.0
        %1185 = vmatpush1.msra.mxu0 0.0
        %1186 = vmatprep.subr.mxu0 0.0
        %1187 = vmatpush1.msra.mxu0 0.0
        %1188 = vmatprep.subr.mxu0 0.0
        %1189 = vmatpush1.msra.mxu0 0.0
        %1190 = vmatprep.subr.mxu0 0.0
        %1191 = vmatpush1.msra.mxu0 0.0
        %1192 = vmatprep.subr.mxu0 0.0
        %1193 = vmatpush1.msra.mxu0 0.0
        %1194 = vmatprep.subr.mxu0 0.0
        %1195 = vmatpush1.msra.mxu0 0.0
        %1196 = vmatprep.subr.mxu0 0.0
        %1197 = vmatpush1.msra.mxu0 0.0
        %1198 = vmatprep.subr.mxu0 0.0
        %1199 = vmatpush1.msra.mxu0 0.0
        %1200 = vmatprep.subr.mxu0 0.0
        %1201 = vmatpush1.msra.mxu0 0.0
        %1202 = vmatprep.subr.mxu0 0.0
        %1203 = vmatpush1.msra.mxu0 0.0
        %1204 = vmatprep.subr.mxu0 0.0
        %1205 = vmatpush1.msra.mxu0 0.0
        %1206 = vmatprep.subr.mxu0 0.0
        %1207 = vmatpush1.msra.mxu0 0.0
        %1208 = vmatprep.subr.mxu0 0.0
        %1209 = vmatpush1.msra.mxu0 0.0
        %1210 = vmatprep.subr.mxu0 0.0
        %1211 = vmatpush1.msra.mxu0 0.0
        %1212 = vmatprep.subr.mxu0 0.0
        %1213 = vmatpush1.msra.mxu0 0.0
        %1214 = vmatprep.subr.mxu0 0.0
        %1215 = vmatpush1.msra.mxu0 0.0
        %1216 = vmatprep.subr.mxu0 0.0
        %1217 = vmatpush1.msra.mxu0 0.0
        %1218 = vmatprep.subr.mxu0 0.0
        %1219 = vmatpush1.msra.mxu0 0.0
        %1220 = vmatprep.subr.mxu0 0.0
        %1221 = vmatpush1.msra.mxu0 0.0
        %1222 = vmatprep.subr.mxu0 0.0
        %1223 = vmatpush1.msra.mxu0 0.0
        %1224 = vmatprep.mubr.f32.mxu0 0.0
        %1225 = vmatmul.mubr.f32.gmra.mrb[0].mxu0 %v1158
        %v1226 = vpop.f32.mrb[0].mxu0
        %v1227 = vadd.f32 0.0, %v1226
        %v1228 = vpop.f32.mrb[0].mxu0
        %1229 = vdwg.mxu0
        %v1230 = vsel %vm1085, %v932, 0
        %1232 = vmatprep.subr.mxu0 0.0
        %1233 = vmatpush1.msra.mxu0 %v1037
        %1234 = vmatprep.subr.mxu0 0.0
        %1235 = vmatpush1.msra.mxu0 0.0
        %1236 = vmatprep.subr.mxu0 0.0
        %1237 = vmatpush1.msra.mxu0 0.0
        %1238 = vmatprep.subr.mxu0 0.0
        %1239 = vmatpush1.msra.mxu0 0.0
        %1240 = vmatprep.subr.mxu0 0.0
        %1241 = vmatpush1.msra.mxu0 0.0
        %1242 = vmatprep.subr.mxu0 0.0
        %1243 = vmatpush1.msra.mxu0 0.0
        %1244 = vmatprep.subr.mxu0 0.0
        %1245 = vmatpush1.msra.mxu0 0.0
        %1246 = vmatprep.subr.mxu0 0.0
        %1247 = vmatpush1.msra.mxu0 0.0
        %1248 = vmatprep.subr.mxu0 0.0
        %1249 = vmatpush1.msra.mxu0 0.0
        %1250 = vmatprep.subr.mxu0 0.0
        %1251 = vmatpush1.msra.mxu0 0.0
        %1252 = vmatprep.subr.mxu0 0.0
        %1253 = vmatpush1.msra.mxu0 0.0
        %1254 = vmatprep.subr.mxu0 0.0
        %1255 = vmatpush1.msra.mxu0 0.0
        %1256 = vmatprep.subr.mxu0 0.0
        %1257 = vmatpush1.msra.mxu0 0.0
        %1258 = vmatprep.subr.mxu0 0.0
        %1259 = vmatpush1.msra.mxu0 0.0
        %1260 = vmatprep.subr.mxu0 0.0
        %1261 = vmatpush1.msra.mxu0 0.0
        %1262 = vmatprep.subr.mxu0 0.0
        %1263 = vmatpush1.msra.mxu0 0.0
        %1264 = vmatprep.subr.mxu0 0.0
        %1265 = vmatpush1.msra.mxu0 0.0
        %1266 = vmatprep.subr.mxu0 0.0
        %1267 = vmatpush1.msra.mxu0 0.0
        %1268 = vmatprep.subr.mxu0 0.0
        %1269 = vmatpush1.msra.mxu0 0.0
        %1270 = vmatprep.subr.mxu0 0.0
        %1271 = vmatpush1.msra.mxu0 0.0
        %1272 = vmatprep.subr.mxu0 0.0
        %1273 = vmatpush1.msra.mxu0 0.0
        %1274 = vmatprep.subr.mxu0 0.0
        %1275 = vmatpush1.msra.mxu0 0.0
        %1276 = vmatprep.subr.mxu0 0.0
        %1277 = vmatpush1.msra.mxu0 0.0
        %1278 = vmatprep.subr.mxu0 0.0
        %1279 = vmatpush1.msra.mxu0 0.0
        %1280 = vmatprep.subr.mxu0 0.0
        %1281 = vmatpush1.msra.mxu0 0.0
        %1282 = vmatprep.subr.mxu0 0.0
        %1283 = vmatpush1.msra.mxu0 0.0
        %1284 = vmatprep.subr.mxu0 0.0
        %1285 = vmatpush1.msra.mxu0 0.0
        %1286 = vmatprep.subr.mxu0 0.0
        %1287 = vmatpush1.msra.mxu0 0.0
        %1288 = vmatprep.subr.mxu0 0.0
        %1289 = vmatpush1.msra.mxu0 0.0
        %1290 = vmatprep.subr.mxu0 0.0
        %1291 = vmatpush1.msra.mxu0 0.0
        %1292 = vmatprep.subr.mxu0 0.0
        %1293 = vmatpush1.msra.mxu0 0.0
        %1294 = vmatprep.subr.mxu0 0.0
        %1295 = vmatpush1.msra.mxu0 0.0
        %1296 = vmatprep.mubr.f32.mxu0 0.0
        %1297 = vmatmul.mubr.f32.gmra.mrb[0].mxu0 %v1230
        %v1298 = vpop.f32.mrb[0].mxu0
        %v1299 = vadd.f32 0.0, %v1298
        %v1300 = vpop.f32.mrb[0].mxu0
        %1301 = vdwg.mxu0
        %v1302 = vsel %vm1085, %v934, 0
        %1304 = vmatprep.subr.mxu0 0.0
        %1305 = vmatpush1.msra.mxu0 %v1069
        %1306 = vmatprep.subr.mxu0 0.0
        %1307 = vmatpush1.msra.mxu0 0.0
        %1308 = vmatprep.subr.mxu0 0.0
        %1309 = vmatpush1.msra.mxu0 0.0
        %1310 = vmatprep.subr.mxu0 0.0
        %1311 = vmatpush1.msra.mxu0 0.0
        %1312 = vmatprep.subr.mxu0 0.0
        %1313 = vmatpush1.msra.mxu0 0.0
        %1314 = vmatprep.subr.mxu0 0.0
        %1315 = vmatpush1.msra.mxu0 0.0
        %1316 = vmatprep.subr.mxu0 0.0
        %1317 = vmatpush1.msra.mxu0 0.0
        %1318 = vmatprep.subr.mxu0 0.0
        %1319 = vmatpush1.msra.mxu0 0.0
        %1320 = vmatprep.subr.mxu0 0.0
        %1321 = vmatpush1.msra.mxu0 0.0
        %1322 = vmatprep.subr.mxu0 0.0
        %1323 = vmatpush1.msra.mxu0 0.0
        %1324 = vmatprep.subr.mxu0 0.0
        %1325 = vmatpush1.msra.mxu0 0.0
        %1326 = vmatprep.subr.mxu0 0.0
        %1327 = vmatpush1.msra.mxu0 0.0
        %1328 = vmatprep.subr.mxu0 0.0
        %1329 = vmatpush1.msra.mxu0 0.0
        %1330 = vmatprep.subr.mxu0 0.0
        %1331 = vmatpush1.msra.mxu0 0.0
        %1332 = vmatprep.subr.mxu0 0.0
        %1333 = vmatpush1.msra.mxu0 0.0
        %1334 = vmatprep.subr.mxu0 0.0
        %1335 = vmatpush1.msra.mxu0 0.0
        %1336 = vmatprep.subr.mxu0 0.0
        %1337 = vmatpush1.msra.mxu0 0.0
        %1338 = vmatprep.subr.mxu0 0.0
        %1339 = vmatpush1.msra.mxu0 0.0
        %1340 = vmatprep.subr.mxu0 0.0
        %1341 = vmatpush1.msra.mxu0 0.0
        %1342 = vmatprep.subr.mxu0 0.0
        %1343 = vmatpush1.msra.mxu0 0.0
        %1344 = vmatprep.subr.mxu0 0.0
        %1345 = vmatpush1.msra.mxu0 0.0
        %1346 = vmatprep.subr.mxu0 0.0
        %1347 = vmatpush1.msra.mxu0 0.0
        %1348 = vmatprep.subr.mxu0 0.0
        %1349 = vmatpush1.msra.mxu0 0.0
        %1350 = vmatprep.subr.mxu0 0.0
        %1351 = vmatpush1.msra.mxu0 0.0
        %1352 = vmatprep.subr.mxu0 0.0
        %1353 = vmatpush1.msra.mxu0 0.0
        %1354 = vmatprep.subr.mxu0 0.0
        %1355 = vmatpush1.msra.mxu0 0.0
        %1356 = vmatprep.subr.mxu0 0.0
        %1357 = vmatpush1.msra.mxu0 0.0
        %1358 = vmatprep.subr.mxu0 0.0
        %1359 = vmatpush1.msra.mxu0 0.0
        %1360 = vmatprep.subr.mxu0 0.0
        %1361 = vmatpush1.msra.mxu0 0.0
        %1362 = vmatprep.subr.mxu0 0.0
        %1363 = vmatpush1.msra.mxu0 0.0
        %1364 = vmatprep.subr.mxu0 0.0
        %1365 = vmatpush1.msra.mxu0 0.0
        %1366 = vmatprep.subr.mxu0 0.0
        %1367 = vmatpush1.msra.mxu0 0.0
        %1368 = vmatprep.mubr.f32.mxu0 0.0
        %1369 = vmatmul.mubr.f32.gmra.mrb[0].mxu0 %v1302
        %v1370 = vpop.f32.mrb[0].mxu0
        %v1371 = vadd.f32 0.0, %v1370
        %v1372 = vpop.f32.mrb[0].mxu0
        %1373 = vdwg.mxu0
        %v1374 = vsel %vm1085, %v1155, -inf
        %1375 = vmax.xlane.f32.xlu0 %v1374
        %v1376 = vpop.xlane.xlu0 %1375
        %v1377 = vsel %vm1085, %v1227, -inf
        %1378 = vmax.xlane.f32.xlu0 %v1377
        %v1379 = vpop.xlane.xlu0 %1378
        %v1380 = vsel %vm1085, %v1299, -inf
        %1381 = vmax.xlane.f32.xlu0 %v1380
        %v1382 = vpop.xlane.xlu0 %1381
        %v1383 = vsel %vm1085, %v1371, -inf
        %1384 = vmax.xlane.f32.xlu0 %v1383
        %v1385 = vpop.xlane.xlu0 %1384
        %v1386 = vsub.f32 %v1155, %v1376
        %v1387 = vsub.f32 %v1227, %v1379
        %v1388 = vsub.f32 %v1299, %v1382
        %v1389 = vsub.f32 %v1371, %v1385
        %v1390 = vmul.f32 %v1386, 1.442695
        %v1391 = vpow.pop %v1390
        %v1392 = vmul.f32 %v1387, 1.442695
        %v1393 = vpow.pop %v1392
        %v1394 = vmul.f32 %v1388, 1.442695
        %v1395 = vpow.pop %v1394
        %v1396 = vmul.f32 %v1389, 1.442695
        %v1397 = vpow.pop %v1396
        %v1398 = vsel %vm1085, %v1391, 0.0
        %1399 = vadd.xlane.f32.xlu0 %v1398
        %v1400 = vpop.xlane.xlu0 %1399
        %v1401 = vsel %vm1085, %v1393, 0.0
        %1402 = vadd.xlane.f32.xlu0 %v1401
        %v1403 = vpop.xlane.xlu0 %1402
        %v1404 = vsel %vm1085, %v1395, 0.0
        %1405 = vadd.xlane.f32.xlu0 %v1404
        %v1406 = vpop.xlane.xlu0 %1405
        %v1407 = vsel %vm1085, %v1397, 0.0
        %1408 = vadd.xlane.f32.xlu0 %v1407
        %v1409 = vpop.xlane.xlu0 %1408
        %v1410 = vrcp.pop %v1400
        %v1411 = vrcp.pop %v1403
        %v1412 = vrcp.pop %v1406
        %v1413 = vrcp.pop %v1409
        %v1414 = vmul.f32 %v1391, %v1410
        %v1415 = vmul.f32 %v1393, %v1411
        %v1416 = vmul.f32 %v1395, %v1412
        %v1417 = vmul.f32 %v1397, %v1413
        %1418 = vxpose.xlu0.b32.start [1/16] %v946, 128
        %1419 = vxpose.xlu0.b32.cont [2/16] 0.0, 128
        %1420 = vxpose.xlu0.b32.cont [3/16] 0.0, 128
        %1421 = vxpose.xlu0.b32.cont [4/16] 0.0, 128
        %1422 = vxpose.xlu0.b32.cont [5/16] 0.0, 128
        %1423 = vxpose.xlu0.b32.cont [6/16] 0.0, 128
        %1424 = vxpose.xlu0.b32.cont [7/16] 0.0, 128
        %1425 = vxpose.xlu0.b32.cont [8/16] 0.0, 128
        %1426 = vxpose.xlu0.b32.cont [9/16] 0.0, 128
        %1427 = vxpose.xlu0.b32.cont [10/16] 0.0, 128
        %1428 = vxpose.xlu0.b32.cont [11/16] 0.0, 128
        %1429 = vxpose.xlu0.b32.cont [12/16] 0.0, 128
        %1430 = vxpose.xlu0.b32.cont [13/16] 0.0, 128
        %1431 = vxpose.xlu0.b32.cont [14/16] 0.0, 128
        %1432 = vxpose.xlu0.b32.cont [15/16] 0.0, 128
        %1433 = vxpose.xlu0.b32.end [16/16] 0.0, 128
        %v1434 = vpop.trf.xlu0
        %v1435 = vpop.trf.xlu0
        %v1436 = vpop.trf.xlu0
        %v1437 = vpop.trf.xlu0
        %v1438 = vpop.trf.xlu0
        %v1439 = vpop.trf.xlu0
        %v1440 = vpop.trf.xlu0
        %v1441 = vpop.trf.xlu0
        %v1442 = vpop.trf.xlu0
        %v1443 = vpop.trf.xlu0
        %v1444 = vpop.trf.xlu0
        %v1445 = vpop.trf.xlu0
        %v1446 = vpop.trf.xlu0
        %v1447 = vpop.trf.xlu0
        %v1448 = vpop.trf.xlu0
        %v1449 = vpop.trf.xlu0
        %1450 = vxpose.xlu0.b32.start [1/16] %v949, 128
        %1451 = vxpose.xlu0.b32.cont [2/16] 0.0, 128
        %1452 = vxpose.xlu0.b32.cont [3/16] 0.0, 128
        %1453 = vxpose.xlu0.b32.cont [4/16] 0.0, 128
        %1454 = vxpose.xlu0.b32.cont [5/16] 0.0, 128
        %1455 = vxpose.xlu0.b32.cont [6/16] 0.0, 128
        %1456 = vxpose.xlu0.b32.cont [7/16] 0.0, 128
        %1457 = vxpose.xlu0.b32.cont [8/16] 0.0, 128
        %1458 = vxpose.xlu0.b32.cont [9/16] 0.0, 128
        %1459 = vxpose.xlu0.b32.cont [10/16] 0.0, 128
        %1460 = vxpose.xlu0.b32.cont [11/16] 0.0, 128
        %1461 = vxpose.xlu0.b32.cont [12/16] 0.0, 128
        %1462 = vxpose.xlu0.b32.cont [13/16] 0.0, 128
        %1463 = vxpose.xlu0.b32.cont [14/16] 0.0, 128
        %1464 = vxpose.xlu0.b32.cont [15/16] 0.0, 128
        %1465 = vxpose.xlu0.b32.end [16/16] 0.0, 128
        %v1466 = vpop.trf.xlu0
        %v1467 = vpop.trf.xlu0
        %v1468 = vpop.trf.xlu0
        %v1469 = vpop.trf.xlu0
        %v1470 = vpop.trf.xlu0
        %v1471 = vpop.trf.xlu0
        %v1472 = vpop.trf.xlu0
        %v1473 = vpop.trf.xlu0
        %v1474 = vpop.trf.xlu0
        %v1475 = vpop.trf.xlu0
        %v1476 = vpop.trf.xlu0
        %v1477 = vpop.trf.xlu0
        %v1478 = vpop.trf.xlu0
        %v1479 = vpop.trf.xlu0
        %v1480 = vpop.trf.xlu0
        %v1481 = vpop.trf.xlu0
        %1482 = vxpose.xlu0.b32.start [1/16] %v952, 128
        %1483 = vxpose.xlu0.b32.cont [2/16] 0.0, 128
        %1484 = vxpose.xlu0.b32.cont [3/16] 0.0, 128
        %1485 = vxpose.xlu0.b32.cont [4/16] 0.0, 128
        %1486 = vxpose.xlu0.b32.cont [5/16] 0.0, 128
        %1487 = vxpose.xlu0.b32.cont [6/16] 0.0, 128
        %1488 = vxpose.xlu0.b32.cont [7/16] 0.0, 128
        %1489 = vxpose.xlu0.b32.cont [8/16] 0.0, 128
        %1490 = vxpose.xlu0.b32.cont [9/16] 0.0, 128
        %1491 = vxpose.xlu0.b32.cont [10/16] 0.0, 128
        %1492 = vxpose.xlu0.b32.cont [11/16] 0.0, 128
        %1493 = vxpose.xlu0.b32.cont [12/16] 0.0, 128
        %1494 = vxpose.xlu0.b32.cont [13/16] 0.0, 128
        %1495 = vxpose.xlu0.b32.cont [14/16] 0.0, 128
        %1496 = vxpose.xlu0.b32.cont [15/16] 0.0, 128
        %1497 = vxpose.xlu0.b32.end [16/16] 0.0, 128
        %v1498 = vpop.trf.xlu0
        %v1499 = vpop.trf.xlu0
        %v1500 = vpop.trf.xlu0
        %v1501 = vpop.trf.xlu0
        %v1502 = vpop.trf.xlu0
        %v1503 = vpop.trf.xlu0
        %v1504 = vpop.trf.xlu0
        %v1505 = vpop.trf.xlu0
        %v1506 = vpop.trf.xlu0
        %v1507 = vpop.trf.xlu0
        %v1508 = vpop.trf.xlu0
        %v1509 = vpop.trf.xlu0
        %v1510 = vpop.trf.xlu0
        %v1511 = vpop.trf.xlu0
        %v1512 = vpop.trf.xlu0
        %v1513 = vpop.trf.xlu0
        %1514 = vxpose.xlu0.b32.start [1/16] %v955, 128
        %1515 = vxpose.xlu0.b32.cont [2/16] 0.0, 128
        %1516 = vxpose.xlu0.b32.cont [3/16] 0.0, 128
        %1517 = vxpose.xlu0.b32.cont [4/16] 0.0, 128
        %1518 = vxpose.xlu0.b32.cont [5/16] 0.0, 128
        %1519 = vxpose.xlu0.b32.cont [6/16] 0.0, 128
        %1520 = vxpose.xlu0.b32.cont [7/16] 0.0, 128
        %1521 = vxpose.xlu0.b32.cont [8/16] 0.0, 128
        %1522 = vxpose.xlu0.b32.cont [9/16] 0.0, 128
        %1523 = vxpose.xlu0.b32.cont [10/16] 0.0, 128
        %1524 = vxpose.xlu0.b32.cont [11/16] 0.0, 128
        %1525 = vxpose.xlu0.b32.cont [12/16] 0.0, 128
        %1526 = vxpose.xlu0.b32.cont [13/16] 0.0, 128
        %1527 = vxpose.xlu0.b32.cont [14/16] 0.0, 128
        %1528 = vxpose.xlu0.b32.cont [15/16] 0.0, 128
        %1529 = vxpose.xlu0.b32.end [16/16] 0.0, 128
        %v1530 = vpop.trf.xlu0
        %v1531 = vpop.trf.xlu0
        %v1532 = vpop.trf.xlu0
        %v1533 = vpop.trf.xlu0
        %v1534 = vpop.trf.xlu0
        %v1535 = vpop.trf.xlu0
        %v1536 = vpop.trf.xlu0
        %v1537 = vpop.trf.xlu0
        %v1538 = vpop.trf.xlu0
        %v1539 = vpop.trf.xlu0
        %v1540 = vpop.trf.xlu0
        %v1541 = vpop.trf.xlu0
        %v1542 = vpop.trf.xlu0
        %v1543 = vpop.trf.xlu0
        %v1544 = vpop.trf.xlu0
        %v1545 = vpop.trf.xlu0
        %v1547 = vsel %vm1085, %v1434, 0
        %v1550 = vsel %vm1085, %v1414, 0
        %1552 = vmatprep.subr.mxu0 0.0
        %1553 = vmatpush1.xpose.msra.mxu0 %v1550
        %1554 = vmatprep.subr.mxu0 0.0
        %1555 = vmatpush1.xpose.msra.mxu0 0.0
        %1556 = vmatprep.subr.mxu0 0.0
        %1557 = vmatpush1.xpose.msra.mxu0 0.0
        %1558 = vmatprep.subr.mxu0 0.0
        %1559 = vmatpush1.xpose.msra.mxu0 0.0
        %1560 = vmatprep.subr.mxu0 0.0
        %1561 = vmatpush1.xpose.msra.mxu0 0.0
        %1562 = vmatprep.subr.mxu0 0.0
        %1563 = vmatpush1.xpose.msra.mxu0 0.0
        %1564 = vmatprep.subr.mxu0 0.0
        %1565 = vmatpush1.xpose.msra.mxu0 0.0
        %1566 = vmatprep.subr.mxu0 0.0
        %1567 = vmatpush1.xpose.msra.mxu0 0.0
        %1568 = vmatprep.subr.mxu0 0.0
        %1569 = vmatpush1.xpose.msra.mxu0 0.0
        %1570 = vmatprep.subr.mxu0 0.0
        %1571 = vmatpush1.xpose.msra.mxu0 0.0
        %1572 = vmatprep.subr.mxu0 0.0
        %1573 = vmatpush1.xpose.msra.mxu0 0.0
        %1574 = vmatprep.subr.mxu0 0.0
        %1575 = vmatpush1.xpose.msra.mxu0 0.0
        %1576 = vmatprep.subr.mxu0 0.0
        %1577 = vmatpush1.xpose.msra.mxu0 0.0
        %1578 = vmatprep.subr.mxu0 0.0
        %1579 = vmatpush1.xpose.msra.mxu0 0.0
        %1580 = vmatprep.subr.mxu0 0.0
        %1581 = vmatpush1.xpose.msra.mxu0 0.0
        %1582 = vmatprep.subr.mxu0 0.0
        %1583 = vmatpush1.xpose.msra.mxu0 0.0
        %1584 = vmatprep.subr.mxu0 0.0
        %1585 = vmatpush1.xpose.msra.mxu0 0.0
        %1586 = vmatprep.subr.mxu0 0.0
        %1587 = vmatpush1.xpose.msra.mxu0 0.0
        %1588 = vmatprep.subr.mxu0 0.0
        %1589 = vmatpush1.xpose.msra.mxu0 0.0
        %1590 = vmatprep.subr.mxu0 0.0
        %1591 = vmatpush1.xpose.msra.mxu0 0.0
        %1592 = vmatprep.subr.mxu0 0.0
        %1593 = vmatpush1.xpose.msra.mxu0 0.0
        %1594 = vmatprep.subr.mxu0 0.0
        %1595 = vmatpush1.xpose.msra.mxu0 0.0
        %1596 = vmatprep.subr.mxu0 0.0
        %1597 = vmatpush1.xpose.msra.mxu0 0.0
        %1598 = vmatprep.subr.mxu0 0.0
        %1599 = vmatpush1.xpose.msra.mxu0 0.0
        %1600 = vmatprep.subr.mxu0 0.0
        %1601 = vmatpush1.xpose.msra.mxu0 0.0
        %1602 = vmatprep.subr.mxu0 0.0
        %1603 = vmatpush1.xpose.msra.mxu0 0.0
        %1604 = vmatprep.subr.mxu0 0.0
        %1605 = vmatpush1.xpose.msra.mxu0 0.0
        %1606 = vmatprep.subr.mxu0 0.0
        %1607 = vmatpush1.xpose.msra.mxu0 0.0
        %1608 = vmatprep.subr.mxu0 0.0
        %1609 = vmatpush1.xpose.msra.mxu0 0.0
        %1610 = vmatprep.subr.mxu0 0.0
        %1611 = vmatpush1.xpose.msra.mxu0 0.0
        %1612 = vmatprep.subr.mxu0 0.0
        %1613 = vmatpush1.xpose.msra.mxu0 0.0
        %1614 = vmatprep.subr.mxu0 0.0
        %1615 = vmatpush1.xpose.msra.mxu0 0.0
        %1616 = vmatprep.mubr.f32.mxu0 0.0
        %1617 = vmatmul.mubr.f32.gmra.mrb[0].mxu0 %v1547
        %v1618 = vpop.f32.mrb[0].mxu0
        %v1619 = vadd.f32 0.0, %v1618
        %v1620 = vpop.f32.mrb[0].mxu0
        %1621 = vdwg.mxu0
        %v1623 = vsel %vm1085, %v1466, 0
        %v1626 = vsel %vm1085, %v1415, 0
        %1628 = vmatprep.subr.mxu0 0.0
        %1629 = vmatpush1.xpose.msra.mxu0 %v1626
        %1630 = vmatprep.subr.mxu0 0.0
        %1631 = vmatpush1.xpose.msra.mxu0 0.0
        %1632 = vmatprep.subr.mxu0 0.0
        %1633 = vmatpush1.xpose.msra.mxu0 0.0
        %1634 = vmatprep.subr.mxu0 0.0
        %1635 = vmatpush1.xpose.msra.mxu0 0.0
        %1636 = vmatprep.subr.mxu0 0.0
        %1637 = vmatpush1.xpose.msra.mxu0 0.0
        %1638 = vmatprep.subr.mxu0 0.0
        %1639 = vmatpush1.xpose.msra.mxu0 0.0
        %1640 = vmatprep.subr.mxu0 0.0
        %1641 = vmatpush1.xpose.msra.mxu0 0.0
        %1642 = vmatprep.subr.mxu0 0.0
        %1643 = vmatpush1.xpose.msra.mxu0 0.0
        %1644 = vmatprep.subr.mxu0 0.0
        %1645 = vmatpush1.xpose.msra.mxu0 0.0
        %1646 = vmatprep.subr.mxu0 0.0
        %1647 = vmatpush1.xpose.msra.mxu0 0.0
        %1648 = vmatprep.subr.mxu0 0.0
        %1649 = vmatpush1.xpose.msra.mxu0 0.0
        %1650 = vmatprep.subr.mxu0 0.0
        %1651 = vmatpush1.xpose.msra.mxu0 0.0
        %1652 = vmatprep.subr.mxu0 0.0
        %1653 = vmatpush1.xpose.msra.mxu0 0.0
        %1654 = vmatprep.subr.mxu0 0.0
        %1655 = vmatpush1.xpose.msra.mxu0 0.0
        %1656 = vmatprep.subr.mxu0 0.0
        %1657 = vmatpush1.xpose.msra.mxu0 0.0
        %1658 = vmatprep.subr.mxu0 0.0
        %1659 = vmatpush1.xpose.msra.mxu0 0.0
        %1660 = vmatprep.subr.mxu0 0.0
        %1661 = vmatpush1.xpose.msra.mxu0 0.0
        %1662 = vmatprep.subr.mxu0 0.0
        %1663 = vmatpush1.xpose.msra.mxu0 0.0
        %1664 = vmatprep.subr.mxu0 0.0
        %1665 = vmatpush1.xpose.msra.mxu0 0.0
        %1666 = vmatprep.subr.mxu0 0.0
        %1667 = vmatpush1.xpose.msra.mxu0 0.0
        %1668 = vmatprep.subr.mxu0 0.0
        %1669 = vmatpush1.xpose.msra.mxu0 0.0
        %1670 = vmatprep.subr.mxu0 0.0
        %1671 = vmatpush1.xpose.msra.mxu0 0.0
        %1672 = vmatprep.subr.mxu0 0.0
        %1673 = vmatpush1.xpose.msra.mxu0 0.0
        %1674 = vmatprep.subr.mxu0 0.0
        %1675 = vmatpush1.xpose.msra.mxu0 0.0
        %1676 = vmatprep.subr.mxu0 0.0
        %1677 = vmatpush1.xpose.msra.mxu0 0.0
        %1678 = vmatprep.subr.mxu0 0.0
        %1679 = vmatpush1.xpose.msra.mxu0 0.0
        %1680 = vmatprep.subr.mxu0 0.0
        %1681 = vmatpush1.xpose.msra.mxu0 0.0
        %1682 = vmatprep.subr.mxu0 0.0
        %1683 = vmatpush1.xpose.msra.mxu0 0.0
        %1684 = vmatprep.subr.mxu0 0.0
        %1685 = vmatpush1.xpose.msra.mxu0 0.0
        %1686 = vmatprep.subr.mxu0 0.0
        %1687 = vmatpush1.xpose.msra.mxu0 0.0
        %1688 = vmatprep.subr.mxu0 0.0
        %1689 = vmatpush1.xpose.msra.mxu0 0.0
        %1690 = vmatprep.subr.mxu0 0.0
        %1691 = vmatpush1.xpose.msra.mxu0 0.0
        %1692 = vmatprep.mubr.f32.mxu0 0.0
        %1693 = vmatmul.mubr.f32.gmra.mrb[0].mxu0 %v1623
        %v1694 = vpop.f32.mrb[0].mxu0
        %v1695 = vadd.f32 0.0, %v1694
        %v1696 = vpop.f32.mrb[0].mxu0
        %1697 = vdwg.mxu0
        %v1699 = vsel %vm1085, %v1498, 0
        %v1702 = vsel %vm1085, %v1416, 0
        %1704 = vmatprep.subr.mxu0 0.0
        %1705 = vmatpush1.xpose.msra.mxu0 %v1702
        %1706 = vmatprep.subr.mxu0 0.0
        %1707 = vmatpush1.xpose.msra.mxu0 0.0
        %1708 = vmatprep.subr.mxu0 0.0
        %1709 = vmatpush1.xpose.msra.mxu0 0.0
        %1710 = vmatprep.subr.mxu0 0.0
        %1711 = vmatpush1.xpose.msra.mxu0 0.0
        %1712 = vmatprep.subr.mxu0 0.0
        %1713 = vmatpush1.xpose.msra.mxu0 0.0
        %1714 = vmatprep.subr.mxu0 0.0
        %1715 = vmatpush1.xpose.msra.mxu0 0.0
        %1716 = vmatprep.subr.mxu0 0.0
        %1717 = vmatpush1.xpose.msra.mxu0 0.0
        %1718 = vmatprep.subr.mxu0 0.0
        %1719 = vmatpush1.xpose.msra.mxu0 0.0
        %1720 = vmatprep.subr.mxu0 0.0
        %1721 = vmatpush1.xpose.msra.mxu0 0.0
        %1722 = vmatprep.subr.mxu0 0.0
        %1723 = vmatpush1.xpose.msra.mxu0 0.0
        %1724 = vmatprep.subr.mxu0 0.0
        %1725 = vmatpush1.xpose.msra.mxu0 0.0
        %1726 = vmatprep.subr.mxu0 0.0
        %1727 = vmatpush1.xpose.msra.mxu0 0.0
        %1728 = vmatprep.subr.mxu0 0.0
        %1729 = vmatpush1.xpose.msra.mxu0 0.0
        %1730 = vmatprep.subr.mxu0 0.0
        %1731 = vmatpush1.xpose.msra.mxu0 0.0
        %1732 = vmatprep.subr.mxu0 0.0
        %1733 = vmatpush1.xpose.msra.mxu0 0.0
        %1734 = vmatprep.subr.mxu0 0.0
        %1735 = vmatpush1.xpose.msra.mxu0 0.0
        %1736 = vmatprep.subr.mxu0 0.0
        %1737 = vmatpush1.xpose.msra.mxu0 0.0
        %1738 = vmatprep.subr.mxu0 0.0
        %1739 = vmatpush1.xpose.msra.mxu0 0.0
        %1740 = vmatprep.subr.mxu0 0.0
        %1741 = vmatpush1.xpose.msra.mxu0 0.0
        %1742 = vmatprep.subr.mxu0 0.0
        %1743 = vmatpush1.xpose.msra.mxu0 0.0
        %1744 = vmatprep.subr.mxu0 0.0
        %1745 = vmatpush1.xpose.msra.mxu0 0.0
        %1746 = vmatprep.subr.mxu0 0.0
        %1747 = vmatpush1.xpose.msra.mxu0 0.0
        %1748 = vmatprep.subr.mxu0 0.0
        %1749 = vmatpush1.xpose.msra.mxu0 0.0
        %1750 = vmatprep.subr.mxu0 0.0
        %1751 = vmatpush1.xpose.msra.mxu0 0.0
        %1752 = vmatprep.subr.mxu0 0.0
        %1753 = vmatpush1.xpose.msra.mxu0 0.0
        %1754 = vmatprep.subr.mxu0 0.0
        %1755 = vmatpush1.xpose.msra.mxu0 0.0
        %1756 = vmatprep.subr.mxu0 0.0
        %1757 = vmatpush1.xpose.msra.mxu0 0.0
        %1758 = vmatprep.subr.mxu0 0.0
        %1759 = vmatpush1.xpose.msra.mxu0 0.0
        %1760 = vmatprep.subr.mxu0 0.0
        %1761 = vmatpush1.xpose.msra.mxu0 0.0
        %1762 = vmatprep.subr.mxu0 0.0
        %1763 = vmatpush1.xpose.msra.mxu0 0.0
        %1764 = vmatprep.subr.mxu0 0.0
        %1765 = vmatpush1.xpose.msra.mxu0 0.0
        %1766 = vmatprep.subr.mxu0 0.0
        %1767 = vmatpush1.xpose.msra.mxu0 0.0
        %1768 = vmatprep.mubr.f32.mxu0 0.0
        %1769 = vmatmul.mubr.f32.gmra.mrb[0].mxu0 %v1699
        %v1770 = vpop.f32.mrb[0].mxu0
        %v1771 = vadd.f32 0.0, %v1770
        %v1772 = vpop.f32.mrb[0].mxu0
        %1773 = vdwg.mxu0
        %v1775 = vsel %vm1085, %v1530, 0
        %v1778 = vsel %vm1085, %v1417, 0
        %1780 = vmatprep.subr.mxu0 0.0
        %1781 = vmatpush1.xpose.msra.mxu0 %v1778
        %1782 = vmatprep.subr.mxu0 0.0
        %1783 = vmatpush1.xpose.msra.mxu0 0.0
        %1784 = vmatprep.subr.mxu0 0.0
        %1785 = vmatpush1.xpose.msra.mxu0 0.0
        %1786 = vmatprep.subr.mxu0 0.0
        %1787 = vmatpush1.xpose.msra.mxu0 0.0
        %1788 = vmatprep.subr.mxu0 0.0
        %1789 = vmatpush1.xpose.msra.mxu0 0.0
        %1790 = vmatprep.subr.mxu0 0.0
        %1791 = vmatpush1.xpose.msra.mxu0 0.0
        %1792 = vmatprep.subr.mxu0 0.0
        %1793 = vmatpush1.xpose.msra.mxu0 0.0
        %1794 = vmatprep.subr.mxu0 0.0
        %1795 = vmatpush1.xpose.msra.mxu0 0.0
        %1796 = vmatprep.subr.mxu0 0.0
        %1797 = vmatpush1.xpose.msra.mxu0 0.0
        %1798 = vmatprep.subr.mxu0 0.0
        %1799 = vmatpush1.xpose.msra.mxu0 0.0
        %1800 = vmatprep.subr.mxu0 0.0
        %1801 = vmatpush1.xpose.msra.mxu0 0.0
        %1802 = vmatprep.subr.mxu0 0.0
        %1803 = vmatpush1.xpose.msra.mxu0 0.0
        %1804 = vmatprep.subr.mxu0 0.0
        %1805 = vmatpush1.xpose.msra.mxu0 0.0
        %1806 = vmatprep.subr.mxu0 0.0
        %1807 = vmatpush1.xpose.msra.mxu0 0.0
        %1808 = vmatprep.subr.mxu0 0.0
        %1809 = vmatpush1.xpose.msra.mxu0 0.0
        %1810 = vmatprep.subr.mxu0 0.0
        %1811 = vmatpush1.xpose.msra.mxu0 0.0
        %1812 = vmatprep.subr.mxu0 0.0
        %1813 = vmatpush1.xpose.msra.mxu0 0.0
        %1814 = vmatprep.subr.mxu0 0.0
        %1815 = vmatpush1.xpose.msra.mxu0 0.0
        %1816 = vmatprep.subr.mxu0 0.0
        %1817 = vmatpush1.xpose.msra.mxu0 0.0
        %1818 = vmatprep.subr.mxu0 0.0
        %1819 = vmatpush1.xpose.msra.mxu0 0.0
        %1820 = vmatprep.subr.mxu0 0.0
        %1821 = vmatpush1.xpose.msra.mxu0 0.0
        %1822 = vmatprep.subr.mxu0 0.0
        %1823 = vmatpush1.xpose.msra.mxu0 0.0
        %1824 = vmatprep.subr.mxu0 0.0
        %1825 = vmatpush1.xpose.msra.mxu0 0.0
        %1826 = vmatprep.subr.mxu0 0.0
        %1827 = vmatpush1.xpose.msra.mxu0 0.0
        %1828 = vmatprep.subr.mxu0 0.0
        %1829 = vmatpush1.xpose.msra.mxu0 0.0
        %1830 = vmatprep.subr.mxu0 0.0
        %1831 = vmatpush1.xpose.msra.mxu0 0.0
        %1832 = vmatprep.subr.mxu0 0.0
        %1833 = vmatpush1.xpose.msra.mxu0 0.0
        %1834 = vmatprep.subr.mxu0 0.0
        %1835 = vmatpush1.xpose.msra.mxu0 0.0
        %1836 = vmatprep.subr.mxu0 0.0
        %1837 = vmatpush1.xpose.msra.mxu0 0.0
        %1838 = vmatprep.subr.mxu0 0.0
        %1839 = vmatpush1.xpose.msra.mxu0 0.0
        %1840 = vmatprep.subr.mxu0 0.0
        %1841 = vmatpush1.xpose.msra.mxu0 0.0
        %1842 = vmatprep.subr.mxu0 0.0
        %1843 = vmatpush1.xpose.msra.mxu0 0.0
        %1844 = vmatprep.mubr.f32.mxu0 0.0
        %1845 = vmatmul.mubr.f32.gmra.mrb[0].mxu0 %v1775
        %v1846 = vpop.f32.mrb[0].mxu0
        %v1847 = vadd.f32 0.0, %v1846
        %v1848 = vpop.f32.mrb[0].mxu0
        %1849 = vdwg.mxu0
        %1850 = vxpose.xlu0.b32.start [1/16] %v1619, 128
        %1851 = vxpose.xlu0.b32.cont [2/16] 0.0, 128
        %1852 = vxpose.xlu0.b32.cont [3/16] 0.0, 128
        %1853 = vxpose.xlu0.b32.cont [4/16] 0.0, 128
        %1854 = vxpose.xlu0.b32.cont [5/16] 0.0, 128
        %1855 = vxpose.xlu0.b32.cont [6/16] 0.0, 128
        %1856 = vxpose.xlu0.b32.cont [7/16] 0.0, 128
        %1857 = vxpose.xlu0.b32.cont [8/16] 0.0, 128
        %1858 = vxpose.xlu0.b32.cont [9/16] 0.0, 128
        %1859 = vxpose.xlu0.b32.cont [10/16] 0.0, 128
        %1860 = vxpose.xlu0.b32.cont [11/16] 0.0, 128
        %1861 = vxpose.xlu0.b32.cont [12/16] 0.0, 128
        %1862 = vxpose.xlu0.b32.cont [13/16] 0.0, 128
        %1863 = vxpose.xlu0.b32.cont [14/16] 0.0, 128
        %1864 = vxpose.xlu0.b32.cont [15/16] 0.0, 128
        %1865 = vxpose.xlu0.b32.end [16/16] 0.0, 128
        %v1866 = vpop.trf.xlu0
        %v1867 = vpop.trf.xlu0
        %v1868 = vpop.trf.xlu0
        %v1869 = vpop.trf.xlu0
        %v1870 = vpop.trf.xlu0
        %v1871 = vpop.trf.xlu0
        %v1872 = vpop.trf.xlu0
        %v1873 = vpop.trf.xlu0
        %v1874 = vpop.trf.xlu0
        %v1875 = vpop.trf.xlu0
        %v1876 = vpop.trf.xlu0
        %v1877 = vpop.trf.xlu0
        %v1878 = vpop.trf.xlu0
        %v1879 = vpop.trf.xlu0
        %v1880 = vpop.trf.xlu0
        %v1881 = vpop.trf.xlu0
        %1882 = vxpose.xlu0.b32.start [1/16] %v1695, 128
        %1883 = vxpose.xlu0.b32.cont [2/16] 0.0, 128
        %1884 = vxpose.xlu0.b32.cont [3/16] 0.0, 128
        %1885 = vxpose.xlu0.b32.cont [4/16] 0.0, 128
        %1886 = vxpose.xlu0.b32.cont [5/16] 0.0, 128
        %1887 = vxpose.xlu0.b32.cont [6/16] 0.0, 128
        %1888 = vxpose.xlu0.b32.cont [7/16] 0.0, 128
        %1889 = vxpose.xlu0.b32.cont [8/16] 0.0, 128
        %1890 = vxpose.xlu0.b32.cont [9/16] 0.0, 128
        %1891 = vxpose.xlu0.b32.cont [10/16] 0.0, 128
        %1892 = vxpose.xlu0.b32.cont [11/16] 0.0, 128
        %1893 = vxpose.xlu0.b32.cont [12/16] 0.0, 128
        %1894 = vxpose.xlu0.b32.cont [13/16] 0.0, 128
        %1895 = vxpose.xlu0.b32.cont [14/16] 0.0, 128
        %1896 = vxpose.xlu0.b32.cont [15/16] 0.0, 128
        %1897 = vxpose.xlu0.b32.end [16/16] 0.0, 128
        %v1898 = vpop.trf.xlu0
        %v1899 = vpop.trf.xlu0
        %v1900 = vpop.trf.xlu0
        %v1901 = vpop.trf.xlu0
        %v1902 = vpop.trf.xlu0
        %v1903 = vpop.trf.xlu0
        %v1904 = vpop.trf.xlu0
        %v1905 = vpop.trf.xlu0
        %v1906 = vpop.trf.xlu0
        %v1907 = vpop.trf.xlu0
        %v1908 = vpop.trf.xlu0
        %v1909 = vpop.trf.xlu0
        %v1910 = vpop.trf.xlu0
        %v1911 = vpop.trf.xlu0
        %v1912 = vpop.trf.xlu0
        %v1913 = vpop.trf.xlu0
        %1914 = vxpose.xlu0.b32.start [1/16] %v1771, 128
        %1915 = vxpose.xlu0.b32.cont [2/16] 0.0, 128
        %1916 = vxpose.xlu0.b32.cont [3/16] 0.0, 128
        %1917 = vxpose.xlu0.b32.cont [4/16] 0.0, 128
        %1918 = vxpose.xlu0.b32.cont [5/16] 0.0, 128
        %1919 = vxpose.xlu0.b32.cont [6/16] 0.0, 128
        %1920 = vxpose.xlu0.b32.cont [7/16] 0.0, 128
        %1921 = vxpose.xlu0.b32.cont [8/16] 0.0, 128
        %1922 = vxpose.xlu0.b32.cont [9/16] 0.0, 128
        %1923 = vxpose.xlu0.b32.cont [10/16] 0.0, 128
        %1924 = vxpose.xlu0.b32.cont [11/16] 0.0, 128
        %1925 = vxpose.xlu0.b32.cont [12/16] 0.0, 128
        %1926 = vxpose.xlu0.b32.cont [13/16] 0.0, 128
        %1927 = vxpose.xlu0.b32.cont [14/16] 0.0, 128
        %1928 = vxpose.xlu0.b32.cont [15/16] 0.0, 128
        %1929 = vxpose.xlu0.b32.end [16/16] 0.0, 128
        %v1930 = vpop.trf.xlu0
        %v1931 = vpop.trf.xlu0
        %v1932 = vpop.trf.xlu0
        %v1933 = vpop.trf.xlu0
        %v1934 = vpop.trf.xlu0
        %v1935 = vpop.trf.xlu0
        %v1936 = vpop.trf.xlu0
        %v1937 = vpop.trf.xlu0
        %v1938 = vpop.trf.xlu0
        %v1939 = vpop.trf.xlu0
        %v1940 = vpop.trf.xlu0
        %v1941 = vpop.trf.xlu0
        %v1942 = vpop.trf.xlu0
        %v1943 = vpop.trf.xlu0
        %v1944 = vpop.trf.xlu0
        %v1945 = vpop.trf.xlu0
        %1946 = vxpose.xlu0.b32.start [1/16] %v1847, 128
        %1947 = vxpose.xlu0.b32.cont [2/16] 0.0, 128
        %1948 = vxpose.xlu0.b32.cont [3/16] 0.0, 128
        %1949 = vxpose.xlu0.b32.cont [4/16] 0.0, 128
        %1950 = vxpose.xlu0.b32.cont [5/16] 0.0, 128
        %1951 = vxpose.xlu0.b32.cont [6/16] 0.0, 128
        %1952 = vxpose.xlu0.b32.cont [7/16] 0.0, 128
        %1953 = vxpose.xlu0.b32.cont [8/16] 0.0, 128
        %1954 = vxpose.xlu0.b32.cont [9/16] 0.0, 128
        %1955 = vxpose.xlu0.b32.cont [10/16] 0.0, 128
        %1956 = vxpose.xlu0.b32.cont [11/16] 0.0, 128
        %1957 = vxpose.xlu0.b32.cont [12/16] 0.0, 128
        %1958 = vxpose.xlu0.b32.cont [13/16] 0.0, 128
        %1959 = vxpose.xlu0.b32.cont [14/16] 0.0, 128
        %1960 = vxpose.xlu0.b32.cont [15/16] 0.0, 128
        %1961 = vxpose.xlu0.b32.end [16/16] 0.0, 128
        %v1962 = vpop.trf.xlu0
        %v1963 = vpop.trf.xlu0
        %v1964 = vpop.trf.xlu0
        %v1965 = vpop.trf.xlu0
        %v1966 = vpop.trf.xlu0
        %v1967 = vpop.trf.xlu0
        %v1968 = vpop.trf.xlu0
        %v1969 = vpop.trf.xlu0
        %v1970 = vpop.trf.xlu0
        %v1971 = vpop.trf.xlu0
        %v1972 = vpop.trf.xlu0
        %v1973 = vpop.trf.xlu0
        %v1974 = vpop.trf.xlu0
        %v1975 = vpop.trf.xlu0
        %v1976 = vpop.trf.xlu0
        %v1977 = vpop.trf.xlu0
        %v1978 = vcombine.low %v1866, %v1930
        %v1979 = vcombine.high %v1866, %v1930
        %v1981 = vunpack.c.l.s4 1983009808
        %v1982 = vunpack.c.0.s8 %v1981
        %v1983 = vlaneseq
        %v1984 = vshrl.u32 %v1983, 7
        %v1985 = vsub.s32 %v1982, %v1984
        %v1986 = vrot.slane %v1978, %v1985
        %v1988 = vunpack.c.l.s4 1983009808
        %v1989 = vunpack.c.0.s8 %v1988
        %v1990 = vlaneseq
        %v1991 = vshrl.u32 %v1990, 7
        %v1992 = vsub.s32 %v1989, %v1991
        %v1993 = vrot.slane %v1979, %v1992
        %v1994 = vcombine.low %v1898, %v1962
        %v1995 = vcombine.high %v1898, %v1962
        %v1997 = vunpack.c.l.s4 1983009808
        %v1998 = vunpack.c.0.s8 %v1997
        %v1999 = vlaneseq
        %v2000 = vshrl.u32 %v1999, 7
        %v2001 = vsub.s32 %v1998, %v2000
        %v2002 = vrot.slane %v1994, %v2001
        %v2004 = vunpack.c.l.s4 1983009808
        %v2005 = vunpack.c.0.s8 %v2004
        %v2006 = vlaneseq
        %v2007 = vshrl.u32 %v2006, 7
        %v2008 = vsub.s32 %v2005, %v2007
        %v2009 = vrot.slane %v1995, %v2008
        %v2010 = vcombine.low %v1986, %v2002
        %v2011 = vcombine.high %v1986, %v2002
        %v2013 = vunpack.c.l.s4 1934713408
        %v2014 = vunpack.c.0.s8 %v2013
        %v2015 = vlaneseq
        %v2016 = vshrl.u32 %v2015, 7
        %v2017 = vsub.s32 %v2014, %v2016
        %v2018 = vrot.slane %v2010, %v2017
        %v2020 = vunpack.c.l.s4 1934713408
        %v2021 = vunpack.c.0.s8 %v2020
        %v2022 = vlaneseq
        %v2023 = vshrl.u32 %v2022, 7
        %v2024 = vsub.s32 %v2021, %v2023
        %v2025 = vrot.slane %v2011, %v2024
        %v2026 = vcombine.low %v1993, %v2009
        %v2027 = vcombine.high %v1993, %v2009
        %v2029 = vunpack.c.l.s4 1934713408
        %v2030 = vunpack.c.0.s8 %v2029
        %v2031 = vlaneseq
        %v2032 = vshrl.u32 %v2031, 7
        %v2033 = vsub.s32 %v2030, %v2032
        %v2034 = vrot.slane %v2026, %v2033
        %v2036 = vunpack.c.l.s4 1934713408
        %v2037 = vunpack.c.0.s8 %v2036
        %v2038 = vlaneseq
        %v2039 = vshrl.u32 %v2038, 7
        %v2040 = vsub.s32 %v2037, %v2039
        %v2041 = vrot.slane %v2027, %v2040
        %v2042 = vcombine.high %v2018, 0.0
        %v2043 = vcombine.high %v2025, 0.0
        %v2044 = vcombine.high %v2034, 0.0
        %v2045 = vcombine.high %v2041, 0.0
        %v2046 = vcombine.low %v2018, %v2025
        %v2048 = vunpack.c.l.s4 1983009808
        %v2049 = vunpack.c.0.s8 %v2048
        %v2050 = vlaneseq
        %v2051 = vshrl.u32 %v2050, 7
        %v2052 = vsub.s32 %v2049, %v2051
        %v2053 = vrot.slane %v2046, %v2052
        %v2054 = vcombine.low %v2042, %v2043
        %v2056 = vunpack.c.l.s4 1983009808
        %v2057 = vunpack.c.0.s8 %v2056
        %v2058 = vlaneseq
        %v2059 = vshrl.u32 %v2058, 7
        %v2060 = vsub.s32 %v2057, %v2059
        %v2061 = vrot.slane %v2054, %v2060
        %v2062 = vcombine.low %v2034, %v2041
        %v2064 = vunpack.c.l.s4 1983009808
        %v2065 = vunpack.c.0.s8 %v2064
        %v2066 = vlaneseq
        %v2067 = vshrl.u32 %v2066, 7
        %v2068 = vsub.s32 %v2065, %v2067
        %v2069 = vrot.slane %v2062, %v2068
        %v2070 = vcombine.low %v2044, %v2045
        %v2072 = vunpack.c.l.s4 1983009808
        %v2073 = vunpack.c.0.s8 %v2072
        %v2074 = vlaneseq
        %v2075 = vshrl.u32 %v2074, 7
        %v2076 = vsub.s32 %v2073, %v2075
        %v2077 = vrot.slane %v2070, %v2076
        %v2078 = vcombine.low %v2053, %v2061
        %v2079 = vcombine.high %v2053, %v2061
        %v2081 = vunpack.c.l.s4 1934713408
        %v2082 = vunpack.c.0.s8 %v2081
        %v2083 = vlaneseq
        %v2084 = vshrl.u32 %v2083, 7
        %v2085 = vsub.s32 %v2082, %v2084
        %v2086 = vrot.slane %v2078, %v2085
        %v2088 = vunpack.c.l.s4 1934713408
        %v2089 = vunpack.c.0.s8 %v2088
        %v2090 = vlaneseq
        %v2091 = vshrl.u32 %v2090, 7
        %v2092 = vsub.s32 %v2089, %v2091
        %v2093 = vrot.slane %v2079, %v2092
        %v2094 = vcombine.low %v2069, %v2077
        %v2095 = vcombine.high %v2069, %v2077
        %v2097 = vunpack.c.l.s4 1934713408
        %v2098 = vunpack.c.0.s8 %v2097
        %v2099 = vlaneseq
        %v2100 = vshrl.u32 %v2099, 7
        %v2101 = vsub.s32 %v2098, %v2100
        %v2102 = vrot.slane %v2094, %v2101
        %v2104 = vunpack.c.l.s4 1934713408
        %v2105 = vunpack.c.0.s8 %v2104
        %v2106 = vlaneseq
        %v2107 = vshrl.u32 %v2106, 7
        %v2108 = vsub.s32 %v2105, %v2107
        %v2109 = vrot.slane %v2095, %v2108
        %v2110 = vcombine.low %v2086, %v2102
        %v2111 = vcombine.high %v2086, %v2102
        %v2112 = vcombine.low %v2093, %v2109
        %v2113 = vcombine.high %v2093, %v2109
        %2115 = vrot.lane.b32.xlu0 %v2111, 8
        %v2116 = vpop.permute.xlu0 %2115
        %2119 = vrot.lane.b32.xlu0 %v2112, 16
        %v2120 = vpop.permute.xlu0 %2119
        %2123 = vrot.lane.b32.xlu0 %v2113, 24
        %v2124 = vpop.permute.xlu0 %2123
        %v2126 = vsel %vm1085, %v2110, %v2116
        %vm2127 = vcmask 130048
        %v2128 = vsel %vm2127, %v2126, %v2120
        %vm2129 = vcmask 195584
        %v2130 = vsel %vm2129, %v2128, %v2124
        %v2131 = vld [vmem:[#allocation7] sm:$0xff]
        %v2132 = vld [vmem:[#allocation7 + $0x8] sm:$0xff]
        %v2133 = vld [vmem:[#allocation7 + $0x10] sm:$0xff]
        %v2134 = vld [vmem:[#allocation7 + $0x18] sm:$0xff]
        %v2135 = vld [vmem:[%s10] sm:$0x1]
        %v2137 = vlaneseq
        %v2138 = vshrl.u32 %v2137, 7
        %v2139 = vsub.s32 0, %v2138
        %v2140 = vrot.slane %v2135, %v2139
        %v2143 = vsel %vm815, %v2130, 0
        %2145 = vmatprep.subr.mxu0 0.0
        %2146 = vmatpush1.msra.mxu0 %v2131
        %2147 = vmatprep.subr.mxu0 0.0
        %2148 = vmatpush1.msra.mxu0 %v2132
        %2149 = vmatprep.subr.mxu0 0.0
        %2150 = vmatpush1.msra.mxu0 %v2133
        %2151 = vmatprep.subr.mxu0 0.0
        %2152 = vmatpush1.msra.mxu0 %v2134
        %2153 = vmatprep.subr.mxu0 0.0
        %2154 = vmatpush1.msra.mxu0 0.0
        %2155 = vmatprep.subr.mxu0 0.0
        %2156 = vmatpush1.msra.mxu0 0.0
        %2157 = vmatprep.subr.mxu0 0.0
        %2158 = vmatpush1.msra.mxu0 0.0
        %2159 = vmatprep.subr.mxu0 0.0
        %2160 = vmatpush1.msra.mxu0 0.0
        %2161 = vmatprep.subr.mxu0 0.0
        %2162 = vmatpush1.msra.mxu0 0.0
        %2163 = vmatprep.subr.mxu0 0.0
        %2164 = vmatpush1.msra.mxu0 0.0
        %2165 = vmatprep.subr.mxu0 0.0
        %2166 = vmatpush1.msra.mxu0 0.0
        %2167 = vmatprep.subr.mxu0 0.0
        %2168 = vmatpush1.msra.mxu0 0.0
        %2169 = vmatprep.subr.mxu0 0.0
        %2170 = vmatpush1.msra.mxu0 0.0
        %2171 = vmatprep.subr.mxu0 0.0
        %2172 = vmatpush1.msra.mxu0 0.0
        %2173 = vmatprep.subr.mxu0 0.0
        %2174 = vmatpush1.msra.mxu0 0.0
        %2175 = vmatprep.subr.mxu0 0.0
        %2176 = vmatpush1.msra.mxu0 0.0
        %2177 = vmatprep.subr.mxu0 0.0
        %2178 = vmatpush1.msra.mxu0 0.0
        %2179 = vmatprep.subr.mxu0 0.0
        %2180 = vmatpush1.msra.mxu0 0.0
        %2181 = vmatprep.subr.mxu0 0.0
        %2182 = vmatpush1.msra.mxu0 0.0
        %2183 = vmatprep.subr.mxu0 0.0
        %2184 = vmatpush1.msra.mxu0 0.0
        %2185 = vmatprep.subr.mxu0 0.0
        %2186 = vmatpush1.msra.mxu0 0.0
        %2187 = vmatprep.subr.mxu0 0.0
        %2188 = vmatpush1.msra.mxu0 0.0
        %2189 = vmatprep.subr.mxu0 0.0
        %2190 = vmatpush1.msra.mxu0 0.0
        %2191 = vmatprep.subr.mxu0 0.0
        %2192 = vmatpush1.msra.mxu0 0.0
        %2193 = vmatprep.subr.mxu0 0.0
        %2194 = vmatpush1.msra.mxu0 0.0
        %2195 = vmatprep.subr.mxu0 0.0
        %2196 = vmatpush1.msra.mxu0 0.0
        %2197 = vmatprep.subr.mxu0 0.0
        %2198 = vmatpush1.msra.mxu0 0.0
        %2199 = vmatprep.subr.mxu0 0.0
        %2200 = vmatpush1.msra.mxu0 0.0
        %2201 = vmatprep.subr.mxu0 0.0
        %2202 = vmatpush1.msra.mxu0 0.0
        %2203 = vmatprep.subr.mxu0 0.0
        %2204 = vmatpush1.msra.mxu0 0.0
        %2205 = vmatprep.subr.mxu0 0.0
        %2206 = vmatpush1.msra.mxu0 0.0
        %2207 = vmatprep.subr.mxu0 0.0
        %2208 = vmatpush1.msra.mxu0 0.0
        %2209 = vmatprep.mubr.f32.mxu0 0.0
        %2210 = vmatmul.mubr.f32.gmra.mrb[0].mxu0 %v2143
        %v2211 = vpop.f32.mrb[0].mxu0
        %v2212 = vadd.f32 %v2140, %v2211
        %v2213 = vpop.f32.mrb[0].mxu0
        %2214 = vdwg.mxu0
        %v2215 = vadd.f32 %v812, %v2212
        %v2216 = vld [vmem:[%s11] sm:$0x1]
        %v2217 = vld [vmem:[%s12] sm:$0x1]
        %v2218 = vsel %vm815, %v2215, 0.0
        %2219 = vadd.xlane.f32.xlu0 %v2218
        %v2220 = vpop.xlane.xlu0 %2219
        %v2221 = vmul.f32 %v2220, %v819
        %v2222 = vsub.f32 %v2215, %v2221
        %v2223 = vmul.f32 %v2222, %v2222
        %v2224 = vsel %vm815, %v2223, 0.0
        %2225 = vadd.xlane.f32.xlu0 %v2224
        %v2226 = vpop.xlane.xlu0 %2225
        %v2227 = vmul.f32 %v2226, %v819
        %v2228 = vadd.f32 %v2227, 1e-06
        %v2229 = vrsqrt.pop %v2228
        %v2230 = vmul.f32 %v2222, %v2229
        %v2232 = vlaneseq
        %v2233 = vshrl.u32 %v2232, 7
        %v2234 = vsub.s32 0, %v2233
        %v2235 = vrot.slane %v2216, %v2234
        %v2237 = vmul.f32 %v2230, %v2235
        %v2239 = vlaneseq
        %v2240 = vshrl.u32 %v2239, 7
        %v2241 = vsub.s32 0, %v2240
        %v2242 = vrot.slane %v2217, %v2241
        %v2244 = vadd.f32 %v2237, %v2242
        %v2245 = vld [vmem:[#allocation9] sm:$0xff]
        %v2246 = vld [vmem:[#allocation9 + $0x8] sm:$0xff]
        %v2247 = vld [vmem:[#allocation9 + $0x10] sm:$0xff]
        %v2248 = vld [vmem:[#allocation9 + $0x18] sm:$0xff]
        %v2249 = vld [vmem:[%s14] sm:$0x1]
        %v2251 = vlaneseq
        %v2252 = vshrl.u32 %v2251, 7
        %v2253 = vsub.s32 0, %v2252
        %v2254 = vrot.slane %v2249, %v2253
        %v2257 = vsel %vm815, %v2244, 0
        %2259 = vmatprep.subr.mxu0 0.0
        %2260 = vmatpush1.msra.mxu0 %v2245
        %2261 = vmatprep.subr.mxu0 0.0
        %2262 = vmatpush1.msra.mxu0 %v2246
        %2263 = vmatprep.subr.mxu0 0.0
        %2264 = vmatpush1.msra.mxu0 %v2247
        %2265 = vmatprep.subr.mxu0 0.0
        %2266 = vmatpush1.msra.mxu0 %v2248
        %2267 = vmatprep.subr.mxu0 0.0
        %2268 = vmatpush1.msra.mxu0 0.0
        %2269 = vmatprep.subr.mxu0 0.0
        %2270 = vmatpush1.msra.mxu0 0.0
        %2271 = vmatprep.subr.mxu0 0.0
        %2272 = vmatpush1.msra.mxu0 0.0
        %2273 = vmatprep.subr.mxu0 0.0
        %2274 = vmatpush1.msra.mxu0 0.0
        %2275 = vmatprep.subr.mxu0 0.0
        %2276 = vmatpush1.msra.mxu0 0.0
        %2277 = vmatprep.subr.mxu0 0.0
        %2278 = vmatpush1.msra.mxu0 0.0
        %2279 = vmatprep.subr.mxu0 0.0
        %2280 = vmatpush1.msra.mxu0 0.0
        %2281 = vmatprep.subr.mxu0 0.0
        %2282 = vmatpush1.msra.mxu0 0.0
        %2283 = vmatprep.subr.mxu0 0.0
        %2284 = vmatpush1.msra.mxu0 0.0
        %2285 = vmatprep.subr.mxu0 0.0
        %2286 = vmatpush1.msra.mxu0 0.0
        %2287 = vmatprep.subr.mxu0 0.0
        %2288 = vmatpush1.msra.mxu0 0.0
        %2289 = vmatprep.subr.mxu0 0.0
        %2290 = vmatpush1.msra.mxu0 0.0
        %2291 = vmatprep.subr.mxu0 0.0
        %2292 = vmatpush1.msra.mxu0 0.0
        %2293 = vmatprep.subr.mxu0 0.0
        %2294 = vmatpush1.msra.mxu0 0.0
        %2295 = vmatprep.subr.mxu0 0.0
        %2296 = vmatpush1.msra.mxu0 0.0
        %2297 = vmatprep.subr.mxu0 0.0
        %2298 = vmatpush1.msra.mxu0 0.0
        %2299 = vmatprep.subr.mxu0 0.0
        %2300 = vmatpush1.msra.mxu0 0.0
        %2301 = vmatprep.subr.mxu0 0.0
        %2302 = vmatpush1.msra.mxu0 0.0
        %2303 = vmatprep.subr.mxu0 0.0
        %2304 = vmatpush1.msra.mxu0 0.0
        %2305 = vmatprep.subr.mxu0 0.0
        %2306 = vmatpush1.msra.mxu0 0.0
        %2307 = vmatprep.subr.mxu0 0.0
        %2308 = vmatpush1.msra.mxu0 0.0
        %2309 = vmatprep.subr.mxu0 0.0
        %2310 = vmatpush1.msra.mxu0 0.0
        %2311 = vmatprep.subr.mxu0 0.0
        %2312 = vmatpush1.msra.mxu0 0.0
        %2313 = vmatprep.subr.mxu0 0.0
        %2314 = vmatpush1.msra.mxu0 0.0
        %2315 = vmatprep.subr.mxu0 0.0
        %2316 = vmatpush1.msra.mxu0 0.0
        %2317 = vmatprep.subr.mxu0 0.0
        %2318 = vmatpush1.msra.mxu0 0.0
        %2319 = vmatprep.subr.mxu0 0.0
        %2320 = vmatpush1.msra.mxu0 0.0
        %2321 = vmatprep.subr.mxu0 0.0
        %2322 = vmatpush1.msra.mxu0 0.0
        %2323 = vmatprep.mubr.f32.mxu0 0.0
        %2324 = vmatmul.mubr.f32.gmra.mrb[0].mxu0 %v2257
        %v2325 = vpop.f32.mrb[0].mxu0
        %v2326 = vadd.f32 %v2254, %v2325
        %v2327 = vpop.f32.mrb[0].mxu0
        %2328 = vdwg.mxu0
        %v2329 = vmax.f32 %v2326, 0.0
        %v2330 = vld [vmem:[%s15] sm:$0xff]
        %v2331 = vld [vmem:[%s15 + $0x8] sm:$0xff]
        %v2332 = vld [vmem:[%s15 + $0x10] sm:$0xff]
        %v2333 = vld [vmem:[%s15 + $0x18] sm:$0xff]
        %v2334 = vld [vmem:[%s15 + $0x20] sm:$0xff]
        %v2335 = vld [vmem:[%s15 + $0x28] sm:$0xff]
        %v2336 = vld [vmem:[%s15 + $0x30] sm:$0xff]
        %v2337 = vld [vmem:[%s15 + $0x38] sm:$0xff]
        %v2338 = vld [vmem:[%s16] sm:$0x1]
        %v2340 = vlaneseq
        %v2341 = vshrl.u32 %v2340, 7
        %v2342 = vsub.s32 0, %v2341
        %v2343 = vrot.slane %v2338, %v2342
        %vm2345 = vcmask 523264
        %v2347 = vsel %vm2345, %v2329, 0
        %2349 = vmatprep.subr.mxu0 0.0
        %2350 = vmatpush1.msra.mxu0 %v2330
        %2351 = vmatprep.subr.mxu0 0.0
        %2352 = vmatpush1.msra.mxu0 %v2331
        %2353 = vmatprep.subr.mxu0 0.0
        %2354 = vmatpush1.msra.mxu0 %v2332
        %2355 = vmatprep.subr.mxu0 0.0
        %2356 = vmatpush1.msra.mxu0 %v2333
        %2357 = vmatprep.subr.mxu0 0.0
        %2358 = vmatpush1.msra.mxu0 %v2334
        %2359 = vmatprep.subr.mxu0 0.0
        %2360 = vmatpush1.msra.mxu0 %v2335
        %2361 = vmatprep.subr.mxu0 0.0
        %2362 = vmatpush1.msra.mxu0 %v2336
        %2363 = vmatprep.subr.mxu0 0.0
        %2364 = vmatpush1.msra.mxu0 %v2337
        %2365 = vmatprep.subr.mxu0 0.0
        %2366 = vmatpush1.msra.mxu0 0.0
        %2367 = vmatprep.subr.mxu0 0.0
        %2368 = vmatpush1.msra.mxu0 0.0
        %2369 = vmatprep.subr.mxu0 0.0
        %2370 = vmatpush1.msra.mxu0 0.0
        %2371 = vmatprep.subr.mxu0 0.0
        %2372 = vmatpush1.msra.mxu0 0.0
        %2373 = vmatprep.subr.mxu0 0.0
        %2374 = vmatpush1.msra.mxu0 0.0
        %2375 = vmatprep.subr.mxu0 0.0
        %2376 = vmatpush1.msra.mxu0 0.0
        %2377 = vmatprep.subr.mxu0 0.0
        %2378 = vmatpush1.msra.mxu0 0.0
        %2379 = vmatprep.subr.mxu0 0.0
        %2380 = vmatpush1.msra.mxu0 0.0
        %2381 = vmatprep.subr.mxu0 0.0
        %2382 = vmatpush1.msra.mxu0 0.0
        %2383 = vmatprep.subr.mxu0 0.0
        %2384 = vmatpush1.msra.mxu0 0.0
        %2385 = vmatprep.subr.mxu0 0.0
        %2386 = vmatpush1.msra.mxu0 0.0
        %2387 = vmatprep.subr.mxu0 0.0
        %2388 = vmatpush1.msra.mxu0 0.0
        %2389 = vmatprep.subr.mxu0 0.0
        %2390 = vmatpush1.msra.mxu0 0.0
        %2391 = vmatprep.subr.mxu0 0.0
        %2392 = vmatpush1.msra.mxu0 0.0
        %2393 = vmatprep.subr.mxu0 0.0
        %2394 = vmatpush1.msra.mxu0 0.0
        %2395 = vmatprep.subr.mxu0 0.0
        %2396 = vmatpush1.msra.mxu0 0.0
        %2397 = vmatprep.subr.mxu0 0.0
        %2398 = vmatpush1.msra.mxu0 0.0
        %2399 = vmatprep.subr.mxu0 0.0
        %2400 = vmatpush1.msra.mxu0 0.0
        %2401 = vmatprep.subr.mxu0 0.0
        %2402 = vmatpush1.msra.mxu0 0.0
        %2403 = vmatprep.subr.mxu0 0.0
        %2404 = vmatpush1.msra.mxu0 0.0
        %2405 = vmatprep.subr.mxu0 0.0
        %2406 = vmatpush1.msra.mxu0 0.0
        %2407 = vmatprep.subr.mxu0 0.0
        %2408 = vmatpush1.msra.mxu0 0.0
        %2409 = vmatprep.subr.mxu0 0.0
        %2410 = vmatpush1.msra.mxu0 0.0
        %2411 = vmatprep.subr.mxu0 0.0
        %2412 = vmatpush1.msra.mxu0 0.0
        %2413 = vmatprep.mubr.f32.mxu0 0.0
        %2414 = vmatmul.mubr.f32.gmra.mrb[0].mxu0 %v2347
        %v2415 = vpop.f32.mrb[0].mxu0
        %v2416 = vadd.f32 %v2343, %v2415
        %v2417 = vpop.f32.mrb[0].mxu0
        %2418 = vdwg.mxu0
        %v2419 = vadd.f32 %v2215, %v2416
        %2420 = vst.msk [vmem:[%s606] sm:$0xff] %vm815, %v2419
        %s2421 = sand.u32 %s419, 1
        %s2422 = scalar_lea.sflag [#allocation6], %s2421
        %s2423 = sand.u32 %s419, 1
        %s2424 = smul.addr %s2423, 8
        %s2425 = scalar_lea.vmem [#allocation10], %s2424
        // Predicated region
        $region105: #{tpu_custom_call.1} parent=87 // pred_check
          %p2426 = pneg %p429
        $region106: #{tpu_custom_call.1} parent=87 // pred_check_branch
          %2428 = sbr.rel (%p2426) target = $region108
        $region107: #{tpu_custom_call.1} parent=87 // pred_region
          %s2430 = ssub.s32 128, 128
          %2431 = vsyncadd %s2422, %s2430
          %s2432 = sadd.s32 %s40, %s39
          %s2433 = smul.addr %s2432, 128
          %s2434 = scalar_lea.hbm %s17, %s2433
          %s2436 = sshll.u32 %s2425, 4
          %s2437 = int_to_ptr.vmem [resolvable:$true] %s2436
          %2439 = dma.vmem_to_hbm [thread:$0]  %s2437, 128, %s2434, %s2422
        $region108: #{tpu_custom_call.1} parent=87 // pred_fallthru
          _
      $region88: #{tpu_custom_call.1} parent=5 // pred_fallthru
        _
      %p2440 = scmp.le.s32.totalorder 2, %s30
      // Predicated region
      $region109: #{tpu_custom_call.1} parent=5 // pred_check
        %p2441 = pneg %p2440
      $region110: #{tpu_custom_call.1} parent=5 // pred_check_branch
        %2443 = sbr.rel (%p2441) target = $region112
      $region111: #{tpu_custom_call.1} parent=5 // pred_region
        %s2444 = ssub.s32 %s30, 2
        // Predicated region
        $region113: #{tpu_custom_call.1} parent=111 // pred_check
          %p2445 = pneg %p435
        $region114: #{tpu_custom_call.1} parent=111 // pred_check_branch
          %2447 = sbr.rel (%p2445) target = $region116
        $region115: #{tpu_custom_call.1} parent=111 // pred_region
          %s2448 = sand.u32 %s420, 1
          %s2449 = scalar_lea.sflag [#allocation6], %s2448
          %s2450 = sand.u32 %s420, 1
          %s2451 = smul.addr %s2450, 8
          %s2452 = scalar_lea.vmem [#allocation10], %s2451
          %2453 = dma.done %s2449, 128
        $region116: #{tpu_custom_call.1} parent=111 // pred_fallthru
          _
      $region112: #{tpu_custom_call.1} parent=5 // pred_fallthru
        _
    $region6: #{tpu_custom_call.1} parent=1 // loop_footer
      %s34 = sadd.s32 1, %s30
    $region7: #{tpu_custom_call.1} parent=1 // loop_footer_branch
      %29 = sbr.rel target = $region3
    $region8: #{tpu_custom_call.1} parent=1 // loop_exit
      _
    %2454 = vsyncpa [#allocation5], 1
    %s2455 = scalar_lea.sflag [#allocation5], 1
    %2456 = vsyncpa %s2455, 1
    %2457 = vsyncpa [#allocation8], 1
    %2458 = vsyncpa [#allocation6], 1
    %s2459 = scalar_lea.sflag [#allocation6], 1
    %2460 = vsyncpa %s2459, 1

// kernel: tpu_custom_call.1
$region0: #{tpu_custom_call.1}
  #allocation0 [shape = 'u32[]', space=smem, size = 0x4, offset = 0x4, fixed_abs, tag = 'smem constant byte address 0x4 - core index']
  #allocation1 [shape = 'u32[144,128]{1,0:T(1,128)}', space=vmem, size = 0x12000, scoped, tag = 'internal scratch']
  #allocation2 [shape = 'f32[8,32]{1,0:T(8,128)}', space=vmem, size = 0x1000, scoped, tag = 'scratch operand']
  #allocation3 [shape = 'f32[8,32]{1,0:T(8,128)}', space=vmem, size = 0x1000, scoped, tag = 'scratch operand']
  %s0 = inlined_call_operand.hbm [shape: f32[2,8,32], index: 0, kind: input, shape index: {}]
  %s1 = inlined_call_operand.vmem [shape: f32[1,32], index: 1, kind: input, shape index: {}]
  %s2 = inlined_call_operand.vmem [shape: f32[1,32], index: 2, kind: input, shape index: {}]
  %s3 = inlined_call_operand.vmem [shape: f32[32,32], index: 3, kind: input, shape index: {}]
  %s4 = inlined_call_operand.vmem [shape: f32[1,32], index: 4, kind: input, shape index: {}]
  %s5 = inlined_call_operand.vmem [shape: f32[32,32], index: 5, kind: input, shape index: {}]
  %s6 = inlined_call_operand.vmem [shape: f32[1,32], index: 6, kind: input, shape index: {}]
  %s7 = inlined_call_operand.vmem [shape: f32[32,32], index: 7, kind: input, shape index: {}]
  %s8 = inlined_call_operand.vmem [shape: f32[1,32], index: 8, kind: input, shape index: {}]
  %s9 = inlined_call_operand.hbm [shape: f32[32,32], index: 9, kind: input, shape index: {}]
  %s10 = inlined_call_operand.vmem [shape: f32[1,32], index: 10, kind: input, shape index: {}]
  %s11 = inlined_call_operand.vmem [shape: f32[1,32], index: 11, kind: input, shape index: {}]
  %s12 = inlined_call_operand.vmem [shape: f32[1,32], index: 12, kind: input, shape index: {}]
  %s13 = inlined_call_operand.hbm [shape: f32[32,64], index: 13, kind: input, shape index: {}]
  %s14 = inlined_call_operand.vmem [shape: f32[1,64], index: 14, kind: input, shape index: {}]
  %s15 = inlined_call_operand.vmem [shape: f32[64,32], index: 15, kind: input, shape index: {}]
  %s16 = inlined_call_operand.vmem [shape: f32[1,32], index: 16, kind: input, shape index: {}]
  %s17 = inlined_call_operand.hbm [shape: f32[2,8,32], index: 17, kind: output, shape index: {}]
  %s18 = sld [smem:[#allocation0]]
  $region117: #{tpu_custom_call.1} parent=0
    _
  %s20 = ssub.s32 1, %s18
  %s21 = scalar_select 0, %s20, %s18
  $region1: #{tpu_custom_call.1} parent=0
    #allocation4 [shape = 'u8[8192]{0}', space=vmem, size = 0x2000, scoped, tag = 'input window, operand 0']
    #allocation5 [shape = 's32[2]{0}', space=sflag, size = 0x8, scoped, tag = 'scoped memory for tpu_custom_call.1']
    #allocation6 [shape = 's32[2]{0}', space=sflag, size = 0x8, scoped, tag = 'scoped memory for tpu_custom_call.1']
    #allocation7 [shape = 'u8[16384]{0}', space=vmem, size = 0x4000, scoped, tag = 'input window, operand 9, single buffered']
    #allocation8 [shape = 's32[1]{0}', space=sflag, size = 0x4, scoped, tag = 'scoped memory for tpu_custom_call.1']
    #allocation9 [shape = 'u8[16384]{0}', space=vmem, size = 0x4000, scoped, tag = 'input window, operand 13, single buffered']
    #allocation10 [shape = 'u8[8192]{0}', space=vmem, size = 0x2000, scoped, tag = 'output window, operand 0']
    %22 = vsyncpa [#allocation5], 0
    %s23 = scalar_lea.sflag [#allocation5], 1
    %24 = vsyncpa %s23, 0
    %25 = vsyncpa [#allocation8], 0
    %26 = vsyncpa [#allocation6], 0
    %s27 = scalar_lea.sflag [#allocation6], 1
    %28 = vsyncpa %s27, 0
    loop: start=0, step=1, limit=4
    $region2: #{tpu_custom_call.1} parent=1 // loop_pre_header
      _
    $region3: #{tpu_custom_call.1} parent=1 // loop_header
      %s30 = sphi 0, %s34
      %p31 = scmp.ge.s32.totalorder %s30, 4
      %s37 = sphi 0, %s49
      %s38 = sphi 0, %s45
      %s39 = sphi 0, %s37
      %s40 = sphi 0, %s38
      %s41 = sphi 0, %s39
      %s42 = sphi 0, %s40
      %s52 = sphi 0, %s54
      %s55 = sphi 0, %s52
      %s56 = sphi 0, %s55
      %s72 = sphi 0, %s56
      %s76 = sphi 0, %s76
      %s78 = sphi 0, %s76
      %s79 = sphi 0, %s78
      %s93 = sphi 0, %s79
      %s97 = sphi 0, %s97
      %s99 = sphi 0, %s97
      %s100 = sphi 0, %s99
      %s114 = sphi 0, %s100
      %s118 = sphi 0, %s118
      %s120 = sphi 0, %s118
      %s121 = sphi 0, %s120
      %s135 = sphi 0, %s121
      %s139 = sphi 0, %s139
      %s141 = sphi 0, %s139
      %s142 = sphi 0, %s141
      %s156 = sphi 0, %s142
      %s160 = sphi 0, %s160
      %s162 = sphi 0, %s160
      %s163 = sphi 0, %s162
      %s177 = sphi 0, %s163
      %s181 = sphi 0, %s181
      %s183 = sphi 0, %s181
      %s184 = sphi 0, %s183
      %s198 = sphi 0, %s184
      %s202 = sphi 0, %s202
      %s204 = sphi 0, %s202
      %s205 = sphi 0, %s204
      %s219 = sphi 0, %s205
      %s223 = sphi 0, %s223
      %s225 = sphi 0, %s223
      %s226 = sphi 0, %s225
      %s240 = sphi 0, %s226
      %s244 = sphi 0, %s244
      %s246 = sphi 0, %s244
      %s247 = sphi 0, %s246
      %s261 = sphi 0, %s247
      %s265 = sphi 0, %s265
      %s267 = sphi 0, %s265
      %s268 = sphi 0, %s267
      %s282 = sphi 0, %s268
      %s286 = sphi 0, %s286
      %s288 = sphi 0, %s286
      %s289 = sphi 0, %s288
      %s303 = sphi 0, %s289
      %s307 = sphi 0, %s307
      %s309 = sphi 0, %s307
      %s310 = sphi 0, %s309
      %s324 = sphi 0, %s310
      %s328 = sphi 0, %s328
      %s330 = sphi 0, %s328
      %s331 = sphi 0, %s330
      %s345 = sphi 0, %s331
      %s349 = sphi 0, %s349
      %s351 = sphi 0, %s349
      %s352 = sphi 0, %s351
      %s366 = sphi 0, %s352
      %s370 = sphi 0, %s370
      %s372 = sphi 0, %s370
      %s373 = sphi 0, %s372
      %s387 = sphi 0, %s373
      %s391 = sphi 0, %s391
      %s393 = sphi 0, %s391
      %s394 = sphi 0, %s393
      %s408 = sphi 0, %s394
      %s416 = sphi 0, %s418
      %s419 = sphi 0, %s416
      %s420 = sphi 0, %s419
      %s436 = sphi 0, %s420
    $region4: #{tpu_custom_call.1} parent=1 // loop_header_branch
      %33 = sbr.rel (%p31) target = $region8
    $region5: #{tpu_custom_call.1} parent=1 // loop_body
      %s35 = ssub.s32 %s30, 1
      %s36 = ssub.s32 %s30, 2
      %s43 = sadd.s32 1, %s38
      %p44 = scmp.ge.s32.totalorder %s43, 1
      %s45 = scalar_select %p44, 0, %s43
      %s46 = sadd.s32 1, %s37
      %s47 = scalar_select %p44, %s46, %s37
      %p48 = scmp.ge.s32.totalorder %s47, 2
      %s49 = scalar_select %p48, 0, %s47
      %s50 = ssub.s32 %s37, %s49
      %p51 = scmp.eq.s32.totalorder %s50, 0
      %s53 = sadd.s32 %s52, 1
      %s54 = scalar_select %p51, %s52, %s53
      %p57 = pneg %p51
      %p58 = scmp.eq.s32.totalorder %s30, 1
      %p59 = por %p57, %p58
      %p60 = scmp.ne.s32.totalorder %s52, %s55
      %p61 = scmp.eq.s32.totalorder %s30, 0
      %p62 = por %p60, %p61
      %p63 = scmp.ne.s32.totalorder %s52, %s55
      %p64 = scmp.eq.s32.totalorder %s35, 1
      %p65 = por %p63, %p64
      %p66 = scmp.ne.s32.totalorder %s55, %s56
      %p67 = scmp.eq.s32.totalorder %s35, 0
      %p68 = por %p66, %p67
      %p69 = scmp.ne.s32.totalorder %s55, %s56
      %p70 = scmp.eq.s32.totalorder %s36, 1
      %p71 = por %p69, %p70
      %p73 = scmp.ne.s32.totalorder %s56, %s72
      %p74 = scmp.eq.s32.totalorder %s36, 0
      %p75 = por %p73, %p74
      %s77 = sadd.s32 %s76, 1
      %p80 = scmp.eq.s32.totalorder %s30, 1
      %p81 = scmp.ne.s32.totalorder %s76, %s78
      %p82 = scmp.eq.s32.totalorder %s30, 0
      %p83 = por %p81, %p82
      %p84 = scmp.ne.s32.totalorder %s76, %s78
      %p85 = scmp.eq.s32.totalorder %s35, 1
      %p86 = por %p84, %p85
      %p87 = scmp.ne.s32.totalorder %s78, %s79
      %p88 = scmp.eq.s32.totalorder %s35, 0
      %p89 = por %p87, %p88
      %p90 = scmp.ne.s32.totalorder %s78, %s79
      %p91 = scmp.eq.s32.totalorder %s36, 1
      %p92 = por %p90, %p91
      %p94 = scmp.ne.s32.totalorder %s79, %s93
      %p95 = scmp.eq.s32.totalorder %s36, 0
      %p96 = por %p94, %p95
      %s98 = sadd.s32 %s97, 1
      %p101 = scmp.eq.s32.totalorder %s30, 1
      %p102 = scmp.ne.s32.totalorder %s97, %s99
      %p103 = scmp.eq.s32.totalorder %s30, 0
      %p104 = por %p102, %p103
      %p105 = scmp.ne.s32.totalorder %s97, %s99
      %p106 = scmp.eq.s32.totalorder %s35, 1
      %p107 = por %p105, %p106
      %p108 = scmp.ne.s32.totalorder %s99, %s100
      %p109 = scmp.eq.s32.totalorder %s35, 0
      %p110 = por %p108, %p109
      %p111 = scmp.ne.s32.totalorder %s99, %s100
      %p112 = scmp.eq.s32.totalorder %s36, 1
      %p113 = por %p111, %p112
      %p115 = scmp.ne.s32.totalorder %s100, %s114
      %p116 = scmp.eq.s32.totalorder %s36, 0
      %p117 = por %p115, %p116
      %s119 = sadd.s32 %s118, 1
      %p122 = scmp.eq.s32.totalorder %s30, 1
      %p123 = scmp.ne.s32.totalorder %s118, %s120
      %p124 = scmp.eq.s32.totalorder %s30, 0
      %p125 = por %p123, %p124
      %p126 = scmp.ne.s32.totalorder %s118, %s120
      %p127 = scmp.eq.s32.totalorder %s35, 1
      %p128 = por %p126, %p127
      %p129 = scmp.ne.s32.totalorder %s120, %s121
      %p130 = scmp.eq.s32.totalorder %s35, 0
      %p131 = por %p129, %p130
      %p132 = scmp.ne.s32.totalorder %s120, %s121
      %p133 = scmp.eq.s32.totalorder %s36, 1
      %p134 = por %p132, %p133
      %p136 = scmp.ne.s32.totalorder %s121, %s135
      %p137 = scmp.eq.s32.totalorder %s36, 0
      %p138 = por %p136, %p137
      %s140 = sadd.s32 %s139, 1
      %p143 = scmp.eq.s32.totalorder %s30, 1
      %p144 = scmp.ne.s32.totalorder %s139, %s141
      %p145 = scmp.eq.s32.totalorder %s30, 0
      %p146 = por %p144, %p145
      %p147 = scmp.ne.s32.totalorder %s139, %s141
      %p148 = scmp.eq.s32.totalorder %s35, 1
      %p149 = por %p147, %p148
      %p150 = scmp.ne.s32.totalorder %s141, %s142
      %p151 = scmp.eq.s32.totalorder %s35, 0
      %p152 = por %p150, %p151
      %p153 = scmp.ne.s32.totalorder %s141, %s142
      %p154 = scmp.eq.s32.totalorder %s36, 1
      %p155 = por %p153, %p154
      %p157 = scmp.ne.s32.totalorder %s142, %s156
      %p158 = scmp.eq.s32.totalorder %s36, 0
      %p159 = por %p157, %p158
      %s161 = sadd.s32 %s160, 1
      %p164 = scmp.eq.s32.totalorder %s30, 1
      %p165 = scmp.ne.s32.totalorder %s160, %s162
      %p166 = scmp.eq.s32.totalorder %s30, 0
      %p167 = por %p165, %p166
      %p168 = scmp.ne.s32.totalorder %s160, %s162
      %p169 = scmp.eq.s32.totalorder %s35, 1
      %p170 = por %p168, %p169
      %p171 = scmp.ne.s32.totalorder %s162, %s163
      %p172 = scmp.eq.s32.totalorder %s35, 0
      %p173 = por %p171, %p172
      %p174 = scmp.ne.s32.totalorder %s162, %s163
      %p175 = scmp.eq.s32.totalorder %s36, 1
      %p176 = por %p174, %p175
      %p178 = scmp.ne.s32.totalorder %s163, %s177
      %p179 = scmp.eq.s32.totalorder %s36, 0
      %p180 = por %p178, %p179
      %s182 = sadd.s32 %s181, 1
      %p185 = scmp.eq.s32.totalorder %s30, 1
      %p186 = scmp.ne.s32.totalorder %s181, %s183
      %p187 = scmp.eq.s32.totalorder %s30, 0
      %p188 = por %p186, %p187
      %p189 = scmp.ne.s32.totalorder %s181, %s183
      %p190 = scmp.eq.s32.totalorder %s35, 1
      %p191 = por %p189, %p190
      %p192 = scmp.ne.s32.totalorder %s183, %s184
      %p193 = scmp.eq.s32.totalorder %s35, 0
      %p194 = por %p192, %p193
      %p195 = scmp.ne.s32.totalorder %s183, %s184
      %p196 = scmp.eq.s32.totalorder %s36, 1
      %p197 = por %p195, %p196
      %p199 = scmp.ne.s32.totalorder %s184, %s198
      %p200 = scmp.eq.s32.totalorder %s36, 0
      %p201 = por %p199, %p200
      %s203 = sadd.s32 %s202, 1
      %p206 = scmp.eq.s32.totalorder %s30, 1
      %p207 = scmp.ne.s32.totalorder %s202, %s204
      %p208 = scmp.eq.s32.totalorder %s30, 0
      %p209 = por %p207, %p208
      %p210 = scmp.ne.s32.totalorder %s202, %s204
      %p211 = scmp.eq.s32.totalorder %s35, 1
      %p212 = por %p210, %p211
      %p213 = scmp.ne.s32.totalorder %s204, %s205
      %p214 = scmp.eq.s32.totalorder %s35, 0
      %p215 = por %p213, %p214
      %p216 = scmp.ne.s32.totalorder %s204, %s205
      %p217 = scmp.eq.s32.totalorder %s36, 1
      %p218 = por %p216, %p217
      %p220 = scmp.ne.s32.totalorder %s205, %s219
      %p221 = scmp.eq.s32.totalorder %s36, 0
      %p222 = por %p220, %p221
      %s224 = sadd.s32 %s223, 1
      %p227 = scmp.eq.s32.totalorder %s30, 1
      %p228 = scmp.ne.s32.totalorder %s223, %s225
      %p229 = scmp.eq.s32.totalorder %s30, 0
      %p230 = por %p228, %p229
      %p231 = scmp.ne.s32.totalorder %s223, %s225
      %p232 = scmp.eq.s32.totalorder %s35, 1
      %p233 = por %p231, %p232
      %p234 = scmp.ne.s32.totalorder %s225, %s226
      %p235 = scmp.eq.s32.totalorder %s35, 0
      %p236 = por %p234, %p235
      %p237 = scmp.ne.s32.totalorder %s225, %s226
      %p238 = scmp.eq.s32.totalorder %s36, 1
      %p239 = por %p237, %p238
      %p241 = scmp.ne.s32.totalorder %s226, %s240
      %p242 = scmp.eq.s32.totalorder %s36, 0
      %p243 = por %p241, %p242
      %s245 = sadd.s32 %s244, 1
      %p248 = scmp.eq.s32.totalorder %s30, 1
      %p249 = scmp.ne.s32.totalorder %s244, %s246
      %p250 = scmp.eq.s32.totalorder %s30, 0
      %p251 = por %p249, %p250
      %p252 = scmp.ne.s32.totalorder %s244, %s246
      %p253 = scmp.eq.s32.totalorder %s35, 1
      %p254 = por %p252, %p253
      %p255 = scmp.ne.s32.totalorder %s246, %s247
      %p256 = scmp.eq.s32.totalorder %s35, 0
      %p257 = por %p255, %p256
      %p258 = scmp.ne.s32.totalorder %s246, %s247
      %p259 = scmp.eq.s32.totalorder %s36, 1
      %p260 = por %p258, %p259
      %p262 = scmp.ne.s32.totalorder %s247, %s261
      %p263 = scmp.eq.s32.totalorder %s36, 0
      %p264 = por %p262, %p263
      %s266 = sadd.s32 %s265, 1
      %p269 = scmp.eq.s32.totalorder %s30, 1
      %p270 = scmp.ne.s32.totalorder %s265, %s267
      %p271 = scmp.eq.s32.totalorder %s30, 0
      %p272 = por %p270, %p271
      %p273 = scmp.ne.s32.totalorder %s265, %s267
      %p274 = scmp.eq.s32.totalorder %s35, 1
      %p275 = por %p273, %p274
      %p276 = scmp.ne.s32.totalorder %s267, %s268
      %p277 = scmp.eq.s32.totalorder %s35, 0
      %p278 = por %p276, %p277
      %p279 = scmp.ne.s32.totalorder %s267, %s268
      %p280 = scmp.eq.s32.totalorder %s36, 1
      %p281 = por %p279, %p280
      %p283 = scmp.ne.s32.totalorder %s268, %s282
      %p284 = scmp.eq.s32.totalorder %s36, 0
      %p285 = por %p283, %p284
      %s287 = sadd.s32 %s286, 1
      %p290 = scmp.eq.s32.totalorder %s30, 1
      %p291 = scmp.ne.s32.totalorder %s286, %s288
      %p292 = scmp.eq.s32.totalorder %s30, 0
      %p293 = por %p291, %p292
      %p294 = scmp.ne.s32.totalorder %s286, %s288
      %p295 = scmp.eq.s32.totalorder %s35, 1
      %p296 = por %p294, %p295
      %p297 = scmp.ne.s32.totalorder %s288, %s289
      %p298 = scmp.eq.s32.totalorder %s35, 0
      %p299 = por %p297, %p298
      %p300 = scmp.ne.s32.totalorder %s288, %s289
      %p301 = scmp.eq.s32.totalorder %s36, 1
      %p302 = por %p300, %p301
      %p304 = scmp.ne.s32.totalorder %s289, %s303
      %p305 = scmp.eq.s32.totalorder %s36, 0
      %p306 = por %p304, %p305
      %s308 = sadd.s32 %s307, 1
      %p311 = scmp.eq.s32.totalorder %s30, 1
      %p312 = scmp.ne.s32.totalorder %s307, %s309
      %p313 = scmp.eq.s32.totalorder %s30, 0
      %p314 = por %p312, %p313
      %p315 = scmp.ne.s32.totalorder %s307, %s309
      %p316 = scmp.eq.s32.totalorder %s35, 1
      %p317 = por %p315, %p316
      %p318 = scmp.ne.s32.totalorder %s309, %s310
      %p319 = scmp.eq.s32.totalorder %s35, 0
      %p320 = por %p318, %p319
      %p321 = scmp.ne.s32.totalorder %s309, %s310
      %p322 = scmp.eq.s32.totalorder %s36, 1
      %p323 = por %p321, %p322
      %p325 = scmp.ne.s32.totalorder %s310, %s324
      %p326 = scmp.eq.s32.totalorder %s36, 0
      %p327 = por %p325, %p326
      %s329 = sadd.s32 %s328, 1
      %p332 = scmp.eq.s32.totalorder %s30, 1
      %p333 = scmp.ne.s32.totalorder %s328, %s330
      %p334 = scmp.eq.s32.totalorder %s30, 0
      %p335 = por %p333, %p334
      %p336 = scmp.ne.s32.totalorder %s328, %s330
      %p337 = scmp.eq.s32.totalorder %s35, 1
      %p338 = por %p336, %p337
      %p339 = scmp.ne.s32.totalorder %s330, %s331
      %p340 = scmp.eq.s32.totalorder %s35, 0
      %p341 = por %p339, %p340
      %p342 = scmp.ne.s32.totalorder %s330, %s331
      %p343 = scmp.eq.s32.totalorder %s36, 1
      %p344 = por %p342, %p343
      %p346 = scmp.ne.s32.totalorder %s331, %s345
      %p347 = scmp.eq.s32.totalorder %s36, 0
      %p348 = por %p346, %p347
      %s350 = sadd.s32 %s349, 1
      %p353 = scmp.eq.s32.totalorder %s30, 1
      %p354 = scmp.ne.s32.totalorder %s349, %s351
      %p355 = scmp.eq.s32.totalorder %s30, 0
      %p356 = por %p354, %p355
      %p357 = scmp.ne.s32.totalorder %s349, %s351
      %p358 = scmp.eq.s32.totalorder %s35, 1
      %p359 = por %p357, %p358
      %p360 = scmp.ne.s32.totalorder %s351, %s352
      %p361 = scmp.eq.s32.totalorder %s35, 0
      %p362 = por %p360, %p361
      %p363 = scmp.ne.s32.totalorder %s351, %s352
      %p364 = scmp.eq.s32.totalorder %s36, 1
      %p365 = por %p363, %p364
      %p367 = scmp.ne.s32.totalorder %s352, %s366
      %p368 = scmp.eq.s32.totalorder %s36, 0
      %p369 = por %p367, %p368
      %s371 = sadd.s32 %s370, 1
      %p374 = scmp.eq.s32.totalorder %s30, 1
      %p375 = scmp.ne.s32.totalorder %s370, %s372
      %p376 = scmp.eq.s32.totalorder %s30, 0
      %p377 = por %p375, %p376
      %p378 = scmp.ne.s32.totalorder %s370, %s372
      %p379 = scmp.eq.s32.totalorder %s35, 1
      %p380 = por %p378, %p379
      %p381 = scmp.ne.s32.totalorder %s372, %s373
      %p382 = scmp.eq.s32.totalorder %s35, 0
      %p383 = por %p381, %p382
      %p384 = scmp.ne.s32.totalorder %s372, %s373
      %p385 = scmp.eq.s32.totalorder %s36, 1
      %p386 = por %p384, %p385
      %p388 = scmp.ne.s32.totalorder %s373, %s387
      %p389 = scmp.eq.s32.totalorder %s36, 0
      %p390 = por %p388, %p389
      %s392 = sadd.s32 %s391, 1
      %p395 = scmp.eq.s32.totalorder %s30, 1
      %p396 = scmp.ne.s32.totalorder %s391, %s393
      %p397 = scmp.eq.s32.totalorder %s30, 0
      %p398 = por %p396, %p397
      %p399 = scmp.ne.s32.totalorder %s391, %s393
      %p400 = scmp.eq.s32.totalorder %s35, 1
      %p401 = por %p399, %p400
      %p402 = scmp.ne.s32.totalorder %s393, %s394
      %p403 = scmp.eq.s32.totalorder %s35, 0
      %p404 = por %p402, %p403
      %p405 = scmp.ne.s32.totalorder %s393, %s394
      %p406 = scmp.eq.s32.totalorder %s36, 1
      %p407 = por %p405, %p406
      %p409 = scmp.ne.s32.totalorder %s394, %s408
      %p410 = scmp.eq.s32.totalorder %s36, 0
      %p411 = por %p409, %p410
      %s412 = ssub.s32 %s37, %s49
      %s413 = ssub.s32 %s38, %s45
      %s414 = sor.u32 %s412, %s413
      %p415 = scmp.eq.s32.totalorder %s414, 0
      %s417 = sadd.s32 %s416, 1
      %s418 = scalar_select %p415, %s416, %s417
      %p421 = pneg %p415
      %p422 = scmp.eq.s32.totalorder %s30, 1
      %p423 = por %p421, %p422
      %p424 = scmp.ne.s32.totalorder %s416, %s419
      %p425 = scmp.eq.s32.totalorder %s30, 0
      %p426 = por %p424, %p425
      %p427 = scmp.ne.s32.totalorder %s416, %s419
      %p428 = scmp.eq.s32.totalorder %s35, 1
      %p429 = por %p427, %p428
      %p430 = scmp.ne.s32.totalorder %s419, %s420
      %p431 = scmp.eq.s32.totalorder %s35, 0
      %p432 = por %p430, %p431
      %p433 = scmp.ne.s32.totalorder %s419, %s420
      %p434 = scmp.eq.s32.totalorder %s36, 1
      %p435 = por %p433, %p434
      %p437 = scmp.ne.s32.totalorder %s420, %s436
      %p438 = scmp.eq.s32.totalorder %s36, 0
      %p439 = por %p437, %p438
      %p440 = scmp.le.s32.totalorder 1, %s30
      %p441 = scmp.lt.s32.totalorder %s30, 3
      %p442 = pnand %p440, %p441
      %p443 = pneg %p442
      // Predicated region
      $region9: #{tpu_custom_call.1} parent=5 // pred_check
        _
      $region10: #{tpu_custom_call.1} parent=5 // pred_check_branch
        %445 = sbr.rel (%p442) target = $region12
      $region11: #{tpu_custom_call.1} parent=5 // pred_region
        %s446 = ssub.s32 %s30, 1
        // Predicated region
        $region13: #{tpu_custom_call.1} parent=11 // pred_check
          %p447 = pneg %p89
        $region14: #{tpu_custom_call.1} parent=11 // pred_check_branch
          %449 = sbr.rel (%p447) target = $region16
        $region15: #{tpu_custom_call.1} parent=11 // pred_region
          _
        $region16: #{tpu_custom_call.1} parent=11 // pred_fallthru
          _
        // Predicated region
        $region17: #{tpu_custom_call.1} parent=11 // pred_check
          %p450 = pneg %p110
        $region18: #{tpu_custom_call.1} parent=11 // pred_check_branch
          %452 = sbr.rel (%p450) target = $region20
        $region19: #{tpu_custom_call.1} parent=11 // pred_region
          _
        $region20: #{tpu_custom_call.1} parent=11 // pred_fallthru
          _
        // Predicated region
        $region21: #{tpu_custom_call.1} parent=11 // pred_check
          %p453 = pneg %p131
        $region22: #{tpu_custom_call.1} parent=11 // pred_check_branch
          %455 = sbr.rel (%p453) target = $region24
        $region23: #{tpu_custom_call.1} parent=11 // pred_region
          _
        $region24: #{tpu_custom_call.1} parent=11 // pred_fallthru
          _
        // Predicated region
        $region25: #{tpu_custom_call.1} parent=11 // pred_check
          %p456 = pneg %p152
        $region26: #{tpu_custom_call.1} parent=11 // pred_check_branch
          %458 = sbr.rel (%p456) target = $region28
        $region27: #{tpu_custom_call.1} parent=11 // pred_region
          _
        $region28: #{tpu_custom_call.1} parent=11 // pred_fallthru
          _
        // Predicated region
        $region29: #{tpu_custom_call.1} parent=11 // pred_check
          %p459 = pneg %p173
        $region30: #{tpu_custom_call.1} parent=11 // pred_check_branch
          %461 = sbr.rel (%p459) target = $region32
        $region31: #{tpu_custom_call.1} parent=11 // pred_region
          _
        $region32: #{tpu_custom_call.1} parent=11 // pred_fallthru
          _
        // Predicated region
        $region33: #{tpu_custom_call.1} parent=11 // pred_check
          %p462 = pneg %p194
        $region34: #{tpu_custom_call.1} parent=11 // pred_check_branch
          %464 = sbr.rel (%p462) target = $region36
        $region35: #{tpu_custom_call.1} parent=11 // pred_region
          _
        $region36: #{tpu_custom_call.1} parent=11 // pred_fallthru
          _
        // Predicated region
        $region37: #{tpu_custom_call.1} parent=11 // pred_check
          %p465 = pneg %p215
        $region38: #{tpu_custom_call.1} parent=11 // pred_check_branch
          %467 = sbr.rel (%p465) target = $region40
        $region39: #{tpu_custom_call.1} parent=11 // pred_region
          _
        $region40: #{tpu_custom_call.1} parent=11 // pred_fallthru
          _
        // Predicated region
        $region41: #{tpu_custom_call.1} parent=11 // pred_check
          %p468 = pneg %p236
        $region42: #{tpu_custom_call.1} parent=11 // pred_check_branch
          %470 = sbr.rel (%p468) target = $region44
        $region43: #{tpu_custom_call.1} parent=11 // pred_region
          _
        $region44: #{tpu_custom_call.1} parent=11 // pred_fallthru
          _
        // Predicated region
        $region45: #{tpu_custom_call.1} parent=11 // pred_check
          %p471 = pneg %p257
        $region46: #{tpu_custom_call.1} parent=11 // pred_check_branch
          %473 = sbr.rel (%p471) target = $region48
        $region47: #{tpu_custom_call.1} parent=11 // pred_region
          %s475 = ssub.s32 512, 512
          %476 = vsyncadd [#allocation8], %s475
          %s477 = sshll.u32 [#allocation7], 4
          %s478 = int_to_ptr.vmem [resolvable:$true] %s477
          %483 = dma.hbm_to_vmem [thread:$0]  %s9, 512, %s478, [#allocation8], 128, 128, 8
        $region48: #{tpu_custom_call.1} parent=11 // pred_fallthru
          _
        // Predicated region
        $region49: #{tpu_custom_call.1} parent=11 // pred_check
          %p484 = pneg %p278
        $region50: #{tpu_custom_call.1} parent=11 // pred_check_branch
          %486 = sbr.rel (%p484) target = $region52
        $region51: #{tpu_custom_call.1} parent=11 // pred_region
          _
        $region52: #{tpu_custom_call.1} parent=11 // pred_fallthru
          _
        // Predicated region
        $region53: #{tpu_custom_call.1} parent=11 // pred_check
          %p487 = pneg %p299
        $region54: #{tpu_custom_call.1} parent=11 // pred_check_branch
          %489 = sbr.rel (%p487) target = $region56
        $region55: #{tpu_custom_call.1} parent=11 // pred_region
          _
        $region56: #{tpu_custom_call.1} parent=11 // pred_fallthru
          _
        // Predicated region
        $region57: #{tpu_custom_call.1} parent=11 // pred_check
          %p490 = pneg %p320
        $region58: #{tpu_custom_call.1} parent=11 // pred_check_branch
          %492 = sbr.rel (%p490) target = $region60
        $region59: #{tpu_custom_call.1} parent=11 // pred_region
          _
        $region60: #{tpu_custom_call.1} parent=11 // pred_fallthru
          _
        // Predicated region
        $region61: #{tpu_custom_call.1} parent=11 // pred_check
          %p493 = pneg %p341
        $region62: #{tpu_custom_call.1} parent=11 // pred_check_branch
          %495 = sbr.rel (%p493) target = $region64
        $region63: #{tpu_custom_call.1} parent=11 // pred_region
          %s497 = ssub.s32 512, 512
          %498 = vsyncadd [#allocation8], %s497
          %s499 = sshll.u32 [#allocation9], 4
          %s500 = int_to_ptr.vmem [resolvable:$true] %s499
          %505 = dma.hbm_to_vmem [thread:$0]  %s13, 512, %s500, [#allocation8], 128, 128, 8
        $region64: #{tpu_custom_call.1} parent=11 // pred_fallthru
          _
        // Predicated region
        $region65: #{tpu_custom_call.1} parent=11 // pred_check
          %p506 = pneg %p362
        $region66: #{tpu_custom_call.1} parent=11 // pred_check_branch
          %508 = sbr.rel (%p506) target = $region68
        $region67: #{tpu_custom_call.1} parent=11 // pred_region
          _
        $region68: #{tpu_custom_call.1} parent=11 // pred_fallthru
          _
        // Predicated region
        $region69: #{tpu_custom_call.1} parent=11 // pred_check
          %p509 = pneg %p383
        $region70: #{tpu_custom_call.1} parent=11 // pred_check_branch
          %511 = sbr.rel (%p509) target = $region72
        $region71: #{tpu_custom_call.1} parent=11 // pred_region
          _
        $region72: #{tpu_custom_call.1} parent=11 // pred_fallthru
          _
        // Predicated region
        $region73: #{tpu_custom_call.1} parent=11 // pred_check
          %p512 = pneg %p404
        $region74: #{tpu_custom_call.1} parent=11 // pred_check_branch
          %514 = sbr.rel (%p512) target = $region76
        $region75: #{tpu_custom_call.1} parent=11 // pred_region
          _
        $region76: #{tpu_custom_call.1} parent=11 // pred_fallthru
          _
      $region12: #{tpu_custom_call.1} parent=5 // pred_fallthru
        _
      %p515 = scmp.lt.s32.totalorder %s30, 2
      // Predicated region
      $region77: #{tpu_custom_call.1} parent=5 // pred_check
        %p516 = pneg %p515
      $region78: #{tpu_custom_call.1} parent=5 // pred_check_branch
        %518 = sbr.rel (%p516) target = $region80
      $region79: #{tpu_custom_call.1} parent=5 // pred_region
        // Predicated region
        $region81: #{tpu_custom_call.1} parent=79 // pred_check
          %p519 = pneg %p62
        $region82: #{tpu_custom_call.1} parent=79 // pred_check_branch
          %521 = sbr.rel (%p519) target = $region84
        $region83: #{tpu_custom_call.1} parent=79 // pred_region
          %s522 = sand.u32 %s52, 1
          %s523 = scalar_lea.sflag [#allocation5], %s522
          %s524 = sand.u32 %s52, 1
          %s525 = smul.addr %s524, 8
          %s526 = scalar_lea.vmem [#allocation4], %s525
          %s528 = ssub.s32 128, 128
          %529 = vsyncadd %s523, %s528
          %s530 = smul.addr %s37, 128
          %s531 = scalar_lea.hbm %s0, %s530
          %s533 = sshll.u32 %s526, 4
          %s534 = int_to_ptr.vmem [resolvable:$true] %s533
          %536 = dma.hbm_to_vmem [thread:$0]  %s531, 128, %s534, %s523
        $region84: #{tpu_custom_call.1} parent=79 // pred_fallthru
          _
      $region80: #{tpu_custom_call.1} parent=5 // pred_fallthru
        _
      %p537 = scmp.le.s32.totalorder 1, %s30
      %p538 = scmp.lt.s32.totalorder %s30, 3
      %p539 = pnand %p537, %p538
      %p540 = pneg %p539
      // Predicated region
      $region85: #{tpu_custom_call.1} parent=5 // pred_check
        _
      $region86: #{tpu_custom_call.1} parent=5 // pred_check_branch
        %542 = sbr.rel (%p539) target = $region88
      $region87: #{tpu_custom_call.1} parent=5 // pred_region
        %s543 = ssub.s32 %s30, 1
        %s544 = sand.u32 %s55, 1
        %s545 = scalar_lea.sflag [#allocation5], %s544
        %s546 = sand.u32 %s55, 1
        %s547 = smul.addr %s546, 8
        %s548 = scalar_lea.vmem [#allocation4], %s547
        // Predicated region
        $region89: #{tpu_custom_call.1} parent=87 // pred_check
          %p549 = pneg %p68
        $region90: #{tpu_custom_call.1} parent=87 // pred_check_branch
          %551 = sbr.rel (%p549) target = $region92
        $region91: #{tpu_custom_call.1} parent=87 // pred_region
          %552 = dma.done %s545, 128
        $region92: #{tpu_custom_call.1} parent=87 // pred_fallthru
          _
        // Predicated region
        $region93: #{tpu_custom_call.1} parent=87 // pred_check
          %p553 = pneg %p257
        $region94: #{tpu_custom_call.1} parent=87 // pred_check_branch
          %555 = sbr.rel (%p553) target = $region96
        $region95: #{tpu_custom_call.1} parent=87 // pred_region
          %556 = dma.done [#allocation8], 512
        $region96: #{tpu_custom_call.1} parent=87 // pred_fallthru
          _
        // Predicated region
        $region97: #{tpu_custom_call.1} parent=87 // pred_check
          %p557 = pneg %p341
        $region98: #{tpu_custom_call.1} parent=87 // pred_check_branch
          %559 = sbr.rel (%p557) target = $region100
        $region99: #{tpu_custom_call.1} parent=87 // pred_region
          %560 = dma.done [#allocation8], 512
        $region100: #{tpu_custom_call.1} parent=87 // pred_fallthru
          _
        %s561 = sand.u32 %s55, 1
        %s562 = scalar_lea.sflag [#allocation5], %s561
        %s563 = sand.u32 %s55, 1
        %s564 = smul.addr %s563, 8
        %s565 = scalar_lea.vmem [#allocation4], %s564
        %p566 = pneg %p68
        %p567 = pneg %p65
        %p568 = pneg %p89
        %p569 = pneg %p86
        %p570 = pneg %p110
        %p571 = pneg %p107
        %p572 = pneg %p131
        %p573 = pneg %p128
        %p574 = pneg %p152
        %p575 = pneg %p149
        %p576 = pneg %p173
        %p577 = pneg %p170
        %p578 = pneg %p194
        %p579 = pneg %p191
        %p580 = pneg %p215
        %p581 = pneg %p212
        %p582 = pneg %p236
        %p583 = pneg %p233
        %p584 = pneg %p257
        %p585 = pneg %p254
        %p586 = pneg %p278
        %p587 = pneg %p275
        %p588 = pneg %p299
        %p589 = pneg %p296
        %p590 = pneg %p320
        %p591 = pneg %p317
        %p592 = pneg %p341
        %p593 = pneg %p338
        %p594 = pneg %p362
        %p595 = pneg %p359
        %p596 = pneg %p383
        %p597 = pneg %p380
        %p598 = pneg %p404
        %p599 = pneg %p401
        %p600 = pneg %p432
        %p601 = pneg %p429
        %s602 = sand.u32 %s419, 1
        %s603 = scalar_lea.sflag [#allocation6], %s602
        %s604 = sand.u32 %s419, 1
        %s605 = smul.addr %s604, 8
        %s606 = scalar_lea.vmem [#allocation10], %s605
        %p607 = scmp.eq.s32.totalorder %s40, 0
        // Predicated region
        $region101: #{tpu_custom_call.1} parent=87 // pred_check
          %p608 = pneg %p607
        $region102: #{tpu_custom_call.1} parent=87 // pred_check_branch
          %610 = sbr.rel (%p608) target = $region104
        $region103: #{tpu_custom_call.1} parent=87 // pred_region
          %v611 = vld [vmem:[%s548] sm:$0xff]
          %v612 = vld [vmem:[%s1] sm:$0x1]
          %v613 = vld [vmem:[%s2] sm:$0x1]
          %vm614 = vcmask 261120
          %v615 = vsel %vm614, %v611, 0.0
          %616 = vadd.xlane.f32.xlu0 %v615
          %v617 = vpop.xlane.xlu0 %616
          %v618 = vrcp.pop 32.0
          %v619 = vmul.f32 %v617, %v618
          %v620 = vsub.f32 %v611, %v619
          %v621 = vmul.f32 %v620, %v620
          %v622 = vsel %vm614, %v621, 0.0
          %623 = vadd.xlane.f32.xlu0 %v622
          %v624 = vpop.xlane.xlu0 %623
          %v625 = vmul.f32 %v624, %v618
          %v626 = vadd.f32 %v625, 1e-06
          %v627 = vrsqrt.pop %v626
          %v628 = vmul.f32 %v620, %v627
          %v630 = vlaneseq
          %v631 = vshrl.u32 %v630, 7
          %v632 = vsub.s32 0, %v631
          %v633 = vrot.slane %v612, %v632
          %v635 = vmul.f32 %v628, %v633
          %v637 = vlaneseq
          %v638 = vshrl.u32 %v637, 7
          %v639 = vsub.s32 0, %v638
          %v640 = vrot.slane %v613, %v639
          %v642 = vadd.f32 %v635, %v640
          %v643 = vld [vmem:[%s5] sm:$0xff]
          %v644 = vld [vmem:[%s5 + $0x8] sm:$0xff]
          %v645 = vld [vmem:[%s5 + $0x10] sm:$0xff]
          %v646 = vld [vmem:[%s5 + $0x18] sm:$0xff]
          %v647 = vld [vmem:[%s6] sm:$0x1]
          %v649 = vlaneseq
          %v650 = vshrl.u32 %v649, 7
          %v651 = vsub.s32 0, %v650
          %v652 = vrot.slane %v647, %v651
          %v655 = vsel %vm614, %v642, 0
          %657 = vmatprep.subr.mxu0 0.0
          %658 = vmatpush1.msra.mxu0 %v643
          %659 = vmatprep.subr.mxu0 0.0
          %660 = vmatpush1.msra.mxu0 %v644
          %661 = vmatprep.subr.mxu0 0.0
          %662 = vmatpush1.msra.mxu0 %v645
          %663 = vmatprep.subr.mxu0 0.0
          %664 = vmatpush1.msra.mxu0 %v646
          %665 = vmatprep.subr.mxu0 0.0
          %666 = vmatpush1.msra.mxu0 0.0
          %667 = vmatprep.subr.mxu0 0.0
          %668 = vmatpush1.msra.mxu0 0.0
          %669 = vmatprep.subr.mxu0 0.0
          %670 = vmatpush1.msra.mxu0 0.0
          %671 = vmatprep.subr.mxu0 0.0
          %672 = vmatpush1.msra.mxu0 0.0
          %673 = vmatprep.subr.mxu0 0.0
          %674 = vmatpush1.msra.mxu0 0.0
          %675 = vmatprep.subr.mxu0 0.0
          %676 = vmatpush1.msra.mxu0 0.0
          %677 = vmatprep.subr.mxu0 0.0
          %678 = vmatpush1.msra.mxu0 0.0
          %679 = vmatprep.subr.mxu0 0.0
          %680 = vmatpush1.msra.mxu0 0.0
          %681 = vmatprep.subr.mxu0 0.0
          %682 = vmatpush1.msra.mxu0 0.0
          %683 = vmatprep.subr.mxu0 0.0
          %684 = vmatpush1.msra.mxu0 0.0
          %685 = vmatprep.subr.mxu0 0.0
          %686 = vmatpush1.msra.mxu0 0.0
          %687 = vmatprep.subr.mxu0 0.0
          %688 = vmatpush1.msra.mxu0 0.0
          %689 = vmatprep.subr.mxu0 0.0
          %690 = vmatpush1.msra.mxu0 0.0
          %691 = vmatprep.subr.mxu0 0.0
          %692 = vmatpush1.msra.mxu0 0.0
          %693 = vmatprep.subr.mxu0 0.0
          %694 = vmatpush1.msra.mxu0 0.0
          %695 = vmatprep.subr.mxu0 0.0
          %696 = vmatpush1.msra.mxu0 0.0
          %697 = vmatprep.subr.mxu0 0.0
          %698 = vmatpush1.msra.mxu0 0.0
          %699 = vmatprep.subr.mxu0 0.0
          %700 = vmatpush1.msra.mxu0 0.0
          %701 = vmatprep.subr.mxu0 0.0
          %702 = vmatpush1.msra.mxu0 0.0
          %703 = vmatprep.subr.mxu0 0.0
          %704 = vmatpush1.msra.mxu0 0.0
          %705 = vmatprep.subr.mxu0 0.0
          %706 = vmatpush1.msra.mxu0 0.0
          %707 = vmatprep.subr.mxu0 0.0
          %708 = vmatpush1.msra.mxu0 0.0
          %709 = vmatprep.subr.mxu0 0.0
          %710 = vmatpush1.msra.mxu0 0.0
          %711 = vmatprep.subr.mxu0 0.0
          %712 = vmatpush1.msra.mxu0 0.0
          %713 = vmatprep.subr.mxu0 0.0
          %714 = vmatpush1.msra.mxu0 0.0
          %715 = vmatprep.subr.mxu0 0.0
          %716 = vmatpush1.msra.mxu0 0.0
          %717 = vmatprep.subr.mxu0 0.0
          %718 = vmatpush1.msra.mxu0 0.0
          %719 = vmatprep.subr.mxu0 0.0
          %720 = vmatpush1.msra.mxu0 0.0
          %721 = vmatprep.mubr.f32.mxu0 0.0
          %722 = vmatmul.mubr.f32.gmra.mrb[0].mxu0 %v655
          %v723 = vpop.f32.mrb[0].mxu0
          %v724 = vadd.f32 %v652, %v723
          %v725 = vpop.f32.mrb[0].mxu0
          %726 = vdwg.mxu0
          %v727 = vld [vmem:[%s7] sm:$0xff]
          %v728 = vld [vmem:[%s7 + $0x8] sm:$0xff]
          %v729 = vld [vmem:[%s7 + $0x10] sm:$0xff]
          %v730 = vld [vmem:[%s7 + $0x18] sm:$0xff]
          %v731 = vld [vmem:[%s8] sm:$0x1]
          %v733 = vlaneseq
          %v734 = vshrl.u32 %v733, 7
          %v735 = vsub.s32 0, %v734
          %v736 = vrot.slane %v731, %v735
          %738 = vmatprep.subr.mxu0 0.0
          %739 = vmatpush1.msra.mxu0 %v727
          %740 = vmatprep.subr.mxu0 0.0
          %741 = vmatpush1.msra.mxu0 %v728
          %742 = vmatprep.subr.mxu0 0.0
          %743 = vmatpush1.msra.mxu0 %v729
          %744 = vmatprep.subr.mxu0 0.0
          %745 = vmatpush1.msra.mxu0 %v730
          %746 = vmatprep.subr.mxu0 0.0
          %747 = vmatpush1.msra.mxu0 0.0
          %748 = vmatprep.subr.mxu0 0.0
          %749 = vmatpush1.msra.mxu0 0.0
          %750 = vmatprep.subr.mxu0 0.0
          %751 = vmatpush1.msra.mxu0 0.0
          %752 = vmatprep.subr.mxu0 0.0
          %753 = vmatpush1.msra.mxu0 0.0
          %754 = vmatprep.subr.mxu0 0.0
          %755 = vmatpush1.msra.mxu0 0.0
          %756 = vmatprep.subr.mxu0 0.0
          %757 = vmatpush1.msra.mxu0 0.0
          %758 = vmatprep.subr.mxu0 0.0
          %759 = vmatpush1.msra.mxu0 0.0
          %760 = vmatprep.subr.mxu0 0.0
          %761 = vmatpush1.msra.mxu0 0.0
          %762 = vmatprep.subr.mxu0 0.0
          %763 = vmatpush1.msra.mxu0 0.0
          %764 = vmatprep.subr.mxu0 0.0
          %765 = vmatpush1.msra.mxu0 0.0
          %766 = vmatprep.subr.mxu0 0.0
          %767 = vmatpush1.msra.mxu0 0.0
          %768 = vmatprep.subr.mxu0 0.0
          %769 = vmatpush1.msra.mxu0 0.0
          %770 = vmatprep.subr.mxu0 0.0
          %771 = vmatpush1.msra.mxu0 0.0
          %772 = vmatprep.subr.mxu0 0.0
          %773 = vmatpush1.msra.mxu0 0.0
          %774 = vmatprep.subr.mxu0 0.0
          %775 = vmatpush1.msra.mxu0 0.0
          %776 = vmatprep.subr.mxu0 0.0
          %777 = vmatpush1.msra.mxu0 0.0
          %778 = vmatprep.subr.mxu0 0.0
          %779 = vmatpush1.msra.mxu0 0.0
          %780 = vmatprep.subr.mxu0 0.0
          %781 = vmatpush1.msra.mxu0 0.0
          %782 = vmatprep.subr.mxu0 0.0
          %783 = vmatpush1.msra.mxu0 0.0
          %784 = vmatprep.subr.mxu0 0.0
          %785 = vmatpush1.msra.mxu0 0.0
          %786 = vmatprep.subr.mxu0 0.0
          %787 = vmatpush1.msra.mxu0 0.0
          %788 = vmatprep.subr.mxu0 0.0
          %789 = vmatpush1.msra.mxu0 0.0
          %790 = vmatprep.subr.mxu0 0.0
          %791 = vmatpush1.msra.mxu0 0.0
          %792 = vmatprep.subr.mxu0 0.0
          %793 = vmatpush1.msra.mxu0 0.0
          %794 = vmatprep.subr.mxu0 0.0
          %795 = vmatpush1.msra.mxu0 0.0
          %796 = vmatprep.subr.mxu0 0.0
          %797 = vmatpush1.msra.mxu0 0.0
          %798 = vmatprep.subr.mxu0 0.0
          %799 = vmatpush1.msra.mxu0 0.0
          %800 = vmatprep.subr.mxu0 0.0
          %801 = vmatpush1.msra.mxu0 0.0
          %802 = vmatprep.mubr.f32.mxu0 0.0
          %803 = vmatmul.mubr.f32.gmra.mrb[0].mxu0 %v655
          %v804 = vpop.f32.mrb[0].mxu0
          %v805 = vadd.f32 %v736, %v804
          %v806 = vpop.f32.mrb[0].mxu0
          %807 = vdwg.mxu0
          %808 = vst.msk [vmem:[#allocation2] sm:$0xff] %vm614, %v724
          %809 = vst.msk [vmem:[#allocation3] sm:$0xff] %vm614, %v805
        $region104: #{tpu_custom_call.1} parent=87 // pred_fallthru
          _
        %s810 = smul.u32 %s40, 8
        %s811 = scalar_lea.vmem %s548, %s810 [#allocation4]
        %v812 = vld [vmem:[%s811] sm:$0xff]
        %v813 = vld [vmem:[%s1] sm:$0x1]
        %v814 = vld [vmem:[%s2] sm:$0x1]
        %vm815 = vcmask 261120
        %v816 = vsel %vm815, %v812, 0.0
        %817 = vadd.xlane.f32.xlu0 %v816
        %v818 = vpop.xlane.xlu0 %817
        %v819 = vrcp.pop 32.0
        %v820 = vmul.f32 %v818, %v819
        %v821 = vsub.f32 %v812, %v820
        %v822 = vmul.f32 %v821, %v821
        %v823 = vsel %vm815, %v822, 0.0
        %824 = vadd.xlane.f32.xlu0 %v823
        %v825 = vpop.xlane.xlu0 %824
        %v826 = vmul.f32 %v825, %v819
        %v827 = vadd.f32 %v826, 1e-06
        %v828 = vrsqrt.pop %v827
        %v829 = vmul.f32 %v821, %v828
        %v831 = vlaneseq
        %v832 = vshrl.u32 %v831, 7
        %v833 = vsub.s32 0, %v832
        %v834 = vrot.slane %v813, %v833
        %v836 = vmul.f32 %v829, %v834
        %v838 = vlaneseq
        %v839 = vshrl.u32 %v838, 7
        %v840 = vsub.s32 0, %v839
        %v841 = vrot.slane %v814, %v840
        %v843 = vadd.f32 %v836, %v841
        %v844 = vld [vmem:[%s3] sm:$0xff]
        %v845 = vld [vmem:[%s3 + $0x8] sm:$0xff]
        %v846 = vld [vmem:[%s3 + $0x10] sm:$0xff]
        %v847 = vld [vmem:[%s3 + $0x18] sm:$0xff]
        %v848 = vld [vmem:[%s4] sm:$0x1]
        %v850 = vlaneseq
        %v851 = vshrl.u32 %v850, 7
        %v852 = vsub.s32 0, %v851
        %v853 = vrot.slane %v848, %v852
        %v856 = vsel %vm815, %v843, 0
        %858 = vmatprep.subr.mxu0 0.0
        %859 = vmatpush1.msra.mxu0 %v844
        %860 = vmatprep.subr.mxu0 0.0
        %861 = vmatpush1.msra.mxu0 %v845
        %862 = vmatprep.subr.mxu0 0.0
        %863 = vmatpush1.msra.mxu0 %v846
        %864 = vmatprep.subr.mxu0 0.0
        %865 = vmatpush1.msra.mxu0 %v847
        %866 = vmatprep.subr.mxu0 0.0
        %867 = vmatpush1.msra.mxu0 0.0
        %868 = vmatprep.subr.mxu0 0.0
        %869 = vmatpush1.msra.mxu0 0.0
        %870 = vmatprep.subr.mxu0 0.0
        %871 = vmatpush1.msra.mxu0 0.0
        %872 = vmatprep.subr.mxu0 0.0
        %873 = vmatpush1.msra.mxu0 0.0
        %874 = vmatprep.subr.mxu0 0.0
        %875 = vmatpush1.msra.mxu0 0.0
        %876 = vmatprep.subr.mxu0 0.0
        %877 = vmatpush1.msra.mxu0 0.0
        %878 = vmatprep.subr.mxu0 0.0
        %879 = vmatpush1.msra.mxu0 0.0
        %880 = vmatprep.subr.mxu0 0.0
        %881 = vmatpush1.msra.mxu0 0.0
        %882 = vmatprep.subr.mxu0 0.0
        %883 = vmatpush1.msra.mxu0 0.0
        %884 = vmatprep.subr.mxu0 0.0
        %885 = vmatpush1.msra.mxu0 0.0
        %886 = vmatprep.subr.mxu0 0.0
        %887 = vmatpush1.msra.mxu0 0.0
        %888 = vmatprep.subr.mxu0 0.0
        %889 = vmatpush1.msra.mxu0 0.0
        %890 = vmatprep.subr.mxu0 0.0
        %891 = vmatpush1.msra.mxu0 0.0
        %892 = vmatprep.subr.mxu0 0.0
        %893 = vmatpush1.msra.mxu0 0.0
        %894 = vmatprep.subr.mxu0 0.0
        %895 = vmatpush1.msra.mxu0 0.0
        %896 = vmatprep.subr.mxu0 0.0
        %897 = vmatpush1.msra.mxu0 0.0
        %898 = vmatprep.subr.mxu0 0.0
        %899 = vmatpush1.msra.mxu0 0.0
        %900 = vmatprep.subr.mxu0 0.0
        %901 = vmatpush1.msra.mxu0 0.0
        %902 = vmatprep.subr.mxu0 0.0
        %903 = vmatpush1.msra.mxu0 0.0
        %904 = vmatprep.subr.mxu0 0.0
        %905 = vmatpush1.msra.mxu0 0.0
        %906 = vmatprep.subr.mxu0 0.0
        %907 = vmatpush1.msra.mxu0 0.0
        %908 = vmatprep.subr.mxu0 0.0
        %909 = vmatpush1.msra.mxu0 0.0
        %910 = vmatprep.subr.mxu0 0.0
        %911 = vmatpush1.msra.mxu0 0.0
        %912 = vmatprep.subr.mxu0 0.0
        %913 = vmatpush1.msra.mxu0 0.0
        %914 = vmatprep.subr.mxu0 0.0
        %915 = vmatpush1.msra.mxu0 0.0
        %916 = vmatprep.subr.mxu0 0.0
        %917 = vmatpush1.msra.mxu0 0.0
        %918 = vmatprep.subr.mxu0 0.0
        %919 = vmatpush1.msra.mxu0 0.0
        %920 = vmatprep.subr.mxu0 0.0
        %921 = vmatpush1.msra.mxu0 0.0
        %922 = vmatprep.mubr.f32.mxu0 0.0
        %923 = vmatmul.mubr.f32.gmra.mrb[0].mxu0 %v856
        %v924 = vpop.f32.mrb[0].mxu0
        %v925 = vadd.f32 %v853, %v924
        %v926 = vpop.f32.mrb[0].mxu0
        %927 = vdwg.mxu0
        %929 = vrot.lane.b32.xlu0 %v925, 120
        %v930 = vpop.permute.xlu0 %929
        %931 = vrot.lane.b32.xlu0 %v925, 112
        %v932 = vpop.permute.xlu0 %931
        %933 = vrot.lane.b32.xlu0 %v925, 104
        %v934 = vpop.permute.xlu0 %933
        %v935 = vld [vmem:[#allocation2] sm:$0xff]
        %937 = vrot.lane.b32.xlu0 %v935, 120
        %v938 = vpop.permute.xlu0 %937
        %940 = vrot.lane.b32.xlu0 %v935, 112
        %v941 = vpop.permute.xlu0 %940
        %943 = vrot.lane.b32.xlu0 %v935, 104
        %v944 = vpop.permute.xlu0 %943
        %v946 = vld [vmem:[#allocation3] sm:$0xff]
        %948 = vrot.lane.b32.xlu0 %v946, 120
        %v949 = vpop.permute.xlu0 %948
        %951 = vrot.lane.b32.xlu0 %v946, 112
        %v952 = vpop.permute.xlu0 %951
        %954 = vrot.lane.b32.xlu0 %v946, 104
        %v955 = vpop.permute.xlu0 %954
        %957 = vxpose.xlu0.b32.start [1/16] %v935, 128
        %958 = vxpose.xlu0.b32.cont [2/16] 0.0, 128
        %959 = vxpose.xlu0.b32.cont [3/16] 0.0, 128
        %960 = vxpose.xlu0.b32.cont [4/16] 0.0, 128
        %961 = vxpose.xlu0.b32.cont [5/16] 0.0, 128
        %962 = vxpose.xlu0.b32.cont [6/16] 0.0, 128
        %963 = vxpose.xlu0.b32.cont [7/16] 0.0, 128
        %964 = vxpose.xlu0.b32.cont [8/16] 0.0, 128
        %965 = vxpose.xlu0.b32.cont [9/16] 0.0, 128
        %966 = vxpose.xlu0.b32.cont [10/16] 0.0, 128
        %967 = vxpose.xlu0.b32.cont [11/16] 0.0, 128
        %968 = vxpose.xlu0.b32.cont [12/16] 0.0, 128
        %969 = vxpose.xlu0.b32.cont [13/16] 0.0, 128
        %970 = vxpose.xlu0.b32.cont [14/16] 0.0, 128
        %971 = vxpose.xlu0.b32.cont [15/16] 0.0, 128
        %972 = vxpose.xlu0.b32.end [16/16] 0.0, 128
        %v973 = vpop.trf.xlu0
        %v974 = vpop.trf.xlu0
        %v975 = vpop.trf.xlu0
        %v976 = vpop.trf.xlu0
        %v977 = vpop.trf.xlu0
        %v978 = vpop.trf.xlu0
        %v979 = vpop.trf.xlu0
        %v980 = vpop.trf.xlu0
        %v981 = vpop.trf.xlu0
        %v982 = vpop.trf.xlu0
        %v983 = vpop.trf.xlu0
        %v984 = vpop.trf.xlu0
        %v985 = vpop.trf.xlu0
        %v986 = vpop.trf.xlu0
        %v987 = vpop.trf.xlu0
        %v988 = vpop.trf.xlu0
        %989 = vxpose.xlu0.b32.start [1/16] %v938, 128
        %990 = vxpose.xlu0.b32.cont [2/16] 0.0, 128
        %991 = vxpose.xlu0.b32.cont [3/16] 0.0, 128
        %992 = vxpose.xlu0.b32.cont [4/16] 0.0, 128
        %993 = vxpose.xlu0.b32.cont [5/16] 0.0, 128
        %994 = vxpose.xlu0.b32.cont [6/16] 0.0, 128
        %995 = vxpose.xlu0.b32.cont [7/16] 0.0, 128
        %996 = vxpose.xlu0.b32.cont [8/16] 0.0, 128
        %997 = vxpose.xlu0.b32.cont [9/16] 0.0, 128
        %998 = vxpose.xlu0.b32.cont [10/16] 0.0, 128
        %999 = vxpose.xlu0.b32.cont [11/16] 0.0, 128
        %1000 = vxpose.xlu0.b32.cont [12/16] 0.0, 128
        %1001 = vxpose.xlu0.b32.cont [13/16] 0.0, 128
        %1002 = vxpose.xlu0.b32.cont [14/16] 0.0, 128
        %1003 = vxpose.xlu0.b32.cont [15/16] 0.0, 128
        %1004 = vxpose.xlu0.b32.end [16/16] 0.0, 128
        %v1005 = vpop.trf.xlu0
        %v1006 = vpop.trf.xlu0
        %v1007 = vpop.trf.xlu0
        %v1008 = vpop.trf.xlu0
        %v1009 = vpop.trf.xlu0
        %v1010 = vpop.trf.xlu0
        %v1011 = vpop.trf.xlu0
        %v1012 = vpop.trf.xlu0
        %v1013 = vpop.trf.xlu0
        %v1014 = vpop.trf.xlu0
        %v1015 = vpop.trf.xlu0
        %v1016 = vpop.trf.xlu0
        %v1017 = vpop.trf.xlu0
        %v1018 = vpop.trf.xlu0
        %v1019 = vpop.trf.xlu0
        %v1020 = vpop.trf.xlu0
        %1021 = vxpose.xlu0.b32.start [1/16] %v941, 128
        %1022 = vxpose.xlu0.b32.cont [2/16] 0.0, 128
        %1023 = vxpose.xlu0.b32.cont [3/16] 0.0, 128
        %1024 = vxpose.xlu0.b32.cont [4/16] 0.0, 128
        %1025 = vxpose.xlu0.b32.cont [5/16] 0.0, 128
        %1026 = vxpose.xlu0.b32.cont [6/16] 0.0, 128
        %1027 = vxpose.xlu0.b32.cont [7/16] 0.0, 128
        %1028 = vxpose.xlu0.b32.cont [8/16] 0.0, 128
        %1029 = vxpose.xlu0.b32.cont [9/16] 0.0, 128
        %1030 = vxpose.xlu0.b32.cont [10/16] 0.0, 128
        %1031 = vxpose.xlu0.b32.cont [11/16] 0.0, 128
        %1032 = vxpose.xlu0.b32.cont [12/16] 0.0, 128
        %1033 = vxpose.xlu0.b32.cont [13/16] 0.0, 128
        %1034 = vxpose.xlu0.b32.cont [14/16] 0.0, 128
        %1035 = vxpose.xlu0.b32.cont [15/16] 0.0, 128
        %1036 = vxpose.xlu0.b32.end [16/16] 0.0, 128
        %v1037 = vpop.trf.xlu0
        %v1038 = vpop.trf.xlu0
        %v1039 = vpop.trf.xlu0
        %v1040 = vpop.trf.xlu0
        %v1041 = vpop.trf.xlu0
        %v1042 = vpop.trf.xlu0
        %v1043 = vpop.trf.xlu0
        %v1044 = vpop.trf.xlu0
        %v1045 = vpop.trf.xlu0
        %v1046 = vpop.trf.xlu0
        %v1047 = vpop.trf.xlu0
        %v1048 = vpop.trf.xlu0
        %v1049 = vpop.trf.xlu0
        %v1050 = vpop.trf.xlu0
        %v1051 = vpop.trf.xlu0
        %v1052 = vpop.trf.xlu0
        %1053 = vxpose.xlu0.b32.start [1/16] %v944, 128
        %1054 = vxpose.xlu0.b32.cont [2/16] 0.0, 128
        %1055 = vxpose.xlu0.b32.cont [3/16] 0.0, 128
        %1056 = vxpose.xlu0.b32.cont [4/16] 0.0, 128
        %1057 = vxpose.xlu0.b32.cont [5/16] 0.0, 128
        %1058 = vxpose.xlu0.b32.cont [6/16] 0.0, 128
        %1059 = vxpose.xlu0.b32.cont [7/16] 0.0, 128
        %1060 = vxpose.xlu0.b32.cont [8/16] 0.0, 128
        %1061 = vxpose.xlu0.b32.cont [9/16] 0.0, 128
        %1062 = vxpose.xlu0.b32.cont [10/16] 0.0, 128
        %1063 = vxpose.xlu0.b32.cont [11/16] 0.0, 128
        %1064 = vxpose.xlu0.b32.cont [12/16] 0.0, 128
        %1065 = vxpose.xlu0.b32.cont [13/16] 0.0, 128
        %1066 = vxpose.xlu0.b32.cont [14/16] 0.0, 128
        %1067 = vxpose.xlu0.b32.cont [15/16] 0.0, 128
        %1068 = vxpose.xlu0.b32.end [16/16] 0.0, 128
        %v1069 = vpop.trf.xlu0
        %v1070 = vpop.trf.xlu0
        %v1071 = vpop.trf.xlu0
        %v1072 = vpop.trf.xlu0
        %v1073 = vpop.trf.xlu0
        %v1074 = vpop.trf.xlu0
        %v1075 = vpop.trf.xlu0
        %v1076 = vpop.trf.xlu0
        %v1077 = vpop.trf.xlu0
        %v1078 = vpop.trf.xlu0
        %v1079 = vpop.trf.xlu0
        %v1080 = vpop.trf.xlu0
        %v1081 = vpop.trf.xlu0
        %v1082 = vpop.trf.xlu0
        %v1083 = vpop.trf.xlu0
        %v1084 = vpop.trf.xlu0
        %vm1085 = vcmask 64512
        %v1086 = vsel %vm1085, %v925, 0
        %1088 = vmatprep.subr.mxu0 0.0
        %1089 = vmatpush1.msra.mxu0 %v973
        %1090 = vmatprep.subr.mxu0 0.0
        %1091 = vmatpush1.msra.mxu0 0.0
        %1092 = vmatprep.subr.mxu0 0.0
        %1093 = vmatpush1.msra.mxu0 0.0
        %1094 = vmatprep.subr.mxu0 0.0
        %1095 = vmatpush1.msra.mxu0 0.0
        %1096 = vmatprep.subr.mxu0 0.0
        %1097 = vmatpush1.msra.mxu0 0.0
        %1098 = vmatprep.subr.mxu0 0.0
        %1099 = vmatpush1.msra.mxu0 0.0
        %1100 = vmatprep.subr.mxu0 0.0
        %1101 = vmatpush1.msra.mxu0 0.0
        %1102 = vmatprep.subr.mxu0 0.0
        %1103 = vmatpush1.msra.mxu0 0.0
        %1104 = vmatprep.subr.mxu0 0.0
        %1105 = vmatpush1.msra.mxu0 0.0
        %1106 = vmatprep.subr.mxu0 0.0
        %1107 = vmatpush1.msra.mxu0 0.0
        %1108 = vmatprep.subr.mxu0 0.0
        %1109 = vmatpush1.msra.mxu0 0.0
        %1110 = vmatprep.subr.mxu0 0.0
        %1111 = vmatpush1.msra.mxu0 0.0
        %1112 = vmatprep.subr.mxu0 0.0
        %1113 = vmatpush1.msra.mxu0 0.0
        %1114 = vmatprep.subr.mxu0 0.0
        %1115 = vmatpush1.msra.mxu0 0.0
        %1116 = vmatprep.subr.mxu0 0.0
        %1117 = vmatpush1.msra.mxu0 0.0
        %1118 = vmatprep.subr.mxu0 0.0
        %1119 = vmatpush1.msra.mxu0 0.0
        %1120 = vmatprep.subr.mxu0 0.0
        %1121 = vmatpush1.msra.mxu0 0.0
        %1122 = vmatprep.subr.mxu0 0.0
        %1123 = vmatpush1.msra.mxu0 0.0
        %1124 = vmatprep.subr.mxu0 0.0
        %1125 = vmatpush1.msra.mxu0 0.0
        %1126 = vmatprep.subr.mxu0 0.0
        %1127 = vmatpush1.msra.mxu0 0.0
        %1128 = vmatprep.subr.mxu0 0.0
        %1129 = vmatpush1.msra.mxu0 0.0
        %1130 = vmatprep.subr.mxu0 0.0
        %1131 = vmatpush1.msra.mxu0 0.0
        %1132 = vmatprep.subr.mxu0 0.0
        %1133 = vmatpush1.msra.mxu0 0.0
        %1134 = vmatprep.subr.mxu0 0.0
        %1135 = vmatpush1.msra.mxu0 0.0
        %1136 = vmatprep.subr.mxu0 0.0
        %1137 = vmatpush1.msra.mxu0 0.0
        %1138 = vmatprep.subr.mxu0 0.0
        %1139 = vmatpush1.msra.mxu0 0.0
        %1140 = vmatprep.subr.mxu0 0.0
        %1141 = vmatpush1.msra.mxu0 0.0
        %1142 = vmatprep.subr.mxu0 0.0
        %1143 = vmatpush1.msra.mxu0 0.0
        %1144 = vmatprep.subr.mxu0 0.0
        %1145 = vmatpush1.msra.mxu0 0.0
        %1146 = vmatprep.subr.mxu0 0.0
        %1147 = vmatpush1.msra.mxu0 0.0
        %1148 = vmatprep.subr.mxu0 0.0
        %1149 = vmatpush1.msra.mxu0 0.0
        %1150 = vmatprep.subr.mxu0 0.0
        %1151 = vmatpush1.msra.mxu0 0.0
        %1152 = vmatprep.mubr.f32.mxu0 0.0
        %1153 = vmatmul.mubr.f32.gmra.mrb[0].mxu0 %v1086
        %v1154 = vpop.f32.mrb[0].mxu0
        %v1155 = vadd.f32 0.0, %v1154
        %v1156 = vpop.f32.mrb[0].mxu0
        %1157 = vdwg.mxu0
        %v1158 = vsel %vm1085, %v930, 0
        %1160 = vmatprep.subr.mxu0 0.0
        %1161 = vmatpush1.msra.mxu0 %v1005
        %1162 = vmatprep.subr.mxu0 0.0
        %1163 = vmatpush1.msra.mxu0 0.0
        %1164 = vmatprep.subr.mxu0 0.0
        %1165 = vmatpush1.msra.mxu0 0.0
        %1166 = vmatprep.subr.mxu0 0.0
        %1167 = vmatpush1.msra.mxu0 0.0
        %1168 = vmatprep.subr.mxu0 0.0
        %1169 = vmatpush1.msra.mxu0 0.0
        %1170 = vmatprep.subr.mxu0 0.0
        %1171 = vmatpush1.msra.mxu0 0.0
        %1172 = vmatprep.subr.mxu0 0.0
        %1173 = vmatpush1.msra.mxu0 0.0
        %1174 = vmatprep.subr.mxu0 0.0
        %1175 = vmatpush1.msra.mxu0 0.0
        %1176 = vmatprep.subr.mxu0 0.0
        %1177 = vmatpush1.msra.mxu0 0.0
        %1178 = vmatprep.subr.mxu0 0.0
        %1179 = vmatpush1.msra.mxu0 0.0
        %1180 = vmatprep.subr.mxu0 0.0
        %1181 = vmatpush1.msra.mxu0 0.0
        %1182 = vmatprep.subr.mxu0 0.0
        %1183 = vmatpush1.msra.mxu0 0.0
        %1184 = vmatprep.subr.mxu0 0.0
        %1185 = vmatpush1.msra.mxu0 0.0
        %1186 = vmatprep.subr.mxu0 0.0
        %1187 = vmatpush1.msra.mxu0 0.0
        %1188 = vmatprep.subr.mxu0 0.0
        %1189 = vmatpush1.msra.mxu0 0.0
        %1190 = vmatprep.subr.mxu0 0.0
        %1191 = vmatpush1.msra.mxu0 0.0
        %1192 = vmatprep.subr.mxu0 0.0
        %1193 = vmatpush1.msra.mxu0 0.0
        %1194 = vmatprep.subr.mxu0 0.0
        %1195 = vmatpush1.msra.mxu0 0.0
        %1196 = vmatprep.subr.mxu0 0.0
        %1197 = vmatpush1.msra.mxu0 0.0
        %1198 = vmatprep.subr.mxu0 0.0
        %1199 = vmatpush1.msra.mxu0 0.0
        %1200 = vmatprep.subr.mxu0 0.0
        %1201 = vmatpush1.msra.mxu0 0.0
        %1202 = vmatprep.subr.mxu0 0.0
        %1203 = vmatpush1.msra.mxu0 0.0
        %1204 = vmatprep.subr.mxu0 0.0
        %1205 = vmatpush1.msra.mxu0 0.0
        %1206 = vmatprep.subr.mxu0 0.0
        %1207 = vmatpush1.msra.mxu0 0.0
        %1208 = vmatprep.subr.mxu0 0.0
        %1209 = vmatpush1.msra.mxu0 0.0
        %1210 = vmatprep.subr.mxu0 0.0
        %1211 = vmatpush1.msra.mxu0 0.0
        %1212 = vmatprep.subr.mxu0 0.0
        %1213 = vmatpush1.msra.mxu0 0.0
        %1214 = vmatprep.subr.mxu0 0.0
        %1215 = vmatpush1.msra.mxu0 0.0
        %1216 = vmatprep.subr.mxu0 0.0
        %1217 = vmatpush1.msra.mxu0 0.0
        %1218 = vmatprep.subr.mxu0 0.0
        %1219 = vmatpush1.msra.mxu0 0.0
        %1220 = vmatprep.subr.mxu0 0.0
        %1221 = vmatpush1.msra.mxu0 0.0
        %1222 = vmatprep.subr.mxu0 0.0
        %1223 = vmatpush1.msra.mxu0 0.0
        %1224 = vmatprep.mubr.f32.mxu0 0.0
        %1225 = vmatmul.mubr.f32.gmra.mrb[0].mxu0 %v1158
        %v1226 = vpop.f32.mrb[0].mxu0
        %v1227 = vadd.f32 0.0, %v1226
        %v1228 = vpop.f32.mrb[0].mxu0
        %1229 = vdwg.mxu0
        %v1230 = vsel %vm1085, %v932, 0
        %1232 = vmatprep.subr.mxu0 0.0
        %1233 = vmatpush1.msra.mxu0 %v1037
        %1234 = vmatprep.subr.mxu0 0.0
        %1235 = vmatpush1.msra.mxu0 0.0
        %1236 = vmatprep.subr.mxu0 0.0
        %1237 = vmatpush1.msra.mxu0 0.0
        %1238 = vmatprep.subr.mxu0 0.0
        %1239 = vmatpush1.msra.mxu0 0.0
        %1240 = vmatprep.subr.mxu0 0.0
        %1241 = vmatpush1.msra.mxu0 0.0
        %1242 = vmatprep.subr.mxu0 0.0
        %1243 = vmatpush1.msra.mxu0 0.0
        %1244 = vmatprep.subr.mxu0 0.0
        %1245 = vmatpush1.msra.mxu0 0.0
        %1246 = vmatprep.subr.mxu0 0.0
        %1247 = vmatpush1.msra.mxu0 0.0
        %1248 = vmatprep.subr.mxu0 0.0
        %1249 = vmatpush1.msra.mxu0 0.0
        %1250 = vmatprep.subr.mxu0 0.0
        %1251 = vmatpush1.msra.mxu0 0.0
        %1252 = vmatprep.subr.mxu0 0.0
        %1253 = vmatpush1.msra.mxu0 0.0
        %1254 = vmatprep.subr.mxu0 0.0
        %1255 = vmatpush1.msra.mxu0 0.0
        %1256 = vmatprep.subr.mxu0 0.0
        %1257 = vmatpush1.msra.mxu0 0.0
        %1258 = vmatprep.subr.mxu0 0.0
        %1259 = vmatpush1.msra.mxu0 0.0
        %1260 = vmatprep.subr.mxu0 0.0
        %1261 = vmatpush1.msra.mxu0 0.0
        %1262 = vmatprep.subr.mxu0 0.0
        %1263 = vmatpush1.msra.mxu0 0.0
        %1264 = vmatprep.subr.mxu0 0.0
        %1265 = vmatpush1.msra.mxu0 0.0
        %1266 = vmatprep.subr.mxu0 0.0
        %1267 = vmatpush1.msra.mxu0 0.0
        %1268 = vmatprep.subr.mxu0 0.0
        %1269 = vmatpush1.msra.mxu0 0.0
        %1270 = vmatprep.subr.mxu0 0.0
        %1271 = vmatpush1.msra.mxu0 0.0
        %1272 = vmatprep.subr.mxu0 0.0
        %1273 = vmatpush1.msra.mxu0 0.0
        %1274 = vmatprep.subr.mxu0 0.0
        %1275 = vmatpush1.msra.mxu0 0.0
        %1276 = vmatprep.subr.mxu0 0.0
        %1277 = vmatpush1.msra.mxu0 0.0
        %1278 = vmatprep.subr.mxu0 0.0
        %1279 = vmatpush1.msra.mxu0 0.0
        %1280 = vmatprep.subr.mxu0 0.0
        %1281 = vmatpush1.msra.mxu0 0.0
        %1282 = vmatprep.subr.mxu0 0.0
        %1283 = vmatpush1.msra.mxu0 0.0
        %1284 = vmatprep.subr.mxu0 0.0
        %1285 = vmatpush1.msra.mxu0 0.0
        %1286 = vmatprep.subr.mxu0 0.0
        %1287 = vmatpush1.msra.mxu0 0.0
        %1288 = vmatprep.subr.mxu0 0.0
        %1289 = vmatpush1.msra.mxu0 0.0
        %1290 = vmatprep.subr.mxu0 0.0
        %1291 = vmatpush1.msra.mxu0 0.0
        %1292 = vmatprep.subr.mxu0 0.0
        %1293 = vmatpush1.msra.mxu0 0.0
        %1294 = vmatprep.subr.mxu0 0.0
        %1295 = vmatpush1.msra.mxu0 0.0
        %1296 = vmatprep.mubr.f32.mxu0 0.0
        %1297 = vmatmul.mubr.f32.gmra.mrb[0].mxu0 %v1230
        %v1298 = vpop.f32.mrb[0].mxu0
        %v1299 = vadd.f32 0.0, %v1298
        %v1300 = vpop.f32.mrb[0].mxu0
        %1301 = vdwg.mxu0
        %v1302 = vsel %vm1085, %v934, 0
        %1304 = vmatprep.subr.mxu0 0.0
        %1305 = vmatpush1.msra.mxu0 %v1069
        %1306 = vmatprep.subr.mxu0 0.0
        %1307 = vmatpush1.msra.mxu0 0.0
        %1308 = vmatprep.subr.mxu0 0.0
        %1309 = vmatpush1.msra.mxu0 0.0
        %1310 = vmatprep.subr.mxu0 0.0
        %1311 = vmatpush1.msra.mxu0 0.0
        %1312 = vmatprep.subr.mxu0 0.0
        %1313 = vmatpush1.msra.mxu0 0.0
        %1314 = vmatprep.subr.mxu0 0.0
        %1315 = vmatpush1.msra.mxu0 0.0
        %1316 = vmatprep.subr.mxu0 0.0
        %1317 = vmatpush1.msra.mxu0 0.0
        %1318 = vmatprep.subr.mxu0 0.0
        %1319 = vmatpush1.msra.mxu0 0.0
        %1320 = vmatprep.subr.mxu0 0.0
        %1321 = vmatpush1.msra.mxu0 0.0
        %1322 = vmatprep.subr.mxu0 0.0
        %1323 = vmatpush1.msra.mxu0 0.0
        %1324 = vmatprep.subr.mxu0 0.0
        %1325 = vmatpush1.msra.mxu0 0.0
        %1326 = vmatprep.subr.mxu0 0.0
        %1327 = vmatpush1.msra.mxu0 0.0
        %1328 = vmatprep.subr.mxu0 0.0
        %1329 = vmatpush1.msra.mxu0 0.0
        %1330 = vmatprep.subr.mxu0 0.0
        %1331 = vmatpush1.msra.mxu0 0.0
        %1332 = vmatprep.subr.mxu0 0.0
        %1333 = vmatpush1.msra.mxu0 0.0
        %1334 = vmatprep.subr.mxu0 0.0
        %1335 = vmatpush1.msra.mxu0 0.0
        %1336 = vmatprep.subr.mxu0 0.0
        %1337 = vmatpush1.msra.mxu0 0.0
        %1338 = vmatprep.subr.mxu0 0.0
        %1339 = vmatpush1.msra.mxu0 0.0
        %1340 = vmatprep.subr.mxu0 0.0
        %1341 = vmatpush1.msra.mxu0 0.0
        %1342 = vmatprep.subr.mxu0 0.0
        %1343 = vmatpush1.msra.mxu0 0.0
        %1344 = vmatprep.subr.mxu0 0.0
        %1345 = vmatpush1.msra.mxu0 0.0
        %1346 = vmatprep.subr.mxu0 0.0
        %1347 = vmatpush1.msra.mxu0 0.0
        %1348 = vmatprep.subr.mxu0 0.0
        %1349 = vmatpush1.msra.mxu0 0.0
        %1350 = vmatprep.subr.mxu0 0.0
        %1351 = vmatpush1.msra.mxu0 0.0
        %1352 = vmatprep.subr.mxu0 0.0
        %1353 = vmatpush1.msra.mxu0 0.0
        %1354 = vmatprep.subr.mxu0 0.0
        %1355 = vmatpush1.msra.mxu0 0.0
        %1356 = vmatprep.subr.mxu0 0.0
        %1357 = vmatpush1.msra.mxu0 0.0
        %1358 = vmatprep.subr.mxu0 0.0
        %1359 = vmatpush1.msra.mxu0 0.0
        %1360 = vmatprep.subr.mxu0 0.0
        %1361 = vmatpush1.msra.mxu0 0.0
        %1362 = vmatprep.subr.mxu0 0.0
        %1363 = vmatpush1.msra.mxu0 0.0
        %1364 = vmatprep.subr.mxu0 0.0
        %1365 = vmatpush1.msra.mxu0 0.0
        %1366 = vmatprep.subr.mxu0 0.0
        %1367 = vmatpush1.msra.mxu0 0.0
        %1368 = vmatprep.mubr.f32.mxu0 0.0
        %1369 = vmatmul.mubr.f32.gmra.mrb[0].mxu0 %v1302
        %v1370 = vpop.f32.mrb[0].mxu0
        %v1371 = vadd.f32 0.0, %v1370
        %v1372 = vpop.f32.mrb[0].mxu0
        %1373 = vdwg.mxu0
        %v1374 = vsel %vm1085, %v1155, -inf
        %1375 = vmax.xlane.f32.xlu0 %v1374
        %v1376 = vpop.xlane.xlu0 %1375
        %v1377 = vsel %vm1085, %v1227, -inf
        %1378 = vmax.xlane.f32.xlu0 %v1377
        %v1379 = vpop.xlane.xlu0 %1378
        %v1380 = vsel %vm1085, %v1299, -inf
        %1381 = vmax.xlane.f32.xlu0 %v1380
        %v1382 = vpop.xlane.xlu0 %1381
        %v1383 = vsel %vm1085, %v1371, -inf
        %1384 = vmax.xlane.f32.xlu0 %v1383
        %v1385 = vpop.xlane.xlu0 %1384
        %v1386 = vsub.f32 %v1155, %v1376
        %v1387 = vsub.f32 %v1227, %v1379
        %v1388 = vsub.f32 %v1299, %v1382
        %v1389 = vsub.f32 %v1371, %v1385
        %v1390 = vmul.f32 %v1386, 1.442695
        %v1391 = vpow.pop %v1390
        %v1392 = vmul.f32 %v1387, 1.442695
        %v1393 = vpow.pop %v1392
        %v1394 = vmul.f32 %v1388, 1.442695
        %v1395 = vpow.pop %v1394
        %v1396 = vmul.f32 %v1389, 1.442695
        %v1397 = vpow.pop %v1396
        %v1398 = vsel %vm1085, %v1391, 0.0
        %1399 = vadd.xlane.f32.xlu0 %v1398
        %v1400 = vpop.xlane.xlu0 %1399
        %v1401 = vsel %vm1085, %v1393, 0.0
        %1402 = vadd.xlane.f32.xlu0 %v1401
        %v1403 = vpop.xlane.xlu0 %1402
        %v1404 = vsel %vm1085, %v1395, 0.0
        %1405 = vadd.xlane.f32.xlu0 %v1404
        %v1406 = vpop.xlane.xlu0 %1405
        %v1407 = vsel %vm1085, %v1397, 0.0
        %1408 = vadd.xlane.f32.xlu0 %v1407
        %v1409 = vpop.xlane.xlu0 %1408
        %v1410 = vrcp.pop %v1400
        %v1411 = vrcp.pop %v1403
        %v1412 = vrcp.pop %v1406
        %v1413 = vrcp.pop %v1409
        %v1414 = vmul.f32 %v1391, %v1410
        %v1415 = vmul.f32 %v1393, %v1411
        %v1416 = vmul.f32 %v1395, %v1412
        %v1417 = vmul.f32 %v1397, %v1413
        %1418 = vxpose.xlu0.b32.start [1/16] %v946, 128
        %1419 = vxpose.xlu0.b32.cont [2/16] 0.0, 128
        %1420 = vxpose.xlu0.b32.cont [3/16] 0.0, 128
        %1421 = vxpose.xlu0.b32.cont [4/16] 0.0, 128
        %1422 = vxpose.xlu0.b32.cont [5/16] 0.0, 128
        %1423 = vxpose.xlu0.b32.cont [6/16] 0.0, 128
        %1424 = vxpose.xlu0.b32.cont [7/16] 0.0, 128
        %1425 = vxpose.xlu0.b32.cont [8/16] 0.0, 128
        %1426 = vxpose.xlu0.b32.cont [9/16] 0.0, 128
        %1427 = vxpose.xlu0.b32.cont [10/16] 0.0, 128
        %1428 = vxpose.xlu0.b32.cont [11/16] 0.0, 128
        %1429 = vxpose.xlu0.b32.cont [12/16] 0.0, 128
        %1430 = vxpose.xlu0.b32.cont [13/16] 0.0, 128
        %1431 = vxpose.xlu0.b32.cont [14/16] 0.0, 128
        %1432 = vxpose.xlu0.b32.cont [15/16] 0.0, 128
        %1433 = vxpose.xlu0.b32.end [16/16] 0.0, 128
        %v1434 = vpop.trf.xlu0
        %v1435 = vpop.trf.xlu0
        %v1436 = vpop.trf.xlu0
        %v1437 = vpop.trf.xlu0
        %v1438 = vpop.trf.xlu0
        %v1439 = vpop.trf.xlu0
        %v1440 = vpop.trf.xlu0
        %v1441 = vpop.trf.xlu0
        %v1442 = vpop.trf.xlu0
        %v1443 = vpop.trf.xlu0
        %v1444 = vpop.trf.xlu0
        %v1445 = vpop.trf.xlu0
        %v1446 = vpop.trf.xlu0
        %v1447 = vpop.trf.xlu0
        %v1448 = vpop.trf.xlu0
        %v1449 = vpop.trf.xlu0
        %1450 = vxpose.xlu0.b32.start [1/16] %v949, 128
        %1451 = vxpose.xlu0.b32.cont [2/16] 0.0, 128
        %1452 = vxpose.xlu0.b32.cont [3/16] 0.0, 128
        %1453 = vxpose.xlu0.b32.cont [4/16] 0.0, 128
        %1454 = vxpose.xlu0.b32.cont [5/16] 0.0, 128
        %1455 = vxpose.xlu0.b32.cont [6/16] 0.0, 128
        %1456 = vxpose.xlu0.b32.cont [7/16] 0.0, 128
        %1457 = vxpose.xlu0.b32.cont [8/16] 0.0, 128
        %1458 = vxpose.xlu0.b32.cont [9/16] 0.0, 128
        %1459 = vxpose.xlu0.b32.cont [10/16] 0.0, 128
        %1460 = vxpose.xlu0.b32.cont [11/16] 0.0, 128
        %1461 = vxpose.xlu0.b32.cont [12/16] 0.0, 128
        %1462 = vxpose.xlu0.b32.cont [13/16] 0.0, 128
        %1463 = vxpose.xlu0.b32.cont [14/16] 0.0, 128
        %1464 = vxpose.xlu0.b32.cont [15/16] 0.0, 128
        %1465 = vxpose.xlu0.b32.end [16/16] 0.0, 128
        %v1466 = vpop.trf.xlu0
        %v1467 = vpop.trf.xlu0
        %v1468 = vpop.trf.xlu0
        %v1469 = vpop.trf.xlu0
        %v1470 = vpop.trf.xlu0
        %v1471 = vpop.trf.xlu0
        %v1472 = vpop.trf.xlu0
        %v1473 = vpop.trf.xlu0
        %v1474 = vpop.trf.xlu0
        %v1475 = vpop.trf.xlu0
        %v1476 = vpop.trf.xlu0
        %v1477 = vpop.trf.xlu0
        %v1478 = vpop.trf.xlu0
        %v1479 = vpop.trf.xlu0
        %v1480 = vpop.trf.xlu0
        %v1481 = vpop.trf.xlu0
        %1482 = vxpose.xlu0.b32.start [1/16] %v952, 128
        %1483 = vxpose.xlu0.b32.cont [2/16] 0.0, 128
        %1484 = vxpose.xlu0.b32.cont [3/16] 0.0, 128
        %1485 = vxpose.xlu0.b32.cont [4/16] 0.0, 128
        %1486 = vxpose.xlu0.b32.cont [5/16] 0.0, 128
        %1487 = vxpose.xlu0.b32.cont [6/16] 0.0, 128
        %1488 = vxpose.xlu0.b32.cont [7/16] 0.0, 128
        %1489 = vxpose.xlu0.b32.cont [8/16] 0.0, 128
        %1490 = vxpose.xlu0.b32.cont [9/16] 0.0, 128
        %1491 = vxpose.xlu0.b32.cont [10/16] 0.0, 128
        %1492 = vxpose.xlu0.b32.cont [11/16] 0.0, 128
        %1493 = vxpose.xlu0.b32.cont [12/16] 0.0, 128
        %1494 = vxpose.xlu0.b32.cont [13/16] 0.0, 128
        %1495 = vxpose.xlu0.b32.cont [14/16] 0.0, 128
        %1496 = vxpose.xlu0.b32.cont [15/16] 0.0, 128
        %1497 = vxpose.xlu0.b32.end [16/16] 0.0, 128
        %v1498 = vpop.trf.xlu0
        %v1499 = vpop.trf.xlu0
        %v1500 = vpop.trf.xlu0
        %v1501 = vpop.trf.xlu0
        %v1502 = vpop.trf.xlu0
        %v1503 = vpop.trf.xlu0
        %v1504 = vpop.trf.xlu0
        %v1505 = vpop.trf.xlu0
        %v1506 = vpop.trf.xlu0
        %v1507 = vpop.trf.xlu0
        %v1508 = vpop.trf.xlu0
        %v1509 = vpop.trf.xlu0
        %v1510 = vpop.trf.xlu0
        %v1511 = vpop.trf.xlu0
        %v1512 = vpop.trf.xlu0
        %v1513 = vpop.trf.xlu0
        %1514 = vxpose.xlu0.b32.start [1/16] %v955, 128
        %1515 = vxpose.xlu0.b32.cont [2/16] 0.0, 128
        %1516 = vxpose.xlu0.b32.cont [3/16] 0.0, 128
        %1517 = vxpose.xlu0.b32.cont [4/16] 0.0, 128
        %1518 = vxpose.xlu0.b32.cont [5/16] 0.0, 128
        %1519 = vxpose.xlu0.b32.cont [6/16] 0.0, 128
        %1520 = vxpose.xlu0.b32.cont [7/16] 0.0, 128
        %1521 = vxpose.xlu0.b32.cont [8/16] 0.0, 128
        %1522 = vxpose.xlu0.b32.cont [9/16] 0.0, 128
        %1523 = vxpose.xlu0.b32.cont [10/16] 0.0, 128
        %1524 = vxpose.xlu0.b32.cont [11/16] 0.0, 128
        %1525 = vxpose.xlu0.b32.cont [12/16] 0.0, 128
        %1526 = vxpose.xlu0.b32.cont [13/16] 0.0, 128
        %1527 = vxpose.xlu0.b32.cont [14/16] 0.0, 128
        %1528 = vxpose.xlu0.b32.cont [15/16] 0.0, 128
        %1529 = vxpose.xlu0.b32.end [16/16] 0.0, 128
        %v1530 = vpop.trf.xlu0
        %v1531 = vpop.trf.xlu0
        %v1532 = vpop.trf.xlu0
        %v1533 = vpop.trf.xlu0
        %v1534 = vpop.trf.xlu0
        %v1535 = vpop.trf.xlu0
        %v1536 = vpop.trf.xlu0
        %v1537 = vpop.trf.xlu0
        %v1538 = vpop.trf.xlu0
        %v1539 = vpop.trf.xlu0
        %v1540 = vpop.trf.xlu0
        %v1541 = vpop.trf.xlu0
        %v1542 = vpop.trf.xlu0
        %v1543 = vpop.trf.xlu0
        %v1544 = vpop.trf.xlu0
        %v1545 = vpop.trf.xlu0
        %v1547 = vsel %vm1085, %v1434, 0
        %v1550 = vsel %vm1085, %v1414, 0
        %1552 = vmatprep.subr.mxu0 0.0
        %1553 = vmatpush1.xpose.msra.mxu0 %v1550
        %1554 = vmatprep.subr.mxu0 0.0
        %1555 = vmatpush1.xpose.msra.mxu0 0.0
        %1556 = vmatprep.subr.mxu0 0.0
        %1557 = vmatpush1.xpose.msra.mxu0 0.0
        %1558 = vmatprep.subr.mxu0 0.0
        %1559 = vmatpush1.xpose.msra.mxu0 0.0
        %1560 = vmatprep.subr.mxu0 0.0
        %1561 = vmatpush1.xpose.msra.mxu0 0.0
        %1562 = vmatprep.subr.mxu0 0.0
        %1563 = vmatpush1.xpose.msra.mxu0 0.0
        %1564 = vmatprep.subr.mxu0 0.0
        %1565 = vmatpush1.xpose.msra.mxu0 0.0
        %1566 = vmatprep.subr.mxu0 0.0
        %1567 = vmatpush1.xpose.msra.mxu0 0.0
        %1568 = vmatprep.subr.mxu0 0.0
        %1569 = vmatpush1.xpose.msra.mxu0 0.0
        %1570 = vmatprep.subr.mxu0 0.0
        %1571 = vmatpush1.xpose.msra.mxu0 0.0
        %1572 = vmatprep.subr.mxu0 0.0
        %1573 = vmatpush1.xpose.msra.mxu0 0.0
        %1574 = vmatprep.subr.mxu0 0.0
        %1575 = vmatpush1.xpose.msra.mxu0 0.0
        %1576 = vmatprep.subr.mxu0 0.0
        %1577 = vmatpush1.xpose.msra.mxu0 0.0
        %1578 = vmatprep.subr.mxu0 0.0
        %1579 = vmatpush1.xpose.msra.mxu0 0.0
        %1580 = vmatprep.subr.mxu0 0.0
        %1581 = vmatpush1.xpose.msra.mxu0 0.0
        %1582 = vmatprep.subr.mxu0 0.0
        %1583 = vmatpush1.xpose.msra.mxu0 0.0
        %1584 = vmatprep.subr.mxu0 0.0
        %1585 = vmatpush1.xpose.msra.mxu0 0.0
        %1586 = vmatprep.subr.mxu0 0.0
        %1587 = vmatpush1.xpose.msra.mxu0 0.0
        %1588 = vmatprep.subr.mxu0 0.0
        %1589 = vmatpush1.xpose.msra.mxu0 0.0
        %1590 = vmatprep.subr.mxu0 0.0
        %1591 = vmatpush1.xpose.msra.mxu0 0.0
        %1592 = vmatprep.subr.mxu0 0.0
        %1593 = vmatpush1.xpose.msra.mxu0 0.0
        %1594 = vmatprep.subr.mxu0 0.0
        %1595 = vmatpush1.xpose.msra.mxu0 0.0
        %1596 = vmatprep.subr.mxu0 0.0
        %1597 = vmatpush1.xpose.msra.mxu0 0.0
        %1598 = vmatprep.subr.mxu0 0.0
        %1599 = vmatpush1.xpose.msra.mxu0 0.0
        %1600 = vmatprep.subr.mxu0 0.0
        %1601 = vmatpush1.xpose.msra.mxu0 0.0
        %1602 = vmatprep.subr.mxu0 0.0
        %1603 = vmatpush1.xpose.msra.mxu0 0.0
        %1604 = vmatprep.subr.mxu0 0.0
        %1605 = vmatpush1.xpose.msra.mxu0 0.0
        %1606 = vmatprep.subr.mxu0 0.0
        %1607 = vmatpush1.xpose.msra.mxu0 0.0
        %1608 = vmatprep.subr.mxu0 0.0
        %1609 = vmatpush1.xpose.msra.mxu0 0.0
        %1610 = vmatprep.subr.mxu0 0.0
        %1611 = vmatpush1.xpose.msra.mxu0 0.0
        %1612 = vmatprep.subr.mxu0 0.0
        %1613 = vmatpush1.xpose.msra.mxu0 0.0
        %1614 = vmatprep.subr.mxu0 0.0
        %1615 = vmatpush1.xpose.msra.mxu0 0.0
        %1616 = vmatprep.mubr.f32.mxu0 0.0
        %1617 = vmatmul.mubr.f32.gmra.mrb[0].mxu0 %v1547
        %v1618 = vpop.f32.mrb[0].mxu0
        %v1619 = vadd.f32 0.0, %v1618
        %v1620 = vpop.f32.mrb[0].mxu0
        %1621 = vdwg.mxu0
        %v1623 = vsel %vm1085, %v1466, 0
        %v1626 = vsel %vm1085, %v1415, 0
        %1628 = vmatprep.subr.mxu0 0.0
        %1629 = vmatpush1.xpose.msra.mxu0 %v1626
        %1630 = vmatprep.subr.mxu0 0.0
        %1631 = vmatpush1.xpose.msra.mxu0 0.0
        %1632 = vmatprep.subr.mxu0 0.0
        %1633 = vmatpush1.xpose.msra.mxu0 0.0
        %1634 = vmatprep.subr.mxu0 0.0
        %1635 = vmatpush1.xpose.msra.mxu0 0.0
        %1636 = vmatprep.subr.mxu0 0.0
        %1637 = vmatpush1.xpose.msra.mxu0 0.0
        %1638 = vmatprep.subr.mxu0 0.0
        %1639 = vmatpush1.xpose.msra.mxu0 0.0
        %1640 = vmatprep.subr.mxu0 0.0
        %1641 = vmatpush1.xpose.msra.mxu0 0.0
        %1642 = vmatprep.subr.mxu0 0.0
        %1643 = vmatpush1.xpose.msra.mxu0 0.0
        %1644 = vmatprep.subr.mxu0 0.0
        %1645 = vmatpush1.xpose.msra.mxu0 0.0
        %1646 = vmatprep.subr.mxu0 0.0
        %1647 = vmatpush1.xpose.msra.mxu0 0.0
        %1648 = vmatprep.subr.mxu0 0.0
        %1649 = vmatpush1.xpose.msra.mxu0 0.0
        %1650 = vmatprep.subr.mxu0 0.0
        %1651 = vmatpush1.xpose.msra.mxu0 0.0
        %1652 = vmatprep.subr.mxu0 0.0
        %1653 = vmatpush1.xpose.msra.mxu0 0.0
        %1654 = vmatprep.subr.mxu0 0.0
        %1655 = vmatpush1.xpose.msra.mxu0 0.0
        %1656 = vmatprep.subr.mxu0 0.0
        %1657 = vmatpush1.xpose.msra.mxu0 0.0
        %1658 = vmatprep.subr.mxu0 0.0
        %1659 = vmatpush1.xpose.msra.mxu0 0.0
        %1660 = vmatprep.subr.mxu0 0.0
        %1661 = vmatpush1.xpose.msra.mxu0 0.0
        %1662 = vmatprep.subr.mxu0 0.0
        %1663 = vmatpush1.xpose.msra.mxu0 0.0
        %1664 = vmatprep.subr.mxu0 0.0
        %1665 = vmatpush1.xpose.msra.mxu0 0.0
        %1666 = vmatprep.subr.mxu0 0.0
        %1667 = vmatpush1.xpose.msra.mxu0 0.0
        %1668 = vmatprep.subr.mxu0 0.0
        %1669 = vmatpush1.xpose.msra.mxu0 0.0
        %1670 = vmatprep.subr.mxu0 0.0
        %1671 = vmatpush1.xpose.msra.mxu0 0.0
        %1672 = vmatprep.subr.mxu0 0.0
        %1673 = vmatpush1.xpose.msra.mxu0 0.0
        %1674 = vmatprep.subr.mxu0 0.0
        %1675 = vmatpush1.xpose.msra.mxu0 0.0
        %1676 = vmatprep.subr.mxu0 0.0
        %1677 = vmatpush1.xpose.msra.mxu0 0.0
        %1678 = vmatprep.subr.mxu0 0.0
        %1679 = vmatpush1.xpose.msra.mxu0 0.0
        %1680 = vmatprep.subr.mxu0 0.0
        %1681 = vmatpush1.xpose.msra.mxu0 0.0
        %1682 = vmatprep.subr.mxu0 0.0
        %1683 = vmatpush1.xpose.msra.mxu0 0.0
        %1684 = vmatprep.subr.mxu0 0.0
        %1685 = vmatpush1.xpose.msra.mxu0 0.0
        %1686 = vmatprep.subr.mxu0 0.0
        %1687 = vmatpush1.xpose.msra.mxu0 0.0
        %1688 = vmatprep.subr.mxu0 0.0
        %1689 = vmatpush1.xpose.msra.mxu0 0.0
        %1690 = vmatprep.subr.mxu0 0.0
        %1691 = vmatpush1.xpose.msra.mxu0 0.0
        %1692 = vmatprep.mubr.f32.mxu0 0.0
        %1693 = vmatmul.mubr.f32.gmra.mrb[0].mxu0 %v1623
        %v1694 = vpop.f32.mrb[0].mxu0
        %v1695 = vadd.f32 0.0, %v1694
        %v1696 = vpop.f32.mrb[0].mxu0
        %1697 = vdwg.mxu0
        %v1699 = vsel %vm1085, %v1498, 0
        %v1702 = vsel %vm1085, %v1416, 0
        %1704 = vmatprep.subr.mxu0 0.0
        %1705 = vmatpush1.xpose.msra.mxu0 %v1702
        %1706 = vmatprep.subr.mxu0 0.0
        %1707 = vmatpush1.xpose.msra.mxu0 0.0
        %1708 = vmatprep.subr.mxu0 0.0
        %1709 = vmatpush1.xpose.msra.mxu0 0.0
        %1710 = vmatprep.subr.mxu0 0.0
        %1711 = vmatpush1.xpose.msra.mxu0 0.0
        %1712 = vmatprep.subr.mxu0 0.0
        %1713 = vmatpush1.xpose.msra.mxu0 0.0
        %1714 = vmatprep.subr.mxu0 0.0
        %1715 = vmatpush1.xpose.msra.mxu0 0.0
        %1716 = vmatprep.subr.mxu0 0.0
        %1717 = vmatpush1.xpose.msra.mxu0 0.0
        %1718 = vmatprep.subr.mxu0 0.0
        %1719 = vmatpush1.xpose.msra.mxu0 0.0
        %1720 = vmatprep.subr.mxu0 0.0
        %1721 = vmatpush1.xpose.msra.mxu0 0.0
        %1722 = vmatprep.subr.mxu0 0.0
        %1723 = vmatpush1.xpose.msra.mxu0 0.0
        %1724 = vmatprep.subr.mxu0 0.0
        %1725 = vmatpush1.xpose.msra.mxu0 0.0
        %1726 = vmatprep.subr.mxu0 0.0
        %1727 = vmatpush1.xpose.msra.mxu0 0.0
        %1728 = vmatprep.subr.mxu0 0.0
        %1729 = vmatpush1.xpose.msra.mxu0 0.0
        %1730 = vmatprep.subr.mxu0 0.0
        %1731 = vmatpush1.xpose.msra.mxu0 0.0
        %1732 = vmatprep.subr.mxu0 0.0
        %1733 = vmatpush1.xpose.msra.mxu0 0.0
        %1734 = vmatprep.subr.mxu0 0.0
        %1735 = vmatpush1.xpose.msra.mxu0 0.0
        %1736 = vmatprep.subr.mxu0 0.0
        %1737 = vmatpush1.xpose.msra.mxu0 0.0
        %1738 = vmatprep.subr.mxu0 0.0
        %1739 = vmatpush1.xpose.msra.mxu0 0.0
        %1740 = vmatprep.subr.mxu0 0.0
        %1741 = vmatpush1.xpose.msra.mxu0 0.0
        %1742 = vmatprep.subr.mxu0 0.0
        %1743 = vmatpush1.xpose.msra.mxu0 0.0
        %1744 = vmatprep.subr.mxu0 0.0
        %1745 = vmatpush1.xpose.msra.mxu0 0.0
        %1746 = vmatprep.subr.mxu0 0.0
        %1747 = vmatpush1.xpose.msra.mxu0 0.0
        %1748 = vmatprep.subr.mxu0 0.0
        %1749 = vmatpush1.xpose.msra.mxu0 0.0
        %1750 = vmatprep.subr.mxu0 0.0
        %1751 = vmatpush1.xpose.msra.mxu0 0.0
        %1752 = vmatprep.subr.mxu0 0.0
        %1753 = vmatpush1.xpose.msra.mxu0 0.0
        %1754 = vmatprep.subr.mxu0 0.0
        %1755 = vmatpush1.xpose.msra.mxu0 0.0
        %1756 = vmatprep.subr.mxu0 0.0
        %1757 = vmatpush1.xpose.msra.mxu0 0.0
        %1758 = vmatprep.subr.mxu0 0.0
        %1759 = vmatpush1.xpose.msra.mxu0 0.0
        %1760 = vmatprep.subr.mxu0 0.0
        %1761 = vmatpush1.xpose.msra.mxu0 0.0
        %1762 = vmatprep.subr.mxu0 0.0
        %1763 = vmatpush1.xpose.msra.mxu0 0.0
        %1764 = vmatprep.subr.mxu0 0.0
        %1765 = vmatpush1.xpose.msra.mxu0 0.0
        %1766 = vmatprep.subr.mxu0 0.0
        %1767 = vmatpush1.xpose.msra.mxu0 0.0
        %1768 = vmatprep.mubr.f32.mxu0 0.0
        %1769 = vmatmul.mubr.f32.gmra.mrb[0].mxu0 %v1699
        %v1770 = vpop.f32.mrb[0].mxu0
        %v1771 = vadd.f32 0.0, %v1770
        %v1772 = vpop.f32.mrb[0].mxu0
        %1773 = vdwg.mxu0
        %v1775 = vsel %vm1085, %v1530, 0
        %v1778 = vsel %vm1085, %v1417, 0
        %1780 = vmatprep.subr.mxu0 0.0
        %1781 = vmatpush1.xpose.msra.mxu0 %v1778
        %1782 = vmatprep.subr.mxu0 0.0
        %1783 = vmatpush1.xpose.msra.mxu0 0.0
        %1784 = vmatprep.subr.mxu0 0.0
        %1785 = vmatpush1.xpose.msra.mxu0 0.0
        %1786 = vmatprep.subr.mxu0 0.0
        %1787 = vmatpush1.xpose.msra.mxu0 0.0
        %1788 = vmatprep.subr.mxu0 0.0
        %1789 = vmatpush1.xpose.msra.mxu0 0.0
        %1790 = vmatprep.subr.mxu0 0.0
        %1791 = vmatpush1.xpose.msra.mxu0 0.0
        %1792 = vmatprep.subr.mxu0 0.0
        %1793 = vmatpush1.xpose.msra.mxu0 0.0
        %1794 = vmatprep.subr.mxu0 0.0
        %1795 = vmatpush1.xpose.msra.mxu0 0.0
        %1796 = vmatprep.subr.mxu0 0.0
        %1797 = vmatpush1.xpose.msra.mxu0 0.0
        %1798 = vmatprep.subr.mxu0 0.0
        %1799 = vmatpush1.xpose.msra.mxu0 0.0
        %1800 = vmatprep.subr.mxu0 0.0
        %1801 = vmatpush1.xpose.msra.mxu0 0.0
        %1802 = vmatprep.subr.mxu0 0.0
        %1803 = vmatpush1.xpose.msra.mxu0 0.0
        %1804 = vmatprep.subr.mxu0 0.0
        %1805 = vmatpush1.xpose.msra.mxu0 0.0
        %1806 = vmatprep.subr.mxu0 0.0
        %1807 = vmatpush1.xpose.msra.mxu0 0.0
        %1808 = vmatprep.subr.mxu0 0.0
        %1809 = vmatpush1.xpose.msra.mxu0 0.0
        %1810 = vmatprep.subr.mxu0 0.0
        %1811 = vmatpush1.xpose.msra.mxu0 0.0
        %1812 = vmatprep.subr.mxu0 0.0
        %1813 = vmatpush1.xpose.msra.mxu0 0.0
        %1814 = vmatprep.subr.mxu0 0.0
        %1815 = vmatpush1.xpose.msra.mxu0 0.0
        %1816 = vmatprep.subr.mxu0 0.0
        %1817 = vmatpush1.xpose.msra.mxu0 0.0
        %1818 = vmatprep.subr.mxu0 0.0
        %1819 = vmatpush1.xpose.msra.mxu0 0.0
        %1820 = vmatprep.subr.mxu0 0.0
        %1821 = vmatpush1.xpose.msra.mxu0 0.0
        %1822 = vmatprep.subr.mxu0 0.0
        %1823 = vmatpush1.xpose.msra.mxu0 0.0
        %1824 = vmatprep.subr.mxu0 0.0
        %1825 = vmatpush1.xpose.msra.mxu0 0.0
        %1826 = vmatprep.subr.mxu0 0.0
        %1827 = vmatpush1.xpose.msra.mxu0 0.0
        %1828 = vmatprep.subr.mxu0 0.0
        %1829 = vmatpush1.xpose.msra.mxu0 0.0
        %1830 = vmatprep.subr.mxu0 0.0
        %1831 = vmatpush1.xpose.msra.mxu0 0.0
        %1832 = vmatprep.subr.mxu0 0.0
        %1833 = vmatpush1.xpose.msra.mxu0 0.0
        %1834 = vmatprep.subr.mxu0 0.0
        %1835 = vmatpush1.xpose.msra.mxu0 0.0
        %1836 = vmatprep.subr.mxu0 0.0
        %1837 = vmatpush1.xpose.msra.mxu0 0.0
        %1838 = vmatprep.subr.mxu0 0.0
        %1839 = vmatpush1.xpose.msra.mxu0 0.0
        %1840 = vmatprep.subr.mxu0 0.0
        %1841 = vmatpush1.xpose.msra.mxu0 0.0
        %1842 = vmatprep.subr.mxu0 0.0
        %1843 = vmatpush1.xpose.msra.mxu0 0.0
        %1844 = vmatprep.mubr.f32.mxu0 0.0
        %1845 = vmatmul.mubr.f32.gmra.mrb[0].mxu0 %v1775
        %v1846 = vpop.f32.mrb[0].mxu0
        %v1847 = vadd.f32 0.0, %v1846
        %v1848 = vpop.f32.mrb[0].mxu0
        %1849 = vdwg.mxu0
        %1850 = vxpose.xlu0.b32.start [1/16] %v1619, 128
        %1851 = vxpose.xlu0.b32.cont [2/16] 0.0, 128
        %1852 = vxpose.xlu0.b32.cont [3/16] 0.0, 128
        %1853 = vxpose.xlu0.b32.cont [4/16] 0.0, 128
        %1854 = vxpose.xlu0.b32.cont [5/16] 0.0, 128
        %1855 = vxpose.xlu0.b32.cont [6/16] 0.0, 128
        %1856 = vxpose.xlu0.b32.cont [7/16] 0.0, 128
        %1857 = vxpose.xlu0.b32.cont [8/16] 0.0, 128
        %1858 = vxpose.xlu0.b32.cont [9/16] 0.0, 128
        %1859 = vxpose.xlu0.b32.cont [10/16] 0.0, 128
        %1860 = vxpose.xlu0.b32.cont [11/16] 0.0, 128
        %1861 = vxpose.xlu0.b32.cont [12/16] 0.0, 128
        %1862 = vxpose.xlu0.b32.cont [13/16] 0.0, 128
        %1863 = vxpose.xlu0.b32.cont [14/16] 0.0, 128
        %1864 = vxpose.xlu0.b32.cont [15/16] 0.0, 128
        %1865 = vxpose.xlu0.b32.end [16/16] 0.0, 128
        %v1866 = vpop.trf.xlu0
        %v1867 = vpop.trf.xlu0
        %v1868 = vpop.trf.xlu0
        %v1869 = vpop.trf.xlu0
        %v1870 = vpop.trf.xlu0
        %v1871 = vpop.trf.xlu0
        %v1872 = vpop.trf.xlu0
        %v1873 = vpop.trf.xlu0
        %v1874 = vpop.trf.xlu0
        %v1875 = vpop.trf.xlu0
        %v1876 = vpop.trf.xlu0
        %v1877 = vpop.trf.xlu0
        %v1878 = vpop.trf.xlu0
        %v1879 = vpop.trf.xlu0
        %v1880 = vpop.trf.xlu0
        %v1881 = vpop.trf.xlu0
        %1882 = vxpose.xlu0.b32.start [1/16] %v1695, 128
        %1883 = vxpose.xlu0.b32.cont [2/16] 0.0, 128
        %1884 = vxpose.xlu0.b32.cont [3/16] 0.0, 128
        %1885 = vxpose.xlu0.b32.cont [4/16] 0.0, 128
        %1886 = vxpose.xlu0.b32.cont [5/16] 0.0, 128
        %1887 = vxpose.xlu0.b32.cont [6/16] 0.0, 128
        %1888 = vxpose.xlu0.b32.cont [7/16] 0.0, 128
        %1889 = vxpose.xlu0.b32.cont [8/16] 0.0, 128
        %1890 = vxpose.xlu0.b32.cont [9/16] 0.0, 128
        %1891 = vxpose.xlu0.b32.cont [10/16] 0.0, 128
        %1892 = vxpose.xlu0.b32.cont [11/16] 0.0, 128
        %1893 = vxpose.xlu0.b32.cont [12/16] 0.0, 128
        %1894 = vxpose.xlu0.b32.cont [13/16] 0.0, 128
        %1895 = vxpose.xlu0.b32.cont [14/16] 0.0, 128
        %1896 = vxpose.xlu0.b32.cont [15/16] 0.0, 128
        %1897 = vxpose.xlu0.b32.end [16/16] 0.0, 128
        %v1898 = vpop.trf.xlu0
        %v1899 = vpop.trf.xlu0
        %v1900 = vpop.trf.xlu0
        %v1901 = vpop.trf.xlu0
        %v1902 = vpop.trf.xlu0
        %v1903 = vpop.trf.xlu0
        %v1904 = vpop.trf.xlu0
        %v1905 = vpop.trf.xlu0
        %v1906 = vpop.trf.xlu0
        %v1907 = vpop.trf.xlu0
        %v1908 = vpop.trf.xlu0
        %v1909 = vpop.trf.xlu0
        %v1910 = vpop.trf.xlu0
        %v1911 = vpop.trf.xlu0
        %v1912 = vpop.trf.xlu0
        %v1913 = vpop.trf.xlu0
        %1914 = vxpose.xlu0.b32.start [1/16] %v1771, 128
        %1915 = vxpose.xlu0.b32.cont [2/16] 0.0, 128
        %1916 = vxpose.xlu0.b32.cont [3/16] 0.0, 128
        %1917 = vxpose.xlu0.b32.cont [4/16] 0.0, 128
        %1918 = vxpose.xlu0.b32.cont [5/16] 0.0, 128
        %1919 = vxpose.xlu0.b32.cont [6/16] 0.0, 128
        %1920 = vxpose.xlu0.b32.cont [7/16] 0.0, 128
        %1921 = vxpose.xlu0.b32.cont [8/16] 0.0, 128
        %1922 = vxpose.xlu0.b32.cont [9/16] 0.0, 128
        %1923 = vxpose.xlu0.b32.cont [10/16] 0.0, 128
        %1924 = vxpose.xlu0.b32.cont [11/16] 0.0, 128
        %1925 = vxpose.xlu0.b32.cont [12/16] 0.0, 128
        %1926 = vxpose.xlu0.b32.cont [13/16] 0.0, 128
        %1927 = vxpose.xlu0.b32.cont [14/16] 0.0, 128
        %1928 = vxpose.xlu0.b32.cont [15/16] 0.0, 128
        %1929 = vxpose.xlu0.b32.end [16/16] 0.0, 128
        %v1930 = vpop.trf.xlu0
        %v1931 = vpop.trf.xlu0
        %v1932 = vpop.trf.xlu0
        %v1933 = vpop.trf.xlu0
        %v1934 = vpop.trf.xlu0
        %v1935 = vpop.trf.xlu0
        %v1936 = vpop.trf.xlu0
        %v1937 = vpop.trf.xlu0
        %v1938 = vpop.trf.xlu0
        %v1939 = vpop.trf.xlu0
        %v1940 = vpop.trf.xlu0
        %v1941 = vpop.trf.xlu0
        %v1942 = vpop.trf.xlu0
        %v1943 = vpop.trf.xlu0
        %v1944 = vpop.trf.xlu0
        %v1945 = vpop.trf.xlu0
        %1946 = vxpose.xlu0.b32.start [1/16] %v1847, 128
        %1947 = vxpose.xlu0.b32.cont [2/16] 0.0, 128
        %1948 = vxpose.xlu0.b32.cont [3/16] 0.0, 128
        %1949 = vxpose.xlu0.b32.cont [4/16] 0.0, 128
        %1950 = vxpose.xlu0.b32.cont [5/16] 0.0, 128
        %1951 = vxpose.xlu0.b32.cont [6/16] 0.0, 128
        %1952 = vxpose.xlu0.b32.cont [7/16] 0.0, 128
        %1953 = vxpose.xlu0.b32.cont [8/16] 0.0, 128
        %1954 = vxpose.xlu0.b32.cont [9/16] 0.0, 128
        %1955 = vxpose.xlu0.b32.cont [10/16] 0.0, 128
        %1956 = vxpose.xlu0.b32.cont [11/16] 0.0, 128
        %1957 = vxpose.xlu0.b32.cont [12/16] 0.0, 128
        %1958 = vxpose.xlu0.b32.cont [13/16] 0.0, 128
        %1959 = vxpose.xlu0.b32.cont [14/16] 0.0, 128
        %1960 = vxpose.xlu0.b32.cont [15/16] 0.0, 128
        %1961 = vxpose.xlu0.b32.end [16/16] 0.0, 128
        %v1962 = vpop.trf.xlu0
        %v1963 = vpop.trf.xlu0
        %v1964 = vpop.trf.xlu0
        %v1965 = vpop.trf.xlu0
        %v1966 = vpop.trf.xlu0
        %v1967 = vpop.trf.xlu0
        %v1968 = vpop.trf.xlu0
        %v1969 = vpop.trf.xlu0
        %v1970 = vpop.trf.xlu0
        %v1971 = vpop.trf.xlu0
        %v1972 = vpop.trf.xlu0
        %v1973 = vpop.trf.xlu0
        %v1974 = vpop.trf.xlu0
        %v1975 = vpop.trf.xlu0
        %v1976 = vpop.trf.xlu0
        %v1977 = vpop.trf.xlu0
        %v1978 = vcombine.low %v1866, %v1930
        %v1979 = vcombine.high %v1866, %v1930
        %v1981 = vunpack.c.l.s4 1983009808
        %v1982 = vunpack.c.0.s8 %v1981
        %v1983 = vlaneseq
        %v1984 = vshrl.u32 %v1983, 7
        %v1985 = vsub.s32 %v1982, %v1984
        %v1986 = vrot.slane %v1978, %v1985
        %v1988 = vunpack.c.l.s4 1983009808
        %v1989 = vunpack.c.0.s8 %v1988
        %v1990 = vlaneseq
        %v1991 = vshrl.u32 %v1990, 7
        %v1992 = vsub.s32 %v1989, %v1991
        %v1993 = vrot.slane %v1979, %v1992
        %v1994 = vcombine.low %v1898, %v1962
        %v1995 = vcombine.high %v1898, %v1962
        %v1997 = vunpack.c.l.s4 1983009808
        %v1998 = vunpack.c.0.s8 %v1997
        %v1999 = vlaneseq
        %v2000 = vshrl.u32 %v1999, 7
        %v2001 = vsub.s32 %v1998, %v2000
        %v2002 = vrot.slane %v1994, %v2001
        %v2004 = vunpack.c.l.s4 1983009808
        %v2005 = vunpack.c.0.s8 %v2004
        %v2006 = vlaneseq
        %v2007 = vshrl.u32 %v2006, 7
        %v2008 = vsub.s32 %v2005, %v2007
        %v2009 = vrot.slane %v1995, %v2008
        %v2010 = vcombine.low %v1986, %v2002
        %v2011 = vcombine.high %v1986, %v2002
        %v2013 = vunpack.c.l.s4 1934713408
        %v2014 = vunpack.c.0.s8 %v2013
        %v2015 = vlaneseq
        %v2016 = vshrl.u32 %v2015, 7
        %v2017 = vsub.s32 %v2014, %v2016
        %v2018 = vrot.slane %v2010, %v2017
        %v2020 = vunpack.c.l.s4 1934713408
        %v2021 = vunpack.c.0.s8 %v2020
        %v2022 = vlaneseq
        %v2023 = vshrl.u32 %v2022, 7
        %v2024 = vsub.s32 %v2021, %v2023
        %v2025 = vrot.slane %v2011, %v2024
        %v2026 = vcombine.low %v1993, %v2009
        %v2027 = vcombine.high %v1993, %v2009
        %v2029 = vunpack.c.l.s4 1934713408
        %v2030 = vunpack.c.0.s8 %v2029
        %v2031 = vlaneseq
        %v2032 = vshrl.u32 %v2031, 7
        %v2033 = vsub.s32 %v2030, %v2032
        %v2034 = vrot.slane %v2026, %v2033
        %v2036 = vunpack.c.l.s4 1934713408
        %v2037 = vunpack.c.0.s8 %v2036
        %v2038 = vlaneseq
        %v2039 = vshrl.u32 %v2038, 7
        %v2040 = vsub.s32 %v2037, %v2039
        %v2041 = vrot.slane %v2027, %v2040
        %v2042 = vcombine.high %v2018, 0.0
        %v2043 = vcombine.high %v2025, 0.0
        %v2044 = vcombine.high %v2034, 0.0
        %v2045 = vcombine.high %v2041, 0.0
        %v2046 = vcombine.low %v2018, %v2025
        %v2048 = vunpack.c.l.s4 1983009808
        %v2049 = vunpack.c.0.s8 %v2048
        %v2050 = vlaneseq
        %v2051 = vshrl.u32 %v2050, 7
        %v2052 = vsub.s32 %v2049, %v2051
        %v2053 = vrot.slane %v2046, %v2052
        %v2054 = vcombine.low %v2042, %v2043
        %v2056 = vunpack.c.l.s4 1983009808
        %v2057 = vunpack.c.0.s8 %v2056
        %v2058 = vlaneseq
        %v2059 = vshrl.u32 %v2058, 7
        %v2060 = vsub.s32 %v2057, %v2059
        %v2061 = vrot.slane %v2054, %v2060
        %v2062 = vcombine.low %v2034, %v2041
        %v2064 = vunpack.c.l.s4 1983009808
        %v2065 = vunpack.c.0.s8 %v2064
        %v2066 = vlaneseq
        %v2067 = vshrl.u32 %v2066, 7
        %v2068 = vsub.s32 %v2065, %v2067
        %v2069 = vrot.slane %v2062, %v2068
        %v2070 = vcombine.low %v2044, %v2045
        %v2072 = vunpack.c.l.s4 1983009808
        %v2073 = vunpack.c.0.s8 %v2072
        %v2074 = vlaneseq
        %v2075 = vshrl.u32 %v2074, 7
        %v2076 = vsub.s32 %v2073, %v2075
        %v2077 = vrot.slane %v2070, %v2076
        %v2078 = vcombine.low %v2053, %v2061
        %v2079 = vcombine.high %v2053, %v2061
        %v2081 = vunpack.c.l.s4 1934713408
        %v2082 = vunpack.c.0.s8 %v2081
        %v2083 = vlaneseq
        %v2084 = vshrl.u32 %v2083, 7
        %v2085 = vsub.s32 %v2082, %v2084
        %v2086 = vrot.slane %v2078, %v2085
        %v2088 = vunpack.c.l.s4 1934713408
        %v2089 = vunpack.c.0.s8 %v2088
        %v2090 = vlaneseq
        %v2091 = vshrl.u32 %v2090, 7
        %v2092 = vsub.s32 %v2089, %v2091
        %v2093 = vrot.slane %v2079, %v2092
        %v2094 = vcombine.low %v2069, %v2077
        %v2095 = vcombine.high %v2069, %v2077
        %v2097 = vunpack.c.l.s4 1934713408
        %v2098 = vunpack.c.0.s8 %v2097
        %v2099 = vlaneseq
        %v2100 = vshrl.u32 %v2099, 7
        %v2101 = vsub.s32 %v2098, %v2100
        %v2102 = vrot.slane %v2094, %v2101
        %v2104 = vunpack.c.l.s4 1934713408
        %v2105 = vunpack.c.0.s8 %v2104
        %v2106 = vlaneseq
        %v2107 = vshrl.u32 %v2106, 7
        %v2108 = vsub.s32 %v2105, %v2107
        %v2109 = vrot.slane %v2095, %v2108
        %v2110 = vcombine.low %v2086, %v2102
        %v2111 = vcombine.high %v2086, %v2102
        %v2112 = vcombine.low %v2093, %v2109
        %v2113 = vcombine.high %v2093, %v2109
        %2115 = vrot.lane.b32.xlu0 %v2111, 8
        %v2116 = vpop.permute.xlu0 %2115
        %2119 = vrot.lane.b32.xlu0 %v2112, 16
        %v2120 = vpop.permute.xlu0 %2119
        %2123 = vrot.lane.b32.xlu0 %v2113, 24
        %v2124 = vpop.permute.xlu0 %2123
        %v2126 = vsel %vm1085, %v2110, %v2116
        %vm2127 = vcmask 130048
        %v2128 = vsel %vm2127, %v2126, %v2120
        %vm2129 = vcmask 195584
        %v2130 = vsel %vm2129, %v2128, %v2124
        %v2131 = vld [vmem:[#allocation7] sm:$0xff]
        %v2132 = vld [vmem:[#allocation7 + $0x8] sm:$0xff]
        %v2133 = vld [vmem:[#allocation7 + $0x10] sm:$0xff]
        %v2134 = vld [vmem:[#allocation7 + $0x18] sm:$0xff]
        %v2135 = vld [vmem:[%s10] sm:$0x1]
        %v2137 = vlaneseq
        %v2138 = vshrl.u32 %v2137, 7
        %v2139 = vsub.s32 0, %v2138
        %v2140 = vrot.slane %v2135, %v2139
        %v2143 = vsel %vm815, %v2130, 0
        %2145 = vmatprep.subr.mxu0 0.0
        %2146 = vmatpush1.msra.mxu0 %v2131
        %2147 = vmatprep.subr.mxu0 0.0
        %2148 = vmatpush1.msra.mxu0 %v2132
        %2149 = vmatprep.subr.mxu0 0.0
        %2150 = vmatpush1.msra.mxu0 %v2133
        %2151 = vmatprep.subr.mxu0 0.0
        %2152 = vmatpush1.msra.mxu0 %v2134
        %2153 = vmatprep.subr.mxu0 0.0
        %2154 = vmatpush1.msra.mxu0 0.0
        %2155 = vmatprep.subr.mxu0 0.0
        %2156 = vmatpush1.msra.mxu0 0.0
        %2157 = vmatprep.subr.mxu0 0.0
        %2158 = vmatpush1.msra.mxu0 0.0
        %2159 = vmatprep.subr.mxu0 0.0
        %2160 = vmatpush1.msra.mxu0 0.0
        %2161 = vmatprep.subr.mxu0 0.0
        %2162 = vmatpush1.msra.mxu0 0.0
        %2163 = vmatprep.subr.mxu0 0.0
        %2164 = vmatpush1.msra.mxu0 0.0
        %2165 = vmatprep.subr.mxu0 0.0
        %2166 = vmatpush1.msra.mxu0 0.0
        %2167 = vmatprep.subr.mxu0 0.0
        %2168 = vmatpush1.msra.mxu0 0.0
        %2169 = vmatprep.subr.mxu0 0.0
        %2170 = vmatpush1.msra.mxu0 0.0
        %2171 = vmatprep.subr.mxu0 0.0
        %2172 = vmatpush1.msra.mxu0 0.0
        %2173 = vmatprep.subr.mxu0 0.0
        %2174 = vmatpush1.msra.mxu0 0.0
        %2175 = vmatprep.subr.mxu0 0.0
        %2176 = vmatpush1.msra.mxu0 0.0
        %2177 = vmatprep.subr.mxu0 0.0
        %2178 = vmatpush1.msra.mxu0 0.0
        %2179 = vmatprep.subr.mxu0 0.0
        %2180 = vmatpush1.msra.mxu0 0.0
        %2181 = vmatprep.subr.mxu0 0.0
        %2182 = vmatpush1.msra.mxu0 0.0
        %2183 = vmatprep.subr.mxu0 0.0
        %2184 = vmatpush1.msra.mxu0 0.0
        %2185 = vmatprep.subr.mxu0 0.0
        %2186 = vmatpush1.msra.mxu0 0.0
        %2187 = vmatprep.subr.mxu0 0.0
        %2188 = vmatpush1.msra.mxu0 0.0
        %2189 = vmatprep.subr.mxu0 0.0
        %2190 = vmatpush1.msra.mxu0 0.0
        %2191 = vmatprep.subr.mxu0 0.0
        %2192 = vmatpush1.msra.mxu0 0.0
        %2193 = vmatprep.subr.mxu0 0.0
        %2194 = vmatpush1.msra.mxu0 0.0
        %2195 = vmatprep.subr.mxu0 0.0
        %2196 = vmatpush1.msra.mxu0 0.0
        %2197 = vmatprep.subr.mxu0 0.0
        %2198 = vmatpush1.msra.mxu0 0.0
        %2199 = vmatprep.subr.mxu0 0.0
        %2200 = vmatpush1.msra.mxu0 0.0
        %2201 = vmatprep.subr.mxu0 0.0
        %2202 = vmatpush1.msra.mxu0 0.0
        %2203 = vmatprep.subr.mxu0 0.0
        %2204 = vmatpush1.msra.mxu0 0.0
        %2205 = vmatprep.subr.mxu0 0.0
        %2206 = vmatpush1.msra.mxu0 0.0
        %2207 = vmatprep.subr.mxu0 0.0
        %2208 = vmatpush1.msra.mxu0 0.0
        %2209 = vmatprep.mubr.f32.mxu0 0.0
        %2210 = vmatmul.mubr.f32.gmra.mrb[0].mxu0 %v2143
        %v2211 = vpop.f32.mrb[0].mxu0
        %v2212 = vadd.f32 %v2140, %v2211
        %v2213 = vpop.f32.mrb[0].mxu0
        %2214 = vdwg.mxu0
        %v2215 = vadd.f32 %v812, %v2212
        %v2216 = vld [vmem:[%s11] sm:$0x1]
        %v2217 = vld [vmem:[%s12] sm:$0x1]
        %v2218 = vsel %vm815, %v2215, 0.0
        %2219 = vadd.xlane.f32.xlu0 %v2218
        %v2220 = vpop.xlane.xlu0 %2219
        %v2221 = vmul.f32 %v2220, %v819
        %v2222 = vsub.f32 %v2215, %v2221
        %v2223 = vmul.f32 %v2222, %v2222
        %v2224 = vsel %vm815, %v2223, 0.0
        %2225 = vadd.xlane.f32.xlu0 %v2224
        %v2226 = vpop.xlane.xlu0 %2225
        %v2227 = vmul.f32 %v2226, %v819
        %v2228 = vadd.f32 %v2227, 1e-06
        %v2229 = vrsqrt.pop %v2228
        %v2230 = vmul.f32 %v2222, %v2229
        %v2232 = vlaneseq
        %v2233 = vshrl.u32 %v2232, 7
        %v2234 = vsub.s32 0, %v2233
        %v2235 = vrot.slane %v2216, %v2234
        %v2237 = vmul.f32 %v2230, %v2235
        %v2239 = vlaneseq
        %v2240 = vshrl.u32 %v2239, 7
        %v2241 = vsub.s32 0, %v2240
        %v2242 = vrot.slane %v2217, %v2241
        %v2244 = vadd.f32 %v2237, %v2242
        %v2245 = vld [vmem:[#allocation9] sm:$0xff]
        %v2246 = vld [vmem:[#allocation9 + $0x8] sm:$0xff]
        %v2247 = vld [vmem:[#allocation9 + $0x10] sm:$0xff]
        %v2248 = vld [vmem:[#allocation9 + $0x18] sm:$0xff]
        %v2249 = vld [vmem:[%s14] sm:$0x1]
        %v2251 = vlaneseq
        %v2252 = vshrl.u32 %v2251, 7
        %v2253 = vsub.s32 0, %v2252
        %v2254 = vrot.slane %v2249, %v2253
        %v2257 = vsel %vm815, %v2244, 0
        %2259 = vmatprep.subr.mxu0 0.0
        %2260 = vmatpush1.msra.mxu0 %v2245
        %2261 = vmatprep.subr.mxu0 0.0
        %2262 = vmatpush1.msra.mxu0 %v2246
        %2263 = vmatprep.subr.mxu0 0.0
        %2264 = vmatpush1.msra.mxu0 %v2247
        %2265 = vmatprep.subr.mxu0 0.0
        %2266 = vmatpush1.msra.mxu0 %v2248
        %2267 = vmatprep.subr.mxu0 0.0
        %2268 = vmatpush1.msra.mxu0 0.0
        %2269 = vmatprep.subr.mxu0 0.0
        %2270 = vmatpush1.msra.mxu0 0.0
        %2271 = vmatprep.subr.mxu0 0.0
        %2272 = vmatpush1.msra.mxu0 0.0
        %2273 = vmatprep.subr.mxu0 0.0
        %2274 = vmatpush1.msra.mxu0 0.0
        %2275 = vmatprep.subr.mxu0 0.0
        %2276 = vmatpush1.msra.mxu0 0.0
        %2277 = vmatprep.subr.mxu0 0.0
        %2278 = vmatpush1.msra.mxu0 0.0
        %2279 = vmatprep.subr.mxu0 0.0
        %2280 = vmatpush1.msra.mxu0 0.0
        %2281 = vmatprep.subr.mxu0 0.0
        %2282 = vmatpush1.msra.mxu0 0.0
        %2283 = vmatprep.subr.mxu0 0.0
        %2284 = vmatpush1.msra.mxu0 0.0
        %2285 = vmatprep.subr.mxu0 0.0
        %2286 = vmatpush1.msra.mxu0 0.0
        %2287 = vmatprep.subr.mxu0 0.0
        %2288 = vmatpush1.msra.mxu0 0.0
        %2289 = vmatprep.subr.mxu0 0.0
        %2290 = vmatpush1.msra.mxu0 0.0
        %2291 = vmatprep.subr.mxu0 0.0
        %2292 = vmatpush1.msra.mxu0 0.0
        %2293 = vmatprep.subr.mxu0 0.0
        %2294 = vmatpush1.msra.mxu0 0.0
        %2295 = vmatprep.subr.mxu0 0.0
        %2296 = vmatpush1.msra.mxu0 0.0
        %2297 = vmatprep.subr.mxu0 0.0
        %2298 = vmatpush1.msra.mxu0 0.0
        %2299 = vmatprep.subr.mxu0 0.0
        %2300 = vmatpush1.msra.mxu0 0.0
        %2301 = vmatprep.subr.mxu0 0.0
        %2302 = vmatpush1.msra.mxu0 0.0
        %2303 = vmatprep.subr.mxu0 0.0
        %2304 = vmatpush1.msra.mxu0 0.0
        %2305 = vmatprep.subr.mxu0 0.0
        %2306 = vmatpush1.msra.mxu0 0.0
        %2307 = vmatprep.subr.mxu0 0.0
        %2308 = vmatpush1.msra.mxu0 0.0
        %2309 = vmatprep.subr.mxu0 0.0
        %2310 = vmatpush1.msra.mxu0 0.0
        %2311 = vmatprep.subr.mxu0 0.0
        %2312 = vmatpush1.msra.mxu0 0.0
        %2313 = vmatprep.subr.mxu0 0.0
        %2314 = vmatpush1.msra.mxu0 0.0
        %2315 = vmatprep.subr.mxu0 0.0
        %2316 = vmatpush1.msra.mxu0 0.0
        %2317 = vmatprep.subr.mxu0 0.0
        %2318 = vmatpush1.msra.mxu0 0.0
        %2319 = vmatprep.subr.mxu0 0.0
        %2320 = vmatpush1.msra.mxu0 0.0
        %2321 = vmatprep.subr.mxu0 0.0
        %2322 = vmatpush1.msra.mxu0 0.0
        %2323 = vmatprep.mubr.f32.mxu0 0.0
        %2324 = vmatmul.mubr.f32.gmra.mrb[0].mxu0 %v2257
        %v2325 = vpop.f32.mrb[0].mxu0
        %v2326 = vadd.f32 %v2254, %v2325
        %v2327 = vpop.f32.mrb[0].mxu0
        %2328 = vdwg.mxu0
        %v2329 = vmax.f32 %v2326, 0.0
        %v2330 = vld [vmem:[%s15] sm:$0xff]
        %v2331 = vld [vmem:[%s15 + $0x8] sm:$0xff]
        %v2332 = vld [vmem:[%s15 + $0x10] sm:$0xff]
        %v2333 = vld [vmem:[%s15 + $0x18] sm:$0xff]
        %v2334 = vld [vmem:[%s15 + $0x20] sm:$0xff]
        %v2335 = vld [vmem:[%s15 + $0x28] sm:$0xff]
        %v2336 = vld [vmem:[%s15 + $0x30] sm:$0xff]
        %v2337 = vld [vmem:[%s15 + $0x38] sm:$0xff]
        %v2338 = vld [vmem:[%s16] sm:$0x1]
        %v2340 = vlaneseq
        %v2341 = vshrl.u32 %v2340, 7
        %v2342 = vsub.s32 0, %v2341
        %v2343 = vrot.slane %v2338, %v2342
        %vm2345 = vcmask 523264
        %v2347 = vsel %vm2345, %v2329, 0
        %2349 = vmatprep.subr.mxu0 0.0
        %2350 = vmatpush1.msra.mxu0 %v2330
        %2351 = vmatprep.subr.mxu0 0.0
        %2352 = vmatpush1.msra.mxu0 %v2331
        %2353 = vmatprep.subr.mxu0 0.0
        %2354 = vmatpush1.msra.mxu0 %v2332
        %2355 = vmatprep.subr.mxu0 0.0
        %2356 = vmatpush1.msra.mxu0 %v2333
        %2357 = vmatprep.subr.mxu0 0.0
        %2358 = vmatpush1.msra.mxu0 %v2334
        %2359 = vmatprep.subr.mxu0 0.0
        %2360 = vmatpush1.msra.mxu0 %v2335
        %2361 = vmatprep.subr.mxu0 0.0
        %2362 = vmatpush1.msra.mxu0 %v2336
        %2363 = vmatprep.subr.mxu0 0.0
        %2364 = vmatpush1.msra.mxu0 %v2337
        %2365 = vmatprep.subr.mxu0 0.0
        %2366 = vmatpush1.msra.mxu0 0.0
        %2367 = vmatprep.subr.mxu0 0.0
        %2368 = vmatpush1.msra.mxu0 0.0
        %2369 = vmatprep.subr.mxu0 0.0
        %2370 = vmatpush1.msra.mxu0 0.0
        %2371 = vmatprep.subr.mxu0 0.0
        %2372 = vmatpush1.msra.mxu0 0.0
        %2373 = vmatprep.subr.mxu0 0.0
        %2374 = vmatpush1.msra.mxu0 0.0
        %2375 = vmatprep.subr.mxu0 0.0
        %2376 = vmatpush1.msra.mxu0 0.0
        %2377 = vmatprep.subr.mxu0 0.0
        %2378 = vmatpush1.msra.mxu0 0.0
        %2379 = vmatprep.subr.mxu0 0.0
        %2380 = vmatpush1.msra.mxu0 0.0
        %2381 = vmatprep.subr.mxu0 0.0
        %2382 = vmatpush1.msra.mxu0 0.0
        %2383 = vmatprep.subr.mxu0 0.0
        %2384 = vmatpush1.msra.mxu0 0.0
        %2385 = vmatprep.subr.mxu0 0.0
        %2386 = vmatpush1.msra.mxu0 0.0
        %2387 = vmatprep.subr.mxu0 0.0
        %2388 = vmatpush1.msra.mxu0 0.0
        %2389 = vmatprep.subr.mxu0 0.0
        %2390 = vmatpush1.msra.mxu0 0.0
        %2391 = vmatprep.subr.mxu0 0.0
        %2392 = vmatpush1.msra.mxu0 0.0
        %2393 = vmatprep.subr.mxu0 0.0
        %2394 = vmatpush1.msra.mxu0 0.0
        %2395 = vmatprep.subr.mxu0 0.0
        %2396 = vmatpush1.msra.mxu0 0.0
        %2397 = vmatprep.subr.mxu0 0.0
        %2398 = vmatpush1.msra.mxu0 0.0
        %2399 = vmatprep.subr.mxu0 0.0
        %2400 = vmatpush1.msra.mxu0 0.0
        %2401 = vmatprep.subr.mxu0 0.0
        %2402 = vmatpush1.msra.mxu0 0.0
        %2403 = vmatprep.subr.mxu0 0.0
        %2404 = vmatpush1.msra.mxu0 0.0
        %2405 = vmatprep.subr.mxu0 0.0
        %2406 = vmatpush1.msra.mxu0 0.0
        %2407 = vmatprep.subr.mxu0 0.0
        %2408 = vmatpush1.msra.mxu0 0.0
        %2409 = vmatprep.subr.mxu0 0.0
        %2410 = vmatpush1.msra.mxu0 0.0
        %2411 = vmatprep.subr.mxu0 0.0
        %2412 = vmatpush1.msra.mxu0 0.0
        %2413 = vmatprep.mubr.f32.mxu0 0.0
        %2414 = vmatmul.mubr.f32.gmra.mrb[0].mxu0 %v2347
        %v2415 = vpop.f32.mrb[0].mxu0
        %v2416 = vadd.f32 %v2343, %v2415
        %v2417 = vpop.f32.mrb[0].mxu0
        %2418 = vdwg.mxu0
        %v2419 = vadd.f32 %v2215, %v2416
        %2420 = vst.msk [vmem:[%s606] sm:$0xff] %vm815, %v2419
        %s2421 = sand.u32 %s419, 1
        %s2422 = scalar_lea.sflag [#allocation6], %s2421
        %s2423 = sand.u32 %s419, 1
        %s2424 = smul.addr %s2423, 8
        %s2425 = scalar_lea.vmem [#allocation10], %s2424
        // Predicated region
        $region105: #{tpu_custom_call.1} parent=87 // pred_check
          %p2426 = pneg %p429
        $region106: #{tpu_custom_call.1} parent=87 // pred_check_branch
          %2428 = sbr.rel (%p2426) target = $region108
        $region107: #{tpu_custom_call.1} parent=87 // pred_region
          %s2430 = ssub.s32 128, 128
          %2431 = vsyncadd %s2422, %s2430
          %s2432 = sadd.s32 %s40, %s39
          %s2433 = smul.addr %s2432, 128
          %s2434 = scalar_lea.hbm %s17, %s2433
          %s2436 = sshll.u32 %s2425, 4
          %s2437 = int_to_ptr.vmem [resolvable:$true] %s2436
          %2439 = dma.vmem_to_hbm [thread:$0]  %s2437, 128, %s2434, %s2422
        $region108: #{tpu_custom_call.1} parent=87 // pred_fallthru
          _
      $region88: #{tpu_custom_call.1} parent=5 // pred_fallthru
        _
      %p2440 = scmp.le.s32.totalorder 2, %s30
      // Predicated region
      $region109: #{tpu_custom_call.1} parent=5 // pred_check
        %p2441 = pneg %p2440
      $region110: #{tpu_custom_call.1} parent=5 // pred_check_branch
        %2443 = sbr.rel (%p2441) target = $region112
      $region111: #{tpu_custom_call.1} parent=5 // pred_region
        %s2444 = ssub.s32 %s30, 2
        // Predicated region
        $region113: #{tpu_custom_call.1} parent=111 // pred_check
          %p2445 = pneg %p435
        $region114: #{tpu_custom_call.1} parent=111 // pred_check_branch
          %2447 = sbr.rel (%p2445) target = $region116
        $region115: #{tpu_custom_call.1} parent=111 // pred_region
          %s2448 = sand.u32 %s420, 1
          %s2449 = scalar_lea.sflag [#allocation6], %s2448
          %s2450 = sand.u32 %s420, 1
          %s2451 = smul.addr %s2450, 8
          %s2452 = scalar_lea.vmem [#allocation10], %s2451
          %2453 = dma.done %s2449, 128
        $region116: #{tpu_custom_call.1} parent=111 // pred_fallthru
          _
      $region112: #{tpu_custom_call.1} parent=5 // pred_fallthru
        _
    $region6: #{tpu_custom_call.1} parent=1 // loop_footer
      %s34 = sadd.s32 1, %s30
    $region7: #{tpu_custom_call.1} parent=1 // loop_footer_branch
      %29 = sbr.rel target = $region3
    $region8: #{tpu_custom_call.1} parent=1 // loop_exit
      _
    %2454 = vsyncpa [#allocation5], 1
    %s2455 = scalar_lea.sflag [#allocation5], 1
    %2456 = vsyncpa %s2455, 1
    %2457 = vsyncpa [#allocation8], 1
    %2458 = vsyncpa [#allocation6], 1
    %s2459 = scalar_lea.sflag [#allocation6], 1
    %2460 = vsyncpa %s2459, 1

</llo_original>
